<compile_context>
chip_gen: v7x
topology: tpu7x:2x2x1
jax: 0.10.0
libtpu: 0.0.40
codegen_flags: <defaults>
</compile_context>

<pallas_src>
import functools

import jax
import jax.numpy as jnp
from jax.experimental import pallas as pl
from jax.experimental.pallas import tpu as pltpu


def _next_pow2(n):
    return 1 << (n - 1).bit_length()


def _double_conv_kernel(x_ref, w1_ref, b1_ref, w2_ref, b2_ref, o_ref,
                        *, d, H, W, Wp, L1, LOUT, compute_dtype):
    """Fused (conv3x3 dil=d -> folded-BN bias -> ReLU) x 2 for one batch element.

    Flat channels-major layout: spatial is flattened with a power-of-two row
    stride Wp, so every 3x3 tap of either layer is a static lane-offset slice of
    the same flat axis, and all MXU/VPU/store work is lane-dense.

    x_ref:  (1, Cin, LIN)    zero-padded input, LIN = (H + 4d + 2) * Wp
    w1_ref: (9, Cmid, Cin)   layer-1 weights (BN scale folded), tap-major
    b1_ref: (Cmid, 1)        layer-1 folded BN bias (f32)
    w2_ref: (9, Cout, Cmid)  layer-2 weights (BN scale folded), tap-major
    b2_ref: (Cout, 1)        layer-2 folded BN bias (f32)
    o_ref:  (1, Cout, LOUT)  output, channels-major flat, LOUT = H * Wp
    """
    Cout = o_ref.shape[1]

    x = x_ref[0]                                    # (Cin, LIN), already compute_dtype

    # ---- layer 1 on the extended (H+2d+1, Wp) grid: 9 lane-shifted tap matmuls,
    #      channels-major so the (Cmid, L1) accumulator is lane-dense.
    acc1 = None
    for k in range(9):
        kh, kw = divmod(k, 3)
        off = (kh * Wp + kw) * d
        t = jnp.dot(w1_ref[k], x[:, off:off + L1],
                    preferred_element_type=jnp.float32)
        acc1 = t if acc1 is None else acc1 + t
    h = jnp.maximum(acc1 + b1_ref[...], 0.0)        # folded BN bias + ReLU (f32)

    # Zero everything outside the real HxW image: the halo ring (== layer 2's zero
    # padding) and the flat-layout wrap-around columns.  Mask built in-kernel from
    # iota; Wp is a power of two so col = idx & (Wp - 1) and the row test is a pair
    # of flat-index compares.  Dropout2d(p=0.1) is identity in eval mode.
    idx = jax.lax.broadcasted_iota(jnp.int32, (1, L1), 1)
    col = idx & (Wp - 1)
    inside = ((idx >= d * Wp) & (idx < (d + H) * Wp) &
              (col >= d) & (col < d + W))
    h = jnp.where(inside, h, 0.0).astype(compute_dtype)   # stays in registers

    # ---- layer 2: identical flat tap offsets against h; (Cout, LOUT) lane-dense.
    acc2 = None
    for k in range(9):
        kh, kw = divmod(k, 3)
        off = (kh * Wp + kw) * d
        t = jnp.dot(w2_ref[k], h[:, off:off + LOUT],
                    preferred_element_type=jnp.float32)
        acc2 = t if acc2 is None else acc2 + t
    y = jnp.maximum(acc2 + b2_ref[...], 0.0)        # folded BN bias + ReLU (f32)
    o_ref[...] = y.reshape(1, Cout, LOUT).astype(o_ref.dtype)


@functools.partial(jax.jit, static_argnames=("dilation", "compute_dtype"))
def double_conv_forward(x_nchw, w1_hwio, scale1, bias1, w2_hwio, scale2, bias2,
                        *, dilation=1, compute_dtype=jnp.float32):
    """NCHW -> NCHW DoubleConv forward via one fused Pallas kernel (grid over batch)."""
    N, Cin, H, W = x_nchw.shape
    Cmid = w1_hwio.shape[-1]
    Cout = w2_hwio.shape[-1]
    d = int(dilation)
    assert d >= 1, "module uses padding == dilation (a 'same' dilated 3x3 conv)"

    # Flat channels-major geometry: spatial flattened with a power-of-two row stride
    # Wp, shared by the input, the intermediate and the output, so every 3x3 tap of
    # both layers is a static lane-offset slice and the in-kernel mask is shift/and.
    Wp = _next_pow2(W + 4 * d)              # padded row width (>= W + 4d)
    ROWS_IN = H + 4 * d + 2                 # input rows incl. 2d halo + spare row
    ROWS1 = H + 2 * d + 1                   # layer-1 extended rows + spare row
    LIN = ROWS_IN * Wp
    L1 = ROWS1 * Wp
    LOUT = H * Wp

    # --- stage the input: NCHW is already channels-major; zero-pad the spatial dims
    #     (2d halo for the extended layer-1 grid), cast to compute_dtype once
    #     (no per-tap casts in the kernel), flatten spatial.
    xp = jnp.pad(x_nchw.astype(compute_dtype),
                 ((0, 0), (0, 0),
                  (2 * d, ROWS_IN - H - 2 * d),
                  (2 * d, Wp - W - 2 * d)))
    xp = xp.reshape(N, Cin, LIN)

    # --- fold the BN scale into the conv weights (kernel epilogue is only +bias,
    #     ReLU); tap-major (9, Cout_dim, Cin_dim) so each tap is one MXU matmul
    #     against the channels-major slab.
    w1f = (w1_hwio * scale1[None, None, None, :]).reshape(9, Cin, Cmid)
    w1f = jnp.transpose(w1f, (0, 2, 1)).astype(compute_dtype)      # (9, Cmid, Cin)
    w2f = (w2_hwio * scale2[None, None, None, :]).reshape(9, Cmid, Cout)
    w2f = jnp.transpose(w2f, (0, 2, 1)).astype(compute_dtype)      # (9, Cout, Cmid)
    b1 = bias1.reshape(Cmid, 1).astype(jnp.float32)
    b2 = bias2.reshape(Cout, 1).astype(jnp.float32)

    kernel = functools.partial(_double_conv_kernel, d=d, H=H, W=W, Wp=Wp,
                               L1=L1, LOUT=LOUT, compute_dtype=compute_dtype)
    out = pl.pallas_call(
        kernel,
        out_shape=jax.ShapeDtypeStruct((N, Cout, LOUT), jnp.float32),
        grid_spec=pltpu.PrefetchScalarGridSpec(
            num_scalar_prefetch=0,
            grid=(N,),
            in_specs=[
                pl.BlockSpec((1, Cin, LIN), lambda n: (n, 0, 0)),
                # TODO(synk): mark the constant operands below single-buffered
                # (pipeline_mode=pl.Buffered(1)) once weight blocks are MB-scale;
                # negligible VMEM at these channel counts.
                pl.BlockSpec((9, Cmid, Cin), lambda n: (0, 0, 0)),
                pl.BlockSpec((Cmid, 1), lambda n: (0, 0)),
                pl.BlockSpec((9, Cout, Cmid), lambda n: (0, 0, 0)),
                pl.BlockSpec((Cout, 1), lambda n: (0, 0)),
            ],
            out_specs=pl.BlockSpec((1, Cout, LOUT), lambda n: (n, 0, 0)),
        ),
        compiler_params=pltpu.CompilerParams(
            dimension_semantics=("parallel",),   # batch across cores (v7x megacore)
        ),
    )(xp, w1f, b1, w2f, b2)

    # (N, Cout, H*Wp) -> (N, Cout, H, W): drop the alignment columns.
    return out.reshape(N, Cout, H, Wp)[..., :W]


def _fold_bn(gamma, beta, mean, var, eps=1e-5):
    scale = gamma / jnp.sqrt(var + eps)
    bias = beta - mean * scale
    return scale, bias


class DoubleConvPallas:
    """JAX/Pallas equivalent of the PyTorch DoubleConv module (inference mode)."""

    def __init__(self, in_channels, out_channels, mid_channels=None, dilation=1, key=None):
        if mid_channels is None:
            mid_channels = out_channels
        self.dilation = int(dilation)
        key = jax.random.PRNGKey(0) if key is None else key
        ks = jax.random.split(key, 10)

        # Conv weights: PyTorch OIHW -> stored as HWIO.
        w1_oihw = 0.1 * jax.random.normal(ks[0], (mid_channels, in_channels, 3, 3), jnp.float32)
        w2_oihw = 0.1 * jax.random.normal(ks[1], (out_channels, mid_channels, 3, 3), jnp.float32)
        self.w1 = jnp.transpose(w1_oihw, (2, 3, 1, 0))   # (3,3,Cin,Cmid)
        self.w2 = jnp.transpose(w2_oihw, (2, 3, 1, 0))   # (3,3,Cmid,Cout)

        # BatchNorm params + running stats (deterministic synthetic init, distinct keys).
        g1 = 1.0 + 0.05 * jax.random.normal(ks[2], (mid_channels,), jnp.float32)
        b1 = 0.05 * jax.random.normal(ks[3], (mid_channels,), jnp.float32)
        m1 = 0.05 * jax.random.normal(ks[4], (mid_channels,), jnp.float32)
        v1 = 1.0 + 0.1 * jax.random.uniform(ks[5], (mid_channels,), jnp.float32)
        g2 = 1.0 + 0.05 * jax.random.normal(ks[6], (out_channels,), jnp.float32)
        b2 = 0.05 * jax.random.normal(ks[7], (out_channels,), jnp.float32)
        m2 = 0.05 * jax.random.normal(ks[8], (out_channels,), jnp.float32)
        v2 = 1.0 + 0.1 * jax.random.uniform(ks[9], (out_channels,), jnp.float32)

        self.scale1, self.bias1 = _fold_bn(g1, b1, m1, v1)
        self.scale2, self.bias2 = _fold_bn(g2, b2, m2, v2)

    def __call__(self, x_nchw, compute_dtype=jnp.float32):
        # compute_dtype=jnp.bfloat16 is the v5e/v6e MXU knob (f32 accumulation,
        # f32 epilogue math); default f32 keeps the strict numerical check.
        return double_conv_forward(
            x_nchw, self.w1, self.scale1, self.bias1,
            self.w2, self.scale2, self.bias2,
            dilation=self.dilation, compute_dtype=compute_dtype)


def _reference_forward(x_nchw, mod: DoubleConvPallas):
    """Pure-JAX reference using lax.conv_general_dilated, for validation."""
    d = mod.dilation

    def block(x, w_hwio, scale, bias):
        y = jax.lax.conv_general_dilated(
            x, w_hwio,
            window_strides=(1, 1),
            padding=[(d, d), (d, d)],
            rhs_dilation=(d, d),
            dimension_numbers=("NCHW", "HWIO", "NCHW"),
        )
        y = y * scale[None, :, None, None] + bias[None, :, None, None]
        return jnp.maximum(y, 0.0)

    h = block(x_nchw, mod.w1, mod.scale1, mod.bias1)
    return block(h, mod.w2, mod.scale2, mod.bias2)


if __name__ == "__main__":
    key = jax.random.PRNGKey(0)
    kx, kp = jax.random.split(key)

    # Small shapes consistent with the module: N=2, Cin=4, H=W=16, Cout=8.
    N, Cin, H, W = 2, 4, 16, 16
    Cout = 8
    x = jax.random.normal(kx, (N, Cin, H, W), jnp.float32)

    # dilation=1, strict f32 check.
    mod = DoubleConvPallas(in_channels=Cin, out_channels=Cout, dilation=1, key=kp)
    ref = _reference_forward(x, mod)
    out = jax.block_until_ready(mod(x))
    assert out.shape == (N, Cout, H, W)
    assert jnp.allclose(out, ref, rtol=1e-4, atol=1e-4), "f32 Pallas output mismatch"

    # bf16 MXU-operand path (v5e/v6e knob), loose check (one bf16 rounding of x/w/h).
    out_bf16 = jax.block_until_ready(mod(x, compute_dtype=jnp.bfloat16))
    assert out_bf16.shape == (N, Cout, H, W)
    assert bool(jnp.all(jnp.isfinite(out_bf16)))
    assert float(jnp.max(jnp.abs(out_bf16 - ref))) < 0.25, "bf16 Pallas output mismatch"

    # dilation=2 (padding == dilation, 'same' conv), strict f32 check.
    mod2 = DoubleConvPallas(in_channels=Cin, out_channels=Cout, dilation=2, key=kp)
    ref2 = _reference_forward(x, mod2)
    out2 = jax.block_until_ready(mod2(x))
    assert jnp.allclose(out2, ref2, rtol=1e-4, atol=1e-4), "dilation=2 mismatch"

    print("KERNEL_OK")
</pallas_src>

<mosaic_0001>
module attributes {stable_mosaic.version = 11 : i64} {
  func.func @_double_conv_kernel(%arg0: i32, %arg1: memref<1x4x704xf32, #tpu.memory_space<vmem>>, %arg2: memref<9x8x4xf32, #tpu.memory_space<vmem>>, %arg3: memref<8x1xf32, #tpu.memory_space<vmem>>, %arg4: memref<9x8x8xf32, #tpu.memory_space<vmem>>, %arg5: memref<8x1xf32, #tpu.memory_space<vmem>>, %arg6: memref<1x8x512xf32, #tpu.memory_space<vmem>>) attributes {dimension_semantics = [#tpu.dimension_semantics<parallel>], iteration_bounds = array<i64: 2>, scalar_prefetch = 0 : i64, scratch_operands = 0 : i64, tpu.core_type = #tpu.core_type<tc>, window_params = [{transform_indices = @transform_0, window_bounds = array<i64: 1, 4, 704>}, {pipeline_mode = #tpu.pipeline_mode<synchronous>, transform_indices = @transform_1, window_bounds = array<i64: 9, 8, 4>}, {pipeline_mode = #tpu.pipeline_mode<synchronous>, transform_indices = @transform_2, window_bounds = array<i64: 8, 1>}, {pipeline_mode = #tpu.pipeline_mode<synchronous>, transform_indices = @transform_3, window_bounds = array<i64: 9, 8, 8>}, {pipeline_mode = #tpu.pipeline_mode<synchronous>, transform_indices = @transform_4, window_bounds = array<i64: 8, 1>}, {transform_indices = @transform_5, window_bounds = array<i64: 1, 8, 512>}]} {
    %c0 = arith.constant 0 : index
    %c0_0 = arith.constant 0 : index
    %c0_1 = arith.constant 0 : index
    %0 = vector.load %arg1[%c0, %c0_0, %c0_1] : memref<1x4x704xf32, #tpu.memory_space<vmem>>, vector<1x4x704xf32>
    %1 = vector.shape_cast %0 : vector<1x4x704xf32> to vector<4x704xf32>
    %c0_2 = arith.constant 0 : index
    %c0_3 = arith.constant 0 : index
    %c0_4 = arith.constant 0 : index
    %2 = vector.load %arg2[%c0_2, %c0_3, %c0_4] : memref<9x8x4xf32, #tpu.memory_space<vmem>>, vector<1x8x4xf32>
    %3 = vector.shape_cast %2 : vector<1x8x4xf32> to vector<8x4xf32>
    %4 = vector.extract_strided_slice %1 {offsets = [0, 0], sizes = [4, 608], strides = [1, 1]} : vector<4x704xf32> to vector<4x608xf32>
    %cst = arith.constant dense<0.000000e+00> : vector<8x608xf32>
    %5 = tpu.matmul %3, %4, %cst {dimension_numbers = #tpu.dot_dimension_numbers<[1], [0], [0], [1], [0, 0, 1, 1], [], []>} : vector<8x4xf32>, vector<4x608xf32>, vector<8x608xf32> -> vector<8x608xf32>
    %c1 = arith.constant 1 : index
    %c0_5 = arith.constant 0 : index
    %c0_6 = arith.constant 0 : index
    %6 = vector.load %arg2[%c1, %c0_5, %c0_6] : memref<9x8x4xf32, #tpu.memory_space<vmem>>, vector<1x8x4xf32>
    %7 = vector.shape_cast %6 : vector<1x8x4xf32> to vector<8x4xf32>
    %8 = vector.extract_strided_slice %1 {offsets = [0, 1], sizes = [4, 608], strides = [1, 1]} : vector<4x704xf32> to vector<4x608xf32>
    %cst_7 = arith.constant dense<0.000000e+00> : vector<8x608xf32>
    %9 = tpu.matmul %7, %8, %cst_7 {dimension_numbers = #tpu.dot_dimension_numbers<[1], [0], [0], [1], [0, 0, 1, 1], [], []>} : vector<8x4xf32>, vector<4x608xf32>, vector<8x608xf32> -> vector<8x608xf32>
    %10 = arith.addf %5, %9 : vector<8x608xf32>
    %c2 = arith.constant 2 : index
    %c0_8 = arith.constant 0 : index
    %c0_9 = arith.constant 0 : index
    %11 = vector.load %arg2[%c2, %c0_8, %c0_9] : memref<9x8x4xf32, #tpu.memory_space<vmem>>, vector<1x8x4xf32>
    %12 = vector.shape_cast %11 : vector<1x8x4xf32> to vector<8x4xf32>
    %13 = vector.extract_strided_slice %1 {offsets = [0, 2], sizes = [4, 608], strides = [1, 1]} : vector<4x704xf32> to vector<4x608xf32>
    %cst_10 = arith.constant dense<0.000000e+00> : vector<8x608xf32>
    %14 = tpu.matmul %12, %13, %cst_10 {dimension_numbers = #tpu.dot_dimension_numbers<[1], [0], [0], [1], [0, 0, 1, 1], [], []>} : vector<8x4xf32>, vector<4x608xf32>, vector<8x608xf32> -> vector<8x608xf32>
    %15 = arith.addf %10, %14 : vector<8x608xf32>
    %c3 = arith.constant 3 : index
    %c0_11 = arith.constant 0 : index
    %c0_12 = arith.constant 0 : index
    %16 = vector.load %arg2[%c3, %c0_11, %c0_12] : memref<9x8x4xf32, #tpu.memory_space<vmem>>, vector<1x8x4xf32>
    %17 = vector.shape_cast %16 : vector<1x8x4xf32> to vector<8x4xf32>
    %18 = vector.extract_strided_slice %1 {offsets = [0, 32], sizes = [4, 608], strides = [1, 1]} : vector<4x704xf32> to vector<4x608xf32>
    %cst_13 = arith.constant dense<0.000000e+00> : vector<8x608xf32>
    %19 = tpu.matmul %17, %18, %cst_13 {dimension_numbers = #tpu.dot_dimension_numbers<[1], [0], [0], [1], [0, 0, 1, 1], [], []>} : vector<8x4xf32>, vector<4x608xf32>, vector<8x608xf32> -> vector<8x608xf32>
    %20 = arith.addf %15, %19 : vector<8x608xf32>
    %c4 = arith.constant 4 : index
    %c0_14 = arith.constant 0 : index
    %c0_15 = arith.constant 0 : index
    %21 = vector.load %arg2[%c4, %c0_14, %c0_15] : memref<9x8x4xf32, #tpu.memory_space<vmem>>, vector<1x8x4xf32>
    %22 = vector.shape_cast %21 : vector<1x8x4xf32> to vector<8x4xf32>
    %23 = vector.extract_strided_slice %1 {offsets = [0, 33], sizes = [4, 608], strides = [1, 1]} : vector<4x704xf32> to vector<4x608xf32>
    %cst_16 = arith.constant dense<0.000000e+00> : vector<8x608xf32>
    %24 = tpu.matmul %22, %23, %cst_16 {dimension_numbers = #tpu.dot_dimension_numbers<[1], [0], [0], [1], [0, 0, 1, 1], [], []>} : vector<8x4xf32>, vector<4x608xf32>, vector<8x608xf32> -> vector<8x608xf32>
    %25 = arith.addf %20, %24 : vector<8x608xf32>
    %c5 = arith.constant 5 : index
    %c0_17 = arith.constant 0 : index
    %c0_18 = arith.constant 0 : index
    %26 = vector.load %arg2[%c5, %c0_17, %c0_18] : memref<9x8x4xf32, #tpu.memory_space<vmem>>, vector<1x8x4xf32>
    %27 = vector.shape_cast %26 : vector<1x8x4xf32> to vector<8x4xf32>
    %28 = vector.extract_strided_slice %1 {offsets = [0, 34], sizes = [4, 608], strides = [1, 1]} : vector<4x704xf32> to vector<4x608xf32>
    %cst_19 = arith.constant dense<0.000000e+00> : vector<8x608xf32>
    %29 = tpu.matmul %27, %28, %cst_19 {dimension_numbers = #tpu.dot_dimension_numbers<[1], [0], [0], [1], [0, 0, 1, 1], [], []>} : vector<8x4xf32>, vector<4x608xf32>, vector<8x608xf32> -> vector<8x608xf32>
    %30 = arith.addf %25, %29 : vector<8x608xf32>
    %c6 = arith.constant 6 : index
    %c0_20 = arith.constant 0 : index
    %c0_21 = arith.constant 0 : index
    %31 = vector.load %arg2[%c6, %c0_20, %c0_21] : memref<9x8x4xf32, #tpu.memory_space<vmem>>, vector<1x8x4xf32>
    %32 = vector.shape_cast %31 : vector<1x8x4xf32> to vector<8x4xf32>
    %33 = vector.extract_strided_slice %1 {offsets = [0, 64], sizes = [4, 608], strides = [1, 1]} : vector<4x704xf32> to vector<4x608xf32>
    %cst_22 = arith.constant dense<0.000000e+00> : vector<8x608xf32>
    %34 = tpu.matmul %32, %33, %cst_22 {dimension_numbers = #tpu.dot_dimension_numbers<[1], [0], [0], [1], [0, 0, 1, 1], [], []>} : vector<8x4xf32>, vector<4x608xf32>, vector<8x608xf32> -> vector<8x608xf32>
    %35 = arith.addf %30, %34 : vector<8x608xf32>
    %c7 = arith.constant 7 : index
    %c0_23 = arith.constant 0 : index
    %c0_24 = arith.constant 0 : index
    %36 = vector.load %arg2[%c7, %c0_23, %c0_24] : memref<9x8x4xf32, #tpu.memory_space<vmem>>, vector<1x8x4xf32>
    %37 = vector.shape_cast %36 : vector<1x8x4xf32> to vector<8x4xf32>
    %38 = vector.extract_strided_slice %1 {offsets = [0, 65], sizes = [4, 608], strides = [1, 1]} : vector<4x704xf32> to vector<4x608xf32>
    %cst_25 = arith.constant dense<0.000000e+00> : vector<8x608xf32>
    %39 = tpu.matmul %37, %38, %cst_25 {dimension_numbers = #tpu.dot_dimension_numbers<[1], [0], [0], [1], [0, 0, 1, 1], [], []>} : vector<8x4xf32>, vector<4x608xf32>, vector<8x608xf32> -> vector<8x608xf32>
    %40 = arith.addf %35, %39 : vector<8x608xf32>
    %c8 = arith.constant 8 : index
    %c0_26 = arith.constant 0 : index
    %c0_27 = arith.constant 0 : index
    %41 = vector.load %arg2[%c8, %c0_26, %c0_27] : memref<9x8x4xf32, #tpu.memory_space<vmem>>, vector<1x8x4xf32>
    %42 = vector.shape_cast %41 : vector<1x8x4xf32> to vector<8x4xf32>
    %43 = vector.extract_strided_slice %1 {offsets = [0, 66], sizes = [4, 608], strides = [1, 1]} : vector<4x704xf32> to vector<4x608xf32>
    %cst_28 = arith.constant dense<0.000000e+00> : vector<8x608xf32>
    %44 = tpu.matmul %42, %43, %cst_28 {dimension_numbers = #tpu.dot_dimension_numbers<[1], [0], [0], [1], [0, 0, 1, 1], [], []>} : vector<8x4xf32>, vector<4x608xf32>, vector<8x608xf32> -> vector<8x608xf32>
    %45 = arith.addf %40, %44 : vector<8x608xf32>
    %c0_29 = arith.constant 0 : index
    %c0_30 = arith.constant 0 : index
    %46 = vector.load %arg3[%c0_29, %c0_30] : memref<8x1xf32, #tpu.memory_space<vmem>>, vector<8x1xf32>
    %47 = vector.broadcast %46 : vector<8x1xf32> to vector<8x608xf32>
    %48 = arith.addf %45, %47 : vector<8x608xf32>
    %cst_31 = arith.constant 0.000000e+00 : f32
    %49 = vector.broadcast %cst_31 : f32 to vector<8x608xf32>
    %50 = arith.maximumf %48, %49 : vector<8x608xf32>
    %51 = tpu.iota {dimensions = array<i32: 1>} : vector<1x608xi32>
    %c31_i32 = arith.constant 31 : i32
    %52 = vector.broadcast %c31_i32 : i32 to vector<1x608xi32>
    %53 = arith.andi %51, %52 : vector<1x608xi32>
    %c32_i32 = arith.constant 32 : i32
    %54 = vector.broadcast %c32_i32 : i32 to vector<1x608xi32>
    %55 = arith.cmpi sge, %51, %54 : vector<1x608xi32>
    %c544_i32 = arith.constant 544 : i32
    %56 = vector.broadcast %c544_i32 : i32 to vector<1x608xi32>
    %57 = arith.cmpi slt, %51, %56 : vector<1x608xi32>
    %58 = arith.andi %55, %57 : vector<1x608xi1>
    %c1_i32 = arith.constant 1 : i32
    %59 = vector.broadcast %c1_i32 : i32 to vector<1x608xi32>
    %60 = arith.cmpi sge, %53, %59 : vector<1x608xi32>
    %61 = arith.andi %58, %60 : vector<1x608xi1>
    %c17_i32 = arith.constant 17 : i32
    %62 = vector.broadcast %c17_i32 : i32 to vector<1x608xi32>
    %63 = arith.cmpi slt, %53, %62 : vector<1x608xi32>
    %64 = arith.andi %61, %63 : vector<1x608xi1>
    %cst_32 = arith.constant 0.000000e+00 : f32
    %65 = vector.shape_cast %64 : vector<1x608xi1> to vector<1x608xi1>
    %66 = vector.broadcast %65 : vector<1x608xi1> to vector<8x608xi1>
    %67 = vector.broadcast %cst_32 : f32 to vector<8x608xf32>
    %68 = arith.select %66, %50, %67 : vector<8x608xi1>, vector<8x608xf32>
    %c0_33 = arith.constant 0 : index
    %c0_34 = arith.constant 0 : index
    %c0_35 = arith.constant 0 : index
    %69 = vector.load %arg4[%c0_33, %c0_34, %c0_35] : memref<9x8x8xf32, #tpu.memory_space<vmem>>, vector<1x8x8xf32>
    %70 = vector.shape_cast %69 : vector<1x8x8xf32> to vector<8x8xf32>
    %71 = vector.extract_strided_slice %68 {offsets = [0, 0], sizes = [8, 512], strides = [1, 1]} : vector<8x608xf32> to vector<8x512xf32>
    %cst_36 = arith.constant dense<0.000000e+00> : vector<8x512xf32>
    %72 = tpu.matmul %70, %71, %cst_36 {dimension_numbers = #tpu.dot_dimension_numbers<[1], [0], [0], [1], [0, 0, 1, 1], [], []>} : vector<8x8xf32>, vector<8x512xf32>, vector<8x512xf32> -> vector<8x512xf32>
    %c1_37 = arith.constant 1 : index
    %c0_38 = arith.constant 0 : index
    %c0_39 = arith.constant 0 : index
    %73 = vector.load %arg4[%c1_37, %c0_38, %c0_39] : memref<9x8x8xf32, #tpu.memory_space<vmem>>, vector<1x8x8xf32>
    %74 = vector.shape_cast %73 : vector<1x8x8xf32> to vector<8x8xf32>
    %75 = vector.extract_strided_slice %68 {offsets = [0, 1], sizes = [8, 512], strides = [1, 1]} : vector<8x608xf32> to vector<8x512xf32>
    %cst_40 = arith.constant dense<0.000000e+00> : vector<8x512xf32>
    %76 = tpu.matmul %74, %75, %cst_40 {dimension_numbers = #tpu.dot_dimension_numbers<[1], [0], [0], [1], [0, 0, 1, 1], [], []>} : vector<8x8xf32>, vector<8x512xf32>, vector<8x512xf32> -> vector<8x512xf32>
    %77 = arith.addf %72, %76 : vector<8x512xf32>
    %c2_41 = arith.constant 2 : index
    %c0_42 = arith.constant 0 : index
    %c0_43 = arith.constant 0 : index
    %78 = vector.load %arg4[%c2_41, %c0_42, %c0_43] : memref<9x8x8xf32, #tpu.memory_space<vmem>>, vector<1x8x8xf32>
    %79 = vector.shape_cast %78 : vector<1x8x8xf32> to vector<8x8xf32>
    %80 = vector.extract_strided_slice %68 {offsets = [0, 2], sizes = [8, 512], strides = [1, 1]} : vector<8x608xf32> to vector<8x512xf32>
    %cst_44 = arith.constant dense<0.000000e+00> : vector<8x512xf32>
    %81 = tpu.matmul %79, %80, %cst_44 {dimension_numbers = #tpu.dot_dimension_numbers<[1], [0], [0], [1], [0, 0, 1, 1], [], []>} : vector<8x8xf32>, vector<8x512xf32>, vector<8x512xf32> -> vector<8x512xf32>
    %82 = arith.addf %77, %81 : vector<8x512xf32>
    %c3_45 = arith.constant 3 : index
    %c0_46 = arith.constant 0 : index
    %c0_47 = arith.constant 0 : index
    %83 = vector.load %arg4[%c3_45, %c0_46, %c0_47] : memref<9x8x8xf32, #tpu.memory_space<vmem>>, vector<1x8x8xf32>
    %84 = vector.shape_cast %83 : vector<1x8x8xf32> to vector<8x8xf32>
    %85 = vector.extract_strided_slice %68 {offsets = [0, 32], sizes = [8, 512], strides = [1, 1]} : vector<8x608xf32> to vector<8x512xf32>
    %cst_48 = arith.constant dense<0.000000e+00> : vector<8x512xf32>
    %86 = tpu.matmul %84, %85, %cst_48 {dimension_numbers = #tpu.dot_dimension_numbers<[1], [0], [0], [1], [0, 0, 1, 1], [], []>} : vector<8x8xf32>, vector<8x512xf32>, vector<8x512xf32> -> vector<8x512xf32>
    %87 = arith.addf %82, %86 : vector<8x512xf32>
    %c4_49 = arith.constant 4 : index
    %c0_50 = arith.constant 0 : index
    %c0_51 = arith.constant 0 : index
    %88 = vector.load %arg4[%c4_49, %c0_50, %c0_51] : memref<9x8x8xf32, #tpu.memory_space<vmem>>, vector<1x8x8xf32>
    %89 = vector.shape_cast %88 : vector<1x8x8xf32> to vector<8x8xf32>
    %90 = vector.extract_strided_slice %68 {offsets = [0, 33], sizes = [8, 512], strides = [1, 1]} : vector<8x608xf32> to vector<8x512xf32>
    %cst_52 = arith.constant dense<0.000000e+00> : vector<8x512xf32>
    %91 = tpu.matmul %89, %90, %cst_52 {dimension_numbers = #tpu.dot_dimension_numbers<[1], [0], [0], [1], [0, 0, 1, 1], [], []>} : vector<8x8xf32>, vector<8x512xf32>, vector<8x512xf32> -> vector<8x512xf32>
    %92 = arith.addf %87, %91 : vector<8x512xf32>
    %c5_53 = arith.constant 5 : index
    %c0_54 = arith.constant 0 : index
    %c0_55 = arith.constant 0 : index
    %93 = vector.load %arg4[%c5_53, %c0_54, %c0_55] : memref<9x8x8xf32, #tpu.memory_space<vmem>>, vector<1x8x8xf32>
    %94 = vector.shape_cast %93 : vector<1x8x8xf32> to vector<8x8xf32>
    %95 = vector.extract_strided_slice %68 {offsets = [0, 34], sizes = [8, 512], strides = [1, 1]} : vector<8x608xf32> to vector<8x512xf32>
    %cst_56 = arith.constant dense<0.000000e+00> : vector<8x512xf32>
    %96 = tpu.matmul %94, %95, %cst_56 {dimension_numbers = #tpu.dot_dimension_numbers<[1], [0], [0], [1], [0, 0, 1, 1], [], []>} : vector<8x8xf32>, vector<8x512xf32>, vector<8x512xf32> -> vector<8x512xf32>
    %97 = arith.addf %92, %96 : vector<8x512xf32>
    %c6_57 = arith.constant 6 : index
    %c0_58 = arith.constant 0 : index
    %c0_59 = arith.constant 0 : index
    %98 = vector.load %arg4[%c6_57, %c0_58, %c0_59] : memref<9x8x8xf32, #tpu.memory_space<vmem>>, vector<1x8x8xf32>
    %99 = vector.shape_cast %98 : vector<1x8x8xf32> to vector<8x8xf32>
    %100 = vector.extract_strided_slice %68 {offsets = [0, 64], sizes = [8, 512], strides = [1, 1]} : vector<8x608xf32> to vector<8x512xf32>
    %cst_60 = arith.constant dense<0.000000e+00> : vector<8x512xf32>
    %101 = tpu.matmul %99, %100, %cst_60 {dimension_numbers = #tpu.dot_dimension_numbers<[1], [0], [0], [1], [0, 0, 1, 1], [], []>} : vector<8x8xf32>, vector<8x512xf32>, vector<8x512xf32> -> vector<8x512xf32>
    %102 = arith.addf %97, %101 : vector<8x512xf32>
    %c7_61 = arith.constant 7 : index
    %c0_62 = arith.constant 0 : index
    %c0_63 = arith.constant 0 : index
    %103 = vector.load %arg4[%c7_61, %c0_62, %c0_63] : memref<9x8x8xf32, #tpu.memory_space<vmem>>, vector<1x8x8xf32>
    %104 = vector.shape_cast %103 : vector<1x8x8xf32> to vector<8x8xf32>
    %105 = vector.extract_strided_slice %68 {offsets = [0, 65], sizes = [8, 512], strides = [1, 1]} : vector<8x608xf32> to vector<8x512xf32>
    %cst_64 = arith.constant dense<0.000000e+00> : vector<8x512xf32>
    %106 = tpu.matmul %104, %105, %cst_64 {dimension_numbers = #tpu.dot_dimension_numbers<[1], [0], [0], [1], [0, 0, 1, 1], [], []>} : vector<8x8xf32>, vector<8x512xf32>, vector<8x512xf32> -> vector<8x512xf32>
    %107 = arith.addf %102, %106 : vector<8x512xf32>
    %c8_65 = arith.constant 8 : index
    %c0_66 = arith.constant 0 : index
    %c0_67 = arith.constant 0 : index
    %108 = vector.load %arg4[%c8_65, %c0_66, %c0_67] : memref<9x8x8xf32, #tpu.memory_space<vmem>>, vector<1x8x8xf32>
    %109 = vector.shape_cast %108 : vector<1x8x8xf32> to vector<8x8xf32>
    %110 = vector.extract_strided_slice %68 {offsets = [0, 66], sizes = [8, 512], strides = [1, 1]} : vector<8x608xf32> to vector<8x512xf32>
    %cst_68 = arith.constant dense<0.000000e+00> : vector<8x512xf32>
    %111 = tpu.matmul %109, %110, %cst_68 {dimension_numbers = #tpu.dot_dimension_numbers<[1], [0], [0], [1], [0, 0, 1, 1], [], []>} : vector<8x8xf32>, vector<8x512xf32>, vector<8x512xf32> -> vector<8x512xf32>
    %112 = arith.addf %107, %111 : vector<8x512xf32>
    %c0_69 = arith.constant 0 : index
    %c0_70 = arith.constant 0 : index
    %113 = vector.load %arg5[%c0_69, %c0_70] : memref<8x1xf32, #tpu.memory_space<vmem>>, vector<8x1xf32>
    %114 = vector.broadcast %113 : vector<8x1xf32> to vector<8x512xf32>
    %115 = arith.addf %112, %114 : vector<8x512xf32>
    %cst_71 = arith.constant 0.000000e+00 : f32
    %116 = vector.broadcast %cst_71 : f32 to vector<8x512xf32>
    %117 = arith.maximumf %115, %116 : vector<8x512xf32>
    %118 = vector.shape_cast %117 : vector<8x512xf32> to vector<1x8x512xf32>
    %c0_72 = arith.constant 0 : index
    %c0_73 = arith.constant 0 : index
    %c0_74 = arith.constant 0 : index
    %119 = vector.load %arg6[%c0_72, %c0_73, %c0_74] : memref<1x8x512xf32, #tpu.memory_space<vmem>>, vector<1x8x512xf32>
    tpu.vector_store %arg6[%c0_72, %c0_73, %c0_74], %118 {strides = array<i32>} : memref<1x8x512xf32, #tpu.memory_space<vmem>>, vector<1x8x512xf32>,
    return
  }
  func.func @transform_0(%arg0: i32) -> (i32, i32, i32) {
    %c0_i32 = arith.constant 0 : i32
    %c0_i32_0 = arith.constant 0 : i32
    %c0_i32_1 = arith.constant 0 : i32
    return %arg0, %c0_i32, %c0_i32_0 : i32, i32, i32
  }
  func.func @transform_1(%arg0: i32) -> (i32, i32, i32) {
    %c0_i32 = arith.constant 0 : i32
    %c0_i32_0 = arith.constant 0 : i32
    %c0_i32_1 = arith.constant 0 : i32
    %c0_i32_2 = arith.constant 0 : i32
    return %c0_i32, %c0_i32_0, %c0_i32_1 : i32, i32, i32
  }
  func.func @transform_2(%arg0: i32) -> (i32, i32) {
    %c0_i32 = arith.constant 0 : i32
    %c0_i32_0 = arith.constant 0 : i32
    %c0_i32_1 = arith.constant 0 : i32
    return %c0_i32, %c0_i32_0 : i32, i32
  }
  func.func @transform_3(%arg0: i32) -> (i32, i32, i32) {
    %c0_i32 = arith.constant 0 : i32
    %c0_i32_0 = arith.constant 0 : i32
    %c0_i32_1 = arith.constant 0 : i32
    %c0_i32_2 = arith.constant 0 : i32
    return %c0_i32, %c0_i32_0, %c0_i32_1 : i32, i32, i32
  }
  func.func @transform_4(%arg0: i32) -> (i32, i32) {
    %c0_i32 = arith.constant 0 : i32
    %c0_i32_0 = arith.constant 0 : i32
    %c0_i32_1 = arith.constant 0 : i32
    return %c0_i32, %c0_i32_0 : i32, i32
  }
  func.func @transform_5(%arg0: i32) -> (i32, i32, i32) {
    %c0_i32 = arith.constant 0 : i32
    %c0_i32_0 = arith.constant 0 : i32
    %c0_i32_1 = arith.constant 0 : i32
    return %arg0, %c0_i32, %c0_i32_0 : i32, i32, i32
  }
}

</mosaic_0001>

<llo_original>
// kernel: double_conv_forward.1
$region0: #{double_conv_forward.1}
  #allocation0 [shape = 'u32[]', space=smem, size = 0x4, offset = 0x4, fixed_abs, tag = 'smem constant byte address 0x4 - core index']
  #allocation1 [shape = 'u32[144,128]{1,0:T(1,128)}', space=vmem, size = 0x12000, scoped, tag = 'internal scratch']
  %s0 = inlined_call_operand.vmem [shape: f32[2,4,704], index: 0, kind: input, shape index: {}]
  %s1 = inlined_call_operand.vmem [shape: f32[9,8,4], index: 1, kind: input, shape index: {}]
  %s2 = inlined_call_operand.vmem [shape: f32[8,1], index: 2, kind: input, shape index: {}]
  %s3 = inlined_call_operand.vmem [shape: f32[9,8,8], index: 3, kind: input, shape index: {}]
  %s4 = inlined_call_operand.vmem [shape: f32[8,1], index: 4, kind: input, shape index: {}]
  %s5 = inlined_call_operand.vmem [shape: f32[2,8,512], index: 5, kind: output, shape index: {}]
  %s6 = sld [smem:[#allocation0]]
  $region53: #{double_conv_forward.1} parent=0
    _
  %s8 = ssub.s32 1, %s6
  %s9 = scalar_select 0, %s8, %s6
  loop: start=0, step=1, limit=4
  $region2: #{double_conv_forward.1} parent=0 // loop_pre_header
    _
  $region3: #{double_conv_forward.1} parent=0 // loop_header
    %s11 = sphi 0, %s15
    %p12 = scmp.ge.s32.totalorder %s11, 4
    %s21 = sphi 0, %s23
    %s24 = sphi 0, %s21
    %s25 = sphi 0, %s24
    %s41 = sphi 0, %s25
    %s45 = sphi 0, %s45
    %s47 = sphi 0, %s45
    %s48 = sphi 0, %s47
    %s62 = sphi 0, %s48
    %s66 = sphi 0, %s66
    %s68 = sphi 0, %s66
    %s69 = sphi 0, %s68
    %s83 = sphi 0, %s69
    %s87 = sphi 0, %s87
    %s89 = sphi 0, %s87
    %s90 = sphi 0, %s89
    %s104 = sphi 0, %s90
    %s108 = sphi 0, %s108
    %s110 = sphi 0, %s108
    %s111 = sphi 0, %s110
    %s125 = sphi 0, %s111
    %s131 = sphi 0, %s133
    %s134 = sphi 0, %s131
    %s135 = sphi 0, %s134
    %s151 = sphi 0, %s135
  $region4: #{double_conv_forward.1} parent=0 // loop_header_branch
    %14 = sbr.rel (%p12) target = $region8
  $region5: #{double_conv_forward.1} parent=0 // loop_body
    %s16 = ssub.s32 %s11, 1
    %s17 = ssub.s32 %s11, 2
    %s18 = sadd.s32 %s11, 1
    %s19 = ssub.s32 %s11, %s18
    %p20 = scmp.eq.s32.totalorder %s19, 0
    %s22 = sadd.s32 %s21, 1
    %s23 = scalar_select %p20, %s21, %s22
    %p26 = pneg %p20
    %p27 = scmp.eq.s32.totalorder %s11, 1
    %p28 = por %p26, %p27
    %p29 = scmp.ne.s32.totalorder %s21, %s24
    %p30 = scmp.eq.s32.totalorder %s11, 0
    %p31 = por %p29, %p30
    %p32 = scmp.ne.s32.totalorder %s21, %s24
    %p33 = scmp.eq.s32.totalorder %s16, 1
    %p34 = por %p32, %p33
    %p35 = scmp.ne.s32.totalorder %s24, %s25
    %p36 = scmp.eq.s32.totalorder %s16, 0
    %p37 = por %p35, %p36
    %p38 = scmp.ne.s32.totalorder %s24, %s25
    %p39 = scmp.eq.s32.totalorder %s17, 1
    %p40 = por %p38, %p39
    %p42 = scmp.ne.s32.totalorder %s25, %s41
    %p43 = scmp.eq.s32.totalorder %s17, 0
    %p44 = por %p42, %p43
    %s46 = sadd.s32 %s45, 1
    %p49 = scmp.eq.s32.totalorder %s11, 1
    %p50 = scmp.ne.s32.totalorder %s45, %s47
    %p51 = scmp.eq.s32.totalorder %s11, 0
    %p52 = por %p50, %p51
    %p53 = scmp.ne.s32.totalorder %s45, %s47
    %p54 = scmp.eq.s32.totalorder %s16, 1
    %p55 = por %p53, %p54
    %p56 = scmp.ne.s32.totalorder %s47, %s48
    %p57 = scmp.eq.s32.totalorder %s16, 0
    %p58 = por %p56, %p57
    %p59 = scmp.ne.s32.totalorder %s47, %s48
    %p60 = scmp.eq.s32.totalorder %s17, 1
    %p61 = por %p59, %p60
    %p63 = scmp.ne.s32.totalorder %s48, %s62
    %p64 = scmp.eq.s32.totalorder %s17, 0
    %p65 = por %p63, %p64
    %s67 = sadd.s32 %s66, 1
    %p70 = scmp.eq.s32.totalorder %s11, 1
    %p71 = scmp.ne.s32.totalorder %s66, %s68
    %p72 = scmp.eq.s32.totalorder %s11, 0
    %p73 = por %p71, %p72
    %p74 = scmp.ne.s32.totalorder %s66, %s68
    %p75 = scmp.eq.s32.totalorder %s16, 1
    %p76 = por %p74, %p75
    %p77 = scmp.ne.s32.totalorder %s68, %s69
    %p78 = scmp.eq.s32.totalorder %s16, 0
    %p79 = por %p77, %p78
    %p80 = scmp.ne.s32.totalorder %s68, %s69
    %p81 = scmp.eq.s32.totalorder %s17, 1
    %p82 = por %p80, %p81
    %p84 = scmp.ne.s32.totalorder %s69, %s83
    %p85 = scmp.eq.s32.totalorder %s17, 0
    %p86 = por %p84, %p85
    %s88 = sadd.s32 %s87, 1
    %p91 = scmp.eq.s32.totalorder %s11, 1
    %p92 = scmp.ne.s32.totalorder %s87, %s89
    %p93 = scmp.eq.s32.totalorder %s11, 0
    %p94 = por %p92, %p93
    %p95 = scmp.ne.s32.totalorder %s87, %s89
    %p96 = scmp.eq.s32.totalorder %s16, 1
    %p97 = por %p95, %p96
    %p98 = scmp.ne.s32.totalorder %s89, %s90
    %p99 = scmp.eq.s32.totalorder %s16, 0
    %p100 = por %p98, %p99
    %p101 = scmp.ne.s32.totalorder %s89, %s90
    %p102 = scmp.eq.s32.totalorder %s17, 1
    %p103 = por %p101, %p102
    %p105 = scmp.ne.s32.totalorder %s90, %s104
    %p106 = scmp.eq.s32.totalorder %s17, 0
    %p107 = por %p105, %p106
    %s109 = sadd.s32 %s108, 1
    %p112 = scmp.eq.s32.totalorder %s11, 1
    %p113 = scmp.ne.s32.totalorder %s108, %s110
    %p114 = scmp.eq.s32.totalorder %s11, 0
    %p115 = por %p113, %p114
    %p116 = scmp.ne.s32.totalorder %s108, %s110
    %p117 = scmp.eq.s32.totalorder %s16, 1
    %p118 = por %p116, %p117
    %p119 = scmp.ne.s32.totalorder %s110, %s111
    %p120 = scmp.eq.s32.totalorder %s16, 0
    %p121 = por %p119, %p120
    %p122 = scmp.ne.s32.totalorder %s110, %s111
    %p123 = scmp.eq.s32.totalorder %s17, 1
    %p124 = por %p122, %p123
    %p126 = scmp.ne.s32.totalorder %s111, %s125
    %p127 = scmp.eq.s32.totalorder %s17, 0
    %p128 = por %p126, %p127
    %s129 = ssub.s32 %s11, %s18
    %p130 = scmp.eq.s32.totalorder %s129, 0
    %s132 = sadd.s32 %s131, 1
    %s133 = scalar_select %p130, %s131, %s132
    %p136 = pneg %p130
    %p137 = scmp.eq.s32.totalorder %s11, 1
    %p138 = por %p136, %p137
    %p139 = scmp.ne.s32.totalorder %s131, %s134
    %p140 = scmp.eq.s32.totalorder %s11, 0
    %p141 = por %p139, %p140
    %p142 = scmp.ne.s32.totalorder %s131, %s134
    %p143 = scmp.eq.s32.totalorder %s16, 1
    %p144 = por %p142, %p143
    %p145 = scmp.ne.s32.totalorder %s134, %s135
    %p146 = scmp.eq.s32.totalorder %s16, 0
    %p147 = por %p145, %p146
    %p148 = scmp.ne.s32.totalorder %s134, %s135
    %p149 = scmp.eq.s32.totalorder %s17, 1
    %p150 = por %p148, %p149
    %p152 = scmp.ne.s32.totalorder %s135, %s151
    %p153 = scmp.eq.s32.totalorder %s17, 0
    %p154 = por %p152, %p153
    %p155 = scmp.le.s32.totalorder 1, %s11
    %p156 = scmp.lt.s32.totalorder %s11, 3
    %p157 = pnand %p155, %p156
    %p158 = pneg %p157
    // Predicated region
    $region9: #{double_conv_forward.1} parent=5 // pred_check
      _
    $region10: #{double_conv_forward.1} parent=5 // pred_check_branch
      %160 = sbr.rel (%p157) target = $region12
    $region11: #{double_conv_forward.1} parent=5 // pred_region
      %s161 = ssub.s32 %s11, 1
      // Predicated region
      $region13: #{double_conv_forward.1} parent=11 // pred_check
        %p162 = pneg %p58
      $region14: #{double_conv_forward.1} parent=11 // pred_check_branch
        %164 = sbr.rel (%p162) target = $region16
      $region15: #{double_conv_forward.1} parent=11 // pred_region
        _
      $region16: #{double_conv_forward.1} parent=11 // pred_fallthru
        _
      // Predicated region
      $region17: #{double_conv_forward.1} parent=11 // pred_check
        %p165 = pneg %p79
      $region18: #{double_conv_forward.1} parent=11 // pred_check_branch
        %167 = sbr.rel (%p165) target = $region20
      $region19: #{double_conv_forward.1} parent=11 // pred_region
        _
      $region20: #{double_conv_forward.1} parent=11 // pred_fallthru
        _
      // Predicated region
      $region21: #{double_conv_forward.1} parent=11 // pred_check
        %p168 = pneg %p100
      $region22: #{double_conv_forward.1} parent=11 // pred_check_branch
        %170 = sbr.rel (%p168) target = $region24
      $region23: #{double_conv_forward.1} parent=11 // pred_region
        _
      $region24: #{double_conv_forward.1} parent=11 // pred_fallthru
        _
      // Predicated region
      $region25: #{double_conv_forward.1} parent=11 // pred_check
        %p171 = pneg %p121
      $region26: #{double_conv_forward.1} parent=11 // pred_check_branch
        %173 = sbr.rel (%p171) target = $region28
      $region27: #{double_conv_forward.1} parent=11 // pred_region
        _
      $region28: #{double_conv_forward.1} parent=11 // pred_fallthru
        _
    $region12: #{double_conv_forward.1} parent=5 // pred_fallthru
      _
    %p174 = scmp.lt.s32.totalorder %s11, 2
    // Predicated region
    $region29: #{double_conv_forward.1} parent=5 // pred_check
      %p175 = pneg %p174
    $region30: #{double_conv_forward.1} parent=5 // pred_check_branch
      %177 = sbr.rel (%p175) target = $region32
    $region31: #{double_conv_forward.1} parent=5 // pred_region
      // Predicated region
      $region33: #{double_conv_forward.1} parent=31 // pred_check
        %p178 = pneg %p31
      $region34: #{double_conv_forward.1} parent=31 // pred_check_branch
        %180 = sbr.rel (%p178) target = $region36
      $region35: #{double_conv_forward.1} parent=31 // pred_region
        %p181 = scmp.lt.s32.totalorder %s11, 1
        %s182 = scalar_select %p181, %s11, 1
        %s183 = smul.addr %s182, 6
        %s184 = smul.addr %s183, 4
        %s185 = scalar_lea.vmem %s0, %s184
      $region36: #{double_conv_forward.1} parent=31 // pred_fallthru
        _
    $region32: #{double_conv_forward.1} parent=5 // pred_fallthru
      _
    %p186 = scmp.le.s32.totalorder 1, %s11
    %p187 = scmp.lt.s32.totalorder %s11, 3
    %p188 = pnand %p186, %p187
    %p189 = pneg %p188
    // Predicated region
    $region37: #{double_conv_forward.1} parent=5 // pred_check
      _
    $region38: #{double_conv_forward.1} parent=5 // pred_check_branch
      %191 = sbr.rel (%p188) target = $region40
    $region39: #{double_conv_forward.1} parent=5 // pred_region
      %s192 = ssub.s32 %s11, 1
      %p193 = scmp.lt.s32.totalorder %s16, 1
      %s194 = scalar_select %p193, %s16, 1
      %s195 = smul.addr %s194, 6
      %s196 = smul.addr %s195, 4
      %s197 = scalar_lea.vmem %s0, %s196
      %p198 = pneg %p37
      %p199 = pneg %p34
      %p200 = pneg %p58
      %p201 = pneg %p55
      %p202 = pneg %p79
      %p203 = pneg %p76
      %p204 = pneg %p100
      %p205 = pneg %p97
      %p206 = pneg %p121
      %p207 = pneg %p118
      %p208 = pneg %p147
      %p209 = pneg %p144
      %p210 = scmp.lt.s32.totalorder %s16, 1
      %s211 = scalar_select %p210, %s16, 1
      %s212 = smul.addr %s211, 4
      %s213 = smul.addr %s212, 8
      %s214 = scalar_lea.vmem %s5, %s213
      %p215 = scmp.lt.s32.totalorder %s16, 1
      %s216 = scalar_select %p215, %s16, 1
      %s217 = smul.addr %s216, 6
      %s218 = smul.addr %s217, 4
      %s219 = scalar_lea.vmem %s0, %s218
      %p220 = scmp.lt.s32.totalorder %s16, 1
      %s221 = scalar_select %p220, %s16, 1
      %s222 = smul.addr %s221, 4
      %s223 = smul.addr %s222, 8
      %s224 = scalar_lea.vmem %s5, %s223
      %v225 = vld [vmem:[%s219] sm:$0xff]
      %v226 = vld [vmem:[%s219 + $0x8] sm:$0xff]
      %v227 = vld [vmem:[%s219 + $0x10] sm:$0xff]
      %v228 = vld [vmem:[%s1] sm:$0xff]
      %s229 = scalar_lea.vmem %s1, 8
      %v230 = vld [vmem:[%s229] sm:$0xff]
      %v234 = vcombine.high %v225, %v225
      %v235 = vcombine.high %v226, %v226
      %236 = vrot.lane.b32.xlu0 %v225, 127
      %v237 = vpop.permute.xlu0 %236
      %238 = vrot.lane.b32.xlu0 %v234, 127
      %v239 = vpop.permute.xlu0 %238
      %240 = vrot.lane.b32.xlu0 %v226, 127
      %v241 = vpop.permute.xlu0 %240
      %242 = vrot.lane.b32.xlu0 %v235, 127
      %v243 = vpop.permute.xlu0 %242
      %244 = vrot.lane.b32.xlu0 %v227, 127
      %v245 = vpop.permute.xlu0 %244
      %vm246 = vcmask 1039360
      %v247 = vsel %vm246, %v237, %v239
      %v248 = vsel %vm246, %v239, %v241
      %v249 = vsel %vm246, %v241, %v243
      %v250 = vsel %vm246, %v243, %v245
      %vm251 = vcmask 31744
      %v253 = vsel %vm251, %v230, 0
      %vm255 = vcmask 1043456
      %v256 = vsel %vm255, %v247, 0
      %v258 = vsel %vm255, %v248, 0
      %v260 = vsel %vm255, %v249, 0
      %v262 = vsel %vm255, %v250, 0
      %v264 = vsel %vm255, %v245, 0
      %266 = vmatprep.subr.mxu0 %v258
      %267 = vmatpush1.msra.mxu0 %v256
      %268 = vmatprep.subr.mxu0 0.0
      %269 = vmatpush1.msra.mxu0 0.0
      %270 = vmatprep.subr.mxu0 0.0
      %271 = vmatpush1.msra.mxu0 0.0
      %272 = vmatprep.subr.mxu0 0.0
      %273 = vmatpush1.msra.mxu0 0.0
      %274 = vmatprep.subr.mxu0 0.0
      %275 = vmatpush1.msra.mxu0 0.0
      %276 = vmatprep.subr.mxu0 0.0
      %277 = vmatpush1.msra.mxu0 0.0
      %278 = vmatprep.subr.mxu0 0.0
      %279 = vmatpush1.msra.mxu0 0.0
      %280 = vmatprep.subr.mxu0 0.0
      %281 = vmatpush1.msra.mxu0 0.0
      %282 = vmatprep.subr.mxu0 0.0
      %283 = vmatpush1.msra.mxu0 0.0
      %284 = vmatprep.subr.mxu0 0.0
      %285 = vmatpush1.msra.mxu0 0.0
      %286 = vmatprep.subr.mxu0 0.0
      %287 = vmatpush1.msra.mxu0 0.0
      %288 = vmatprep.subr.mxu0 0.0
      %289 = vmatpush1.msra.mxu0 0.0
      %290 = vmatprep.subr.mxu0 0.0
      %291 = vmatpush1.msra.mxu0 0.0
      %292 = vmatprep.subr.mxu0 0.0
      %293 = vmatpush1.msra.mxu0 0.0
      %294 = vmatprep.subr.mxu0 0.0
      %295 = vmatpush1.msra.mxu0 0.0
      %296 = vmatprep.subr.mxu0 0.0
      %297 = vmatpush1.msra.mxu0 0.0
      %298 = vmatprep.subr.mxu0 0.0
      %299 = vmatpush1.msra.mxu0 0.0
      %300 = vmatprep.subr.mxu0 0.0
      %301 = vmatpush1.msra.mxu0 0.0
      %302 = vmatprep.subr.mxu0 0.0
      %303 = vmatpush1.msra.mxu0 0.0
      %304 = vmatprep.subr.mxu0 0.0
      %305 = vmatpush1.msra.mxu0 0.0
      %306 = vmatprep.subr.mxu0 0.0
      %307 = vmatpush1.msra.mxu0 0.0
      %308 = vmatprep.subr.mxu0 0.0
      %309 = vmatpush1.msra.mxu0 0.0
      %310 = vmatprep.subr.mxu0 0.0
      %311 = vmatpush1.msra.mxu0 0.0
      %312 = vmatprep.subr.mxu0 0.0
      %313 = vmatpush1.msra.mxu0 0.0
      %314 = vmatprep.subr.mxu0 0.0
      %315 = vmatpush1.msra.mxu0 0.0
      %316 = vmatprep.subr.mxu0 0.0
      %317 = vmatpush1.msra.mxu0 0.0
      %318 = vmatprep.subr.mxu0 0.0
      %319 = vmatpush1.msra.mxu0 0.0
      %320 = vmatprep.subr.mxu0 0.0
      %321 = vmatpush1.msra.mxu0 0.0
      %322 = vmatprep.subr.mxu0 0.0
      %323 = vmatpush1.msra.mxu0 0.0
      %324 = vmatprep.subr.mxu0 0.0
      %325 = vmatpush1.msra.mxu0 0.0
      %326 = vmatprep.subr.mxu0 0.0
      %327 = vmatpush1.msra.mxu0 0.0
      %328 = vmatprep.subr.mxu0 0.0
      %329 = vmatpush1.msra.mxu0 0.0
      %330 = vmatprep.mubr.f32.mxu0 0.0
      %331 = vmatmul.mubr.f32.gmra.mrb[0].mxu0 %v253
      %v332 = vpop.f32.mrb[0].mxu0
      %v333 = vadd.f32 0.0, %v332
      %v334 = vpop.f32.mrb[0].mxu0
      %v335 = vadd.f32 0.0, %v334
      %336 = vdwg.mxu0
      %337 = vmatprep.subr.mxu0 %v262
      %338 = vmatpush1.msra.mxu0 %v260
      %339 = vmatprep.subr.mxu0 0.0
      %340 = vmatpush1.msra.mxu0 0.0
      %341 = vmatprep.subr.mxu0 0.0
      %342 = vmatpush1.msra.mxu0 0.0
      %343 = vmatprep.subr.mxu0 0.0
      %344 = vmatpush1.msra.mxu0 0.0
      %345 = vmatprep.subr.mxu0 0.0
      %346 = vmatpush1.msra.mxu0 0.0
      %347 = vmatprep.subr.mxu0 0.0
      %348 = vmatpush1.msra.mxu0 0.0
      %349 = vmatprep.subr.mxu0 0.0
      %350 = vmatpush1.msra.mxu0 0.0
      %351 = vmatprep.subr.mxu0 0.0
      %352 = vmatpush1.msra.mxu0 0.0
      %353 = vmatprep.subr.mxu0 0.0
      %354 = vmatpush1.msra.mxu0 0.0
      %355 = vmatprep.subr.mxu0 0.0
      %356 = vmatpush1.msra.mxu0 0.0
      %357 = vmatprep.subr.mxu0 0.0
      %358 = vmatpush1.msra.mxu0 0.0
      %359 = vmatprep.subr.mxu0 0.0
      %360 = vmatpush1.msra.mxu0 0.0
      %361 = vmatprep.subr.mxu0 0.0
      %362 = vmatpush1.msra.mxu0 0.0
      %363 = vmatprep.subr.mxu0 0.0
      %364 = vmatpush1.msra.mxu0 0.0
      %365 = vmatprep.subr.mxu0 0.0
      %366 = vmatpush1.msra.mxu0 0.0
      %367 = vmatprep.subr.mxu0 0.0
      %368 = vmatpush1.msra.mxu0 0.0
      %369 = vmatprep.subr.mxu0 0.0
      %370 = vmatpush1.msra.mxu0 0.0
      %371 = vmatprep.subr.mxu0 0.0
      %372 = vmatpush1.msra.mxu0 0.0
      %373 = vmatprep.subr.mxu0 0.0
      %374 = vmatpush1.msra.mxu0 0.0
      %375 = vmatprep.subr.mxu0 0.0
      %376 = vmatpush1.msra.mxu0 0.0
      %377 = vmatprep.subr.mxu0 0.0
      %378 = vmatpush1.msra.mxu0 0.0
      %379 = vmatprep.subr.mxu0 0.0
      %380 = vmatpush1.msra.mxu0 0.0
      %381 = vmatprep.subr.mxu0 0.0
      %382 = vmatpush1.msra.mxu0 0.0
      %383 = vmatprep.subr.mxu0 0.0
      %384 = vmatpush1.msra.mxu0 0.0
      %385 = vmatprep.subr.mxu0 0.0
      %386 = vmatpush1.msra.mxu0 0.0
      %387 = vmatprep.subr.mxu0 0.0
      %388 = vmatpush1.msra.mxu0 0.0
      %389 = vmatprep.subr.mxu0 0.0
      %390 = vmatpush1.msra.mxu0 0.0
      %391 = vmatprep.subr.mxu0 0.0
      %392 = vmatpush1.msra.mxu0 0.0
      %393 = vmatprep.subr.mxu0 0.0
      %394 = vmatpush1.msra.mxu0 0.0
      %395 = vmatprep.subr.mxu0 0.0
      %396 = vmatpush1.msra.mxu0 0.0
      %397 = vmatprep.subr.mxu0 0.0
      %398 = vmatpush1.msra.mxu0 0.0
      %399 = vmatprep.subr.mxu0 0.0
      %400 = vmatpush1.msra.mxu0 0.0
      %401 = vmatprep.mubr.f32.mxu0 0.0
      %402 = vmatmul.mubr.f32.gmra.mrb[0].mxu0 %v253
      %v403 = vpop.f32.mrb[0].mxu0
      %v404 = vadd.f32 0.0, %v403
      %v405 = vpop.f32.mrb[0].mxu0
      %v406 = vadd.f32 0.0, %v405
      %407 = vdwg.mxu0
      %408 = vmatprep.subr.mxu0 0.0
      %409 = vmatpush1.msra.mxu0 %v264
      %410 = vmatprep.subr.mxu0 0.0
      %411 = vmatpush1.msra.mxu0 0.0
      %412 = vmatprep.subr.mxu0 0.0
      %413 = vmatpush1.msra.mxu0 0.0
      %414 = vmatprep.subr.mxu0 0.0
      %415 = vmatpush1.msra.mxu0 0.0
      %416 = vmatprep.subr.mxu0 0.0
      %417 = vmatpush1.msra.mxu0 0.0
      %418 = vmatprep.subr.mxu0 0.0
      %419 = vmatpush1.msra.mxu0 0.0
      %420 = vmatprep.subr.mxu0 0.0
      %421 = vmatpush1.msra.mxu0 0.0
      %422 = vmatprep.subr.mxu0 0.0
      %423 = vmatpush1.msra.mxu0 0.0
      %424 = vmatprep.subr.mxu0 0.0
      %425 = vmatpush1.msra.mxu0 0.0
      %426 = vmatprep.subr.mxu0 0.0
      %427 = vmatpush1.msra.mxu0 0.0
      %428 = vmatprep.subr.mxu0 0.0
      %429 = vmatpush1.msra.mxu0 0.0
      %430 = vmatprep.subr.mxu0 0.0
      %431 = vmatpush1.msra.mxu0 0.0
      %432 = vmatprep.subr.mxu0 0.0
      %433 = vmatpush1.msra.mxu0 0.0
      %434 = vmatprep.subr.mxu0 0.0
      %435 = vmatpush1.msra.mxu0 0.0
      %436 = vmatprep.subr.mxu0 0.0
      %437 = vmatpush1.msra.mxu0 0.0
      %438 = vmatprep.subr.mxu0 0.0
      %439 = vmatpush1.msra.mxu0 0.0
      %440 = vmatprep.subr.mxu0 0.0
      %441 = vmatpush1.msra.mxu0 0.0
      %442 = vmatprep.subr.mxu0 0.0
      %443 = vmatpush1.msra.mxu0 0.0
      %444 = vmatprep.subr.mxu0 0.0
      %445 = vmatpush1.msra.mxu0 0.0
      %446 = vmatprep.subr.mxu0 0.0
      %447 = vmatpush1.msra.mxu0 0.0
      %448 = vmatprep.subr.mxu0 0.0
      %449 = vmatpush1.msra.mxu0 0.0
      %450 = vmatprep.subr.mxu0 0.0
      %451 = vmatpush1.msra.mxu0 0.0
      %452 = vmatprep.subr.mxu0 0.0
      %453 = vmatpush1.msra.mxu0 0.0
      %454 = vmatprep.subr.mxu0 0.0
      %455 = vmatpush1.msra.mxu0 0.0
      %456 = vmatprep.subr.mxu0 0.0
      %457 = vmatpush1.msra.mxu0 0.0
      %458 = vmatprep.subr.mxu0 0.0
      %459 = vmatpush1.msra.mxu0 0.0
      %460 = vmatprep.subr.mxu0 0.0
      %461 = vmatpush1.msra.mxu0 0.0
      %462 = vmatprep.subr.mxu0 0.0
      %463 = vmatpush1.msra.mxu0 0.0
      %464 = vmatprep.subr.mxu0 0.0
      %465 = vmatpush1.msra.mxu0 0.0
      %466 = vmatprep.subr.mxu0 0.0
      %467 = vmatpush1.msra.mxu0 0.0
      %468 = vmatprep.subr.mxu0 0.0
      %469 = vmatpush1.msra.mxu0 0.0
      %470 = vmatprep.subr.mxu0 0.0
      %471 = vmatpush1.msra.mxu0 0.0
      %472 = vmatprep.mubr.f32.mxu0 0.0
      %473 = vmatmul.mubr.f32.gmra.mrb[0].mxu0 %v253
      %v474 = vpop.f32.mrb[0].mxu0
      %v475 = vadd.f32 0.0, %v474
      %v476 = vpop.f32.mrb[0].mxu0
      %477 = vdwg.mxu0
      %v479 = vsel %vm251, %v228, 0
      %v481 = vsel %vm255, %v225, 0
      %v483 = vsel %vm255, %v234, 0
      %v485 = vsel %vm255, %v226, 0
      %v487 = vsel %vm255, %v235, 0
      %v489 = vsel %vm255, %v227, 0
      %491 = vmatprep.subr.mxu0 %v483
      %492 = vmatpush1.msra.mxu0 %v481
      %493 = vmatprep.subr.mxu0 0.0
      %494 = vmatpush1.msra.mxu0 0.0
      %495 = vmatprep.subr.mxu0 0.0
      %496 = vmatpush1.msra.mxu0 0.0
      %497 = vmatprep.subr.mxu0 0.0
      %498 = vmatpush1.msra.mxu0 0.0
      %499 = vmatprep.subr.mxu0 0.0
      %500 = vmatpush1.msra.mxu0 0.0
      %501 = vmatprep.subr.mxu0 0.0
      %502 = vmatpush1.msra.mxu0 0.0
      %503 = vmatprep.subr.mxu0 0.0
      %504 = vmatpush1.msra.mxu0 0.0
      %505 = vmatprep.subr.mxu0 0.0
      %506 = vmatpush1.msra.mxu0 0.0
      %507 = vmatprep.subr.mxu0 0.0
      %508 = vmatpush1.msra.mxu0 0.0
      %509 = vmatprep.subr.mxu0 0.0
      %510 = vmatpush1.msra.mxu0 0.0
      %511 = vmatprep.subr.mxu0 0.0
      %512 = vmatpush1.msra.mxu0 0.0
      %513 = vmatprep.subr.mxu0 0.0
      %514 = vmatpush1.msra.mxu0 0.0
      %515 = vmatprep.subr.mxu0 0.0
      %516 = vmatpush1.msra.mxu0 0.0
      %517 = vmatprep.subr.mxu0 0.0
      %518 = vmatpush1.msra.mxu0 0.0
      %519 = vmatprep.subr.mxu0 0.0
      %520 = vmatpush1.msra.mxu0 0.0
      %521 = vmatprep.subr.mxu0 0.0
      %522 = vmatpush1.msra.mxu0 0.0
      %523 = vmatprep.subr.mxu0 0.0
      %524 = vmatpush1.msra.mxu0 0.0
      %525 = vmatprep.subr.mxu0 0.0
      %526 = vmatpush1.msra.mxu0 0.0
      %527 = vmatprep.subr.mxu0 0.0
      %528 = vmatpush1.msra.mxu0 0.0
      %529 = vmatprep.subr.mxu0 0.0
      %530 = vmatpush1.msra.mxu0 0.0
      %531 = vmatprep.subr.mxu0 0.0
      %532 = vmatpush1.msra.mxu0 0.0
      %533 = vmatprep.subr.mxu0 0.0
      %534 = vmatpush1.msra.mxu0 0.0
      %535 = vmatprep.subr.mxu0 0.0
      %536 = vmatpush1.msra.mxu0 0.0
      %537 = vmatprep.subr.mxu0 0.0
      %538 = vmatpush1.msra.mxu0 0.0
      %539 = vmatprep.subr.mxu0 0.0
      %540 = vmatpush1.msra.mxu0 0.0
      %541 = vmatprep.subr.mxu0 0.0
      %542 = vmatpush1.msra.mxu0 0.0
      %543 = vmatprep.subr.mxu0 0.0
      %544 = vmatpush1.msra.mxu0 0.0
      %545 = vmatprep.subr.mxu0 0.0
      %546 = vmatpush1.msra.mxu0 0.0
      %547 = vmatprep.subr.mxu0 0.0
      %548 = vmatpush1.msra.mxu0 0.0
      %549 = vmatprep.subr.mxu0 0.0
      %550 = vmatpush1.msra.mxu0 0.0
      %551 = vmatprep.subr.mxu0 0.0
      %552 = vmatpush1.msra.mxu0 0.0
      %553 = vmatprep.subr.mxu0 0.0
      %554 = vmatpush1.msra.mxu0 0.0
      %555 = vmatprep.mubr.f32.mxu0 0.0
      %556 = vmatmul.mubr.f32.gmra.mrb[0].mxu0 %v479
      %v557 = vpop.f32.mrb[0].mxu0
      %v558 = vadd.f32 %v333, %v557
      %v559 = vpop.f32.mrb[0].mxu0
      %v560 = vadd.f32 %v335, %v559
      %561 = vdwg.mxu0
      %562 = vmatprep.subr.mxu0 %v487
      %563 = vmatpush1.msra.mxu0 %v485
      %564 = vmatprep.subr.mxu0 0.0
      %565 = vmatpush1.msra.mxu0 0.0
      %566 = vmatprep.subr.mxu0 0.0
      %567 = vmatpush1.msra.mxu0 0.0
      %568 = vmatprep.subr.mxu0 0.0
      %569 = vmatpush1.msra.mxu0 0.0
      %570 = vmatprep.subr.mxu0 0.0
      %571 = vmatpush1.msra.mxu0 0.0
      %572 = vmatprep.subr.mxu0 0.0
      %573 = vmatpush1.msra.mxu0 0.0
      %574 = vmatprep.subr.mxu0 0.0
      %575 = vmatpush1.msra.mxu0 0.0
      %576 = vmatprep.subr.mxu0 0.0
      %577 = vmatpush1.msra.mxu0 0.0
      %578 = vmatprep.subr.mxu0 0.0
      %579 = vmatpush1.msra.mxu0 0.0
      %580 = vmatprep.subr.mxu0 0.0
      %581 = vmatpush1.msra.mxu0 0.0
      %582 = vmatprep.subr.mxu0 0.0
      %583 = vmatpush1.msra.mxu0 0.0
      %584 = vmatprep.subr.mxu0 0.0
      %585 = vmatpush1.msra.mxu0 0.0
      %586 = vmatprep.subr.mxu0 0.0
      %587 = vmatpush1.msra.mxu0 0.0
      %588 = vmatprep.subr.mxu0 0.0
      %589 = vmatpush1.msra.mxu0 0.0
      %590 = vmatprep.subr.mxu0 0.0
      %591 = vmatpush1.msra.mxu0 0.0
      %592 = vmatprep.subr.mxu0 0.0
      %593 = vmatpush1.msra.mxu0 0.0
      %594 = vmatprep.subr.mxu0 0.0
      %595 = vmatpush1.msra.mxu0 0.0
      %596 = vmatprep.subr.mxu0 0.0
      %597 = vmatpush1.msra.mxu0 0.0
      %598 = vmatprep.subr.mxu0 0.0
      %599 = vmatpush1.msra.mxu0 0.0
      %600 = vmatprep.subr.mxu0 0.0
      %601 = vmatpush1.msra.mxu0 0.0
      %602 = vmatprep.subr.mxu0 0.0
      %603 = vmatpush1.msra.mxu0 0.0
      %604 = vmatprep.subr.mxu0 0.0
      %605 = vmatpush1.msra.mxu0 0.0
      %606 = vmatprep.subr.mxu0 0.0
      %607 = vmatpush1.msra.mxu0 0.0
      %608 = vmatprep.subr.mxu0 0.0
      %609 = vmatpush1.msra.mxu0 0.0
      %610 = vmatprep.subr.mxu0 0.0
      %611 = vmatpush1.msra.mxu0 0.0
      %612 = vmatprep.subr.mxu0 0.0
      %613 = vmatpush1.msra.mxu0 0.0
      %614 = vmatprep.subr.mxu0 0.0
      %615 = vmatpush1.msra.mxu0 0.0
      %616 = vmatprep.subr.mxu0 0.0
      %617 = vmatpush1.msra.mxu0 0.0
      %618 = vmatprep.subr.mxu0 0.0
      %619 = vmatpush1.msra.mxu0 0.0
      %620 = vmatprep.subr.mxu0 0.0
      %621 = vmatpush1.msra.mxu0 0.0
      %622 = vmatprep.subr.mxu0 0.0
      %623 = vmatpush1.msra.mxu0 0.0
      %624 = vmatprep.subr.mxu0 0.0
      %625 = vmatpush1.msra.mxu0 0.0
      %626 = vmatprep.mubr.f32.mxu0 0.0
      %627 = vmatmul.mubr.f32.gmra.mrb[0].mxu0 %v479
      %v628 = vpop.f32.mrb[0].mxu0
      %v629 = vadd.f32 %v404, %v628
      %v630 = vpop.f32.mrb[0].mxu0
      %v631 = vadd.f32 %v406, %v630
      %632 = vdwg.mxu0
      %633 = vmatprep.subr.mxu0 0.0
      %634 = vmatpush1.msra.mxu0 %v489
      %635 = vmatprep.subr.mxu0 0.0
      %636 = vmatpush1.msra.mxu0 0.0
      %637 = vmatprep.subr.mxu0 0.0
      %638 = vmatpush1.msra.mxu0 0.0
      %639 = vmatprep.subr.mxu0 0.0
      %640 = vmatpush1.msra.mxu0 0.0
      %641 = vmatprep.subr.mxu0 0.0
      %642 = vmatpush1.msra.mxu0 0.0
      %643 = vmatprep.subr.mxu0 0.0
      %644 = vmatpush1.msra.mxu0 0.0
      %645 = vmatprep.subr.mxu0 0.0
      %646 = vmatpush1.msra.mxu0 0.0
      %647 = vmatprep.subr.mxu0 0.0
      %648 = vmatpush1.msra.mxu0 0.0
      %649 = vmatprep.subr.mxu0 0.0
      %650 = vmatpush1.msra.mxu0 0.0
      %651 = vmatprep.subr.mxu0 0.0
      %652 = vmatpush1.msra.mxu0 0.0
      %653 = vmatprep.subr.mxu0 0.0
      %654 = vmatpush1.msra.mxu0 0.0
      %655 = vmatprep.subr.mxu0 0.0
      %656 = vmatpush1.msra.mxu0 0.0
      %657 = vmatprep.subr.mxu0 0.0
      %658 = vmatpush1.msra.mxu0 0.0
      %659 = vmatprep.subr.mxu0 0.0
      %660 = vmatpush1.msra.mxu0 0.0
      %661 = vmatprep.subr.mxu0 0.0
      %662 = vmatpush1.msra.mxu0 0.0
      %663 = vmatprep.subr.mxu0 0.0
      %664 = vmatpush1.msra.mxu0 0.0
      %665 = vmatprep.subr.mxu0 0.0
      %666 = vmatpush1.msra.mxu0 0.0
      %667 = vmatprep.subr.mxu0 0.0
      %668 = vmatpush1.msra.mxu0 0.0
      %669 = vmatprep.subr.mxu0 0.0
      %670 = vmatpush1.msra.mxu0 0.0
      %671 = vmatprep.subr.mxu0 0.0
      %672 = vmatpush1.msra.mxu0 0.0
      %673 = vmatprep.subr.mxu0 0.0
      %674 = vmatpush1.msra.mxu0 0.0
      %675 = vmatprep.subr.mxu0 0.0
      %676 = vmatpush1.msra.mxu0 0.0
      %677 = vmatprep.subr.mxu0 0.0
      %678 = vmatpush1.msra.mxu0 0.0
      %679 = vmatprep.subr.mxu0 0.0
      %680 = vmatpush1.msra.mxu0 0.0
      %681 = vmatprep.subr.mxu0 0.0
      %682 = vmatpush1.msra.mxu0 0.0
      %683 = vmatprep.subr.mxu0 0.0
      %684 = vmatpush1.msra.mxu0 0.0
      %685 = vmatprep.subr.mxu0 0.0
      %686 = vmatpush1.msra.mxu0 0.0
      %687 = vmatprep.subr.mxu0 0.0
      %688 = vmatpush1.msra.mxu0 0.0
      %689 = vmatprep.subr.mxu0 0.0
      %690 = vmatpush1.msra.mxu0 0.0
      %691 = vmatprep.subr.mxu0 0.0
      %692 = vmatpush1.msra.mxu0 0.0
      %693 = vmatprep.subr.mxu0 0.0
      %694 = vmatpush1.msra.mxu0 0.0
      %695 = vmatprep.subr.mxu0 0.0
      %696 = vmatpush1.msra.mxu0 0.0
      %697 = vmatprep.mubr.f32.mxu0 0.0
      %698 = vmatmul.mubr.f32.gmra.mrb[0].mxu0 %v479
      %v699 = vpop.f32.mrb[0].mxu0
      %v700 = vadd.f32 %v475, %v699
      %v701 = vpop.f32.mrb[0].mxu0
      %702 = vdwg.mxu0
      %s703 = scalar_lea.vmem %s1, 16
      %v704 = vld [vmem:[%s703] sm:$0xff]
      %705 = vrot.lane.b32.xlu0 %v225, 126
      %v706 = vpop.permute.xlu0 %705
      %707 = vrot.lane.b32.xlu0 %v234, 126
      %v708 = vpop.permute.xlu0 %707
      %709 = vrot.lane.b32.xlu0 %v226, 126
      %v710 = vpop.permute.xlu0 %709
      %711 = vrot.lane.b32.xlu0 %v235, 126
      %v712 = vpop.permute.xlu0 %711
      %713 = vrot.lane.b32.xlu0 %v227, 126
      %v714 = vpop.permute.xlu0 %713
      %vm715 = vcmask 1031168
      %v716 = vsel %vm715, %v706, %v708
      %v717 = vsel %vm715, %v708, %v710
      %v718 = vsel %vm715, %v710, %v712
      %v719 = vsel %vm715, %v712, %v714
      %v721 = vsel %vm251, %v704, 0
      %v723 = vsel %vm255, %v716, 0
      %v725 = vsel %vm255, %v717, 0
      %v727 = vsel %vm255, %v718, 0
      %v729 = vsel %vm255, %v719, 0
      %v731 = vsel %vm255, %v714, 0
      %733 = vmatprep.subr.mxu0 %v725
      %734 = vmatpush1.msra.mxu0 %v723
      %735 = vmatprep.subr.mxu0 0.0
      %736 = vmatpush1.msra.mxu0 0.0
      %737 = vmatprep.subr.mxu0 0.0
      %738 = vmatpush1.msra.mxu0 0.0
      %739 = vmatprep.subr.mxu0 0.0
      %740 = vmatpush1.msra.mxu0 0.0
      %741 = vmatprep.subr.mxu0 0.0
      %742 = vmatpush1.msra.mxu0 0.0
      %743 = vmatprep.subr.mxu0 0.0
      %744 = vmatpush1.msra.mxu0 0.0
      %745 = vmatprep.subr.mxu0 0.0
      %746 = vmatpush1.msra.mxu0 0.0
      %747 = vmatprep.subr.mxu0 0.0
      %748 = vmatpush1.msra.mxu0 0.0
      %749 = vmatprep.subr.mxu0 0.0
      %750 = vmatpush1.msra.mxu0 0.0
      %751 = vmatprep.subr.mxu0 0.0
      %752 = vmatpush1.msra.mxu0 0.0
      %753 = vmatprep.subr.mxu0 0.0
      %754 = vmatpush1.msra.mxu0 0.0
      %755 = vmatprep.subr.mxu0 0.0
      %756 = vmatpush1.msra.mxu0 0.0
      %757 = vmatprep.subr.mxu0 0.0
      %758 = vmatpush1.msra.mxu0 0.0
      %759 = vmatprep.subr.mxu0 0.0
      %760 = vmatpush1.msra.mxu0 0.0
      %761 = vmatprep.subr.mxu0 0.0
      %762 = vmatpush1.msra.mxu0 0.0
      %763 = vmatprep.subr.mxu0 0.0
      %764 = vmatpush1.msra.mxu0 0.0
      %765 = vmatprep.subr.mxu0 0.0
      %766 = vmatpush1.msra.mxu0 0.0
      %767 = vmatprep.subr.mxu0 0.0
      %768 = vmatpush1.msra.mxu0 0.0
      %769 = vmatprep.subr.mxu0 0.0
      %770 = vmatpush1.msra.mxu0 0.0
      %771 = vmatprep.subr.mxu0 0.0
      %772 = vmatpush1.msra.mxu0 0.0
      %773 = vmatprep.subr.mxu0 0.0
      %774 = vmatpush1.msra.mxu0 0.0
      %775 = vmatprep.subr.mxu0 0.0
      %776 = vmatpush1.msra.mxu0 0.0
      %777 = vmatprep.subr.mxu0 0.0
      %778 = vmatpush1.msra.mxu0 0.0
      %779 = vmatprep.subr.mxu0 0.0
      %780 = vmatpush1.msra.mxu0 0.0
      %781 = vmatprep.subr.mxu0 0.0
      %782 = vmatpush1.msra.mxu0 0.0
      %783 = vmatprep.subr.mxu0 0.0
      %784 = vmatpush1.msra.mxu0 0.0
      %785 = vmatprep.subr.mxu0 0.0
      %786 = vmatpush1.msra.mxu0 0.0
      %787 = vmatprep.subr.mxu0 0.0
      %788 = vmatpush1.msra.mxu0 0.0
      %789 = vmatprep.subr.mxu0 0.0
      %790 = vmatpush1.msra.mxu0 0.0
      %791 = vmatprep.subr.mxu0 0.0
      %792 = vmatpush1.msra.mxu0 0.0
      %793 = vmatprep.subr.mxu0 0.0
      %794 = vmatpush1.msra.mxu0 0.0
      %795 = vmatprep.subr.mxu0 0.0
      %796 = vmatpush1.msra.mxu0 0.0
      %797 = vmatprep.mubr.f32.mxu0 0.0
      %798 = vmatmul.mubr.f32.gmra.mrb[0].mxu0 %v721
      %v799 = vpop.f32.mrb[0].mxu0
      %v800 = vadd.f32 0.0, %v799
      %v801 = vpop.f32.mrb[0].mxu0
      %v802 = vadd.f32 0.0, %v801
      %803 = vdwg.mxu0
      %804 = vmatprep.subr.mxu0 %v729
      %805 = vmatpush1.msra.mxu0 %v727
      %806 = vmatprep.subr.mxu0 0.0
      %807 = vmatpush1.msra.mxu0 0.0
      %808 = vmatprep.subr.mxu0 0.0
      %809 = vmatpush1.msra.mxu0 0.0
      %810 = vmatprep.subr.mxu0 0.0
      %811 = vmatpush1.msra.mxu0 0.0
      %812 = vmatprep.subr.mxu0 0.0
      %813 = vmatpush1.msra.mxu0 0.0
      %814 = vmatprep.subr.mxu0 0.0
      %815 = vmatpush1.msra.mxu0 0.0
      %816 = vmatprep.subr.mxu0 0.0
      %817 = vmatpush1.msra.mxu0 0.0
      %818 = vmatprep.subr.mxu0 0.0
      %819 = vmatpush1.msra.mxu0 0.0
      %820 = vmatprep.subr.mxu0 0.0
      %821 = vmatpush1.msra.mxu0 0.0
      %822 = vmatprep.subr.mxu0 0.0
      %823 = vmatpush1.msra.mxu0 0.0
      %824 = vmatprep.subr.mxu0 0.0
      %825 = vmatpush1.msra.mxu0 0.0
      %826 = vmatprep.subr.mxu0 0.0
      %827 = vmatpush1.msra.mxu0 0.0
      %828 = vmatprep.subr.mxu0 0.0
      %829 = vmatpush1.msra.mxu0 0.0
      %830 = vmatprep.subr.mxu0 0.0
      %831 = vmatpush1.msra.mxu0 0.0
      %832 = vmatprep.subr.mxu0 0.0
      %833 = vmatpush1.msra.mxu0 0.0
      %834 = vmatprep.subr.mxu0 0.0
      %835 = vmatpush1.msra.mxu0 0.0
      %836 = vmatprep.subr.mxu0 0.0
      %837 = vmatpush1.msra.mxu0 0.0
      %838 = vmatprep.subr.mxu0 0.0
      %839 = vmatpush1.msra.mxu0 0.0
      %840 = vmatprep.subr.mxu0 0.0
      %841 = vmatpush1.msra.mxu0 0.0
      %842 = vmatprep.subr.mxu0 0.0
      %843 = vmatpush1.msra.mxu0 0.0
      %844 = vmatprep.subr.mxu0 0.0
      %845 = vmatpush1.msra.mxu0 0.0
      %846 = vmatprep.subr.mxu0 0.0
      %847 = vmatpush1.msra.mxu0 0.0
      %848 = vmatprep.subr.mxu0 0.0
      %849 = vmatpush1.msra.mxu0 0.0
      %850 = vmatprep.subr.mxu0 0.0
      %851 = vmatpush1.msra.mxu0 0.0
      %852 = vmatprep.subr.mxu0 0.0
      %853 = vmatpush1.msra.mxu0 0.0
      %854 = vmatprep.subr.mxu0 0.0
      %855 = vmatpush1.msra.mxu0 0.0
      %856 = vmatprep.subr.mxu0 0.0
      %857 = vmatpush1.msra.mxu0 0.0
      %858 = vmatprep.subr.mxu0 0.0
      %859 = vmatpush1.msra.mxu0 0.0
      %860 = vmatprep.subr.mxu0 0.0
      %861 = vmatpush1.msra.mxu0 0.0
      %862 = vmatprep.subr.mxu0 0.0
      %863 = vmatpush1.msra.mxu0 0.0
      %864 = vmatprep.subr.mxu0 0.0
      %865 = vmatpush1.msra.mxu0 0.0
      %866 = vmatprep.subr.mxu0 0.0
      %867 = vmatpush1.msra.mxu0 0.0
      %868 = vmatprep.mubr.f32.mxu0 0.0
      %869 = vmatmul.mubr.f32.gmra.mrb[0].mxu0 %v721
      %v870 = vpop.f32.mrb[0].mxu0
      %v871 = vadd.f32 0.0, %v870
      %v872 = vpop.f32.mrb[0].mxu0
      %v873 = vadd.f32 0.0, %v872
      %874 = vdwg.mxu0
      %875 = vmatprep.subr.mxu0 0.0
      %876 = vmatpush1.msra.mxu0 %v731
      %877 = vmatprep.subr.mxu0 0.0
      %878 = vmatpush1.msra.mxu0 0.0
      %879 = vmatprep.subr.mxu0 0.0
      %880 = vmatpush1.msra.mxu0 0.0
      %881 = vmatprep.subr.mxu0 0.0
      %882 = vmatpush1.msra.mxu0 0.0
      %883 = vmatprep.subr.mxu0 0.0
      %884 = vmatpush1.msra.mxu0 0.0
      %885 = vmatprep.subr.mxu0 0.0
      %886 = vmatpush1.msra.mxu0 0.0
      %887 = vmatprep.subr.mxu0 0.0
      %888 = vmatpush1.msra.mxu0 0.0
      %889 = vmatprep.subr.mxu0 0.0
      %890 = vmatpush1.msra.mxu0 0.0
      %891 = vmatprep.subr.mxu0 0.0
      %892 = vmatpush1.msra.mxu0 0.0
      %893 = vmatprep.subr.mxu0 0.0
      %894 = vmatpush1.msra.mxu0 0.0
      %895 = vmatprep.subr.mxu0 0.0
      %896 = vmatpush1.msra.mxu0 0.0
      %897 = vmatprep.subr.mxu0 0.0
      %898 = vmatpush1.msra.mxu0 0.0
      %899 = vmatprep.subr.mxu0 0.0
      %900 = vmatpush1.msra.mxu0 0.0
      %901 = vmatprep.subr.mxu0 0.0
      %902 = vmatpush1.msra.mxu0 0.0
      %903 = vmatprep.subr.mxu0 0.0
      %904 = vmatpush1.msra.mxu0 0.0
      %905 = vmatprep.subr.mxu0 0.0
      %906 = vmatpush1.msra.mxu0 0.0
      %907 = vmatprep.subr.mxu0 0.0
      %908 = vmatpush1.msra.mxu0 0.0
      %909 = vmatprep.subr.mxu0 0.0
      %910 = vmatpush1.msra.mxu0 0.0
      %911 = vmatprep.subr.mxu0 0.0
      %912 = vmatpush1.msra.mxu0 0.0
      %913 = vmatprep.subr.mxu0 0.0
      %914 = vmatpush1.msra.mxu0 0.0
      %915 = vmatprep.subr.mxu0 0.0
      %916 = vmatpush1.msra.mxu0 0.0
      %917 = vmatprep.subr.mxu0 0.0
      %918 = vmatpush1.msra.mxu0 0.0
      %919 = vmatprep.subr.mxu0 0.0
      %920 = vmatpush1.msra.mxu0 0.0
      %921 = vmatprep.subr.mxu0 0.0
      %922 = vmatpush1.msra.mxu0 0.0
      %923 = vmatprep.subr.mxu0 0.0
      %924 = vmatpush1.msra.mxu0 0.0
      %925 = vmatprep.subr.mxu0 0.0
      %926 = vmatpush1.msra.mxu0 0.0
      %927 = vmatprep.subr.mxu0 0.0
      %928 = vmatpush1.msra.mxu0 0.0
      %929 = vmatprep.subr.mxu0 0.0
      %930 = vmatpush1.msra.mxu0 0.0
      %931 = vmatprep.subr.mxu0 0.0
      %932 = vmatpush1.msra.mxu0 0.0
      %933 = vmatprep.subr.mxu0 0.0
      %934 = vmatpush1.msra.mxu0 0.0
      %935 = vmatprep.subr.mxu0 0.0
      %936 = vmatpush1.msra.mxu0 0.0
      %937 = vmatprep.subr.mxu0 0.0
      %938 = vmatpush1.msra.mxu0 0.0
      %939 = vmatprep.mubr.f32.mxu0 0.0
      %940 = vmatmul.mubr.f32.gmra.mrb[0].mxu0 %v721
      %v941 = vpop.f32.mrb[0].mxu0
      %v942 = vadd.f32 0.0, %v941
      %v943 = vpop.f32.mrb[0].mxu0
      %944 = vdwg.mxu0
      %v945 = vadd.f32 %v558, %v800
      %v946 = vadd.f32 %v560, %v802
      %v947 = vadd.f32 %v629, %v871
      %v948 = vadd.f32 %v631, %v873
      %v949 = vadd.f32 %v700, %v942
      %s950 = scalar_lea.vmem %s1, 24
      %v951 = vld [vmem:[%s950] sm:$0xff]
      %952 = vrot.lane.b32.xlu0 %v225, 96
      %v953 = vpop.permute.xlu0 %952
      %954 = vrot.lane.b32.xlu0 %v234, 96
      %v955 = vpop.permute.xlu0 %954
      %956 = vrot.lane.b32.xlu0 %v226, 96
      %v957 = vpop.permute.xlu0 %956
      %958 = vrot.lane.b32.xlu0 %v235, 96
      %v959 = vpop.permute.xlu0 %958
      %960 = vrot.lane.b32.xlu0 %v227, 96
      %v961 = vpop.permute.xlu0 %960
      %vm962 = vcmask 785408
      %v963 = vsel %vm962, %v953, %v955
      %v964 = vsel %vm962, %v955, %v957
      %v965 = vsel %vm962, %v957, %v959
      %v966 = vsel %vm962, %v959, %v961
      %v968 = vsel %vm251, %v951, 0
      %v970 = vsel %vm255, %v963, 0
      %v972 = vsel %vm255, %v964, 0
      %v974 = vsel %vm255, %v965, 0
      %v976 = vsel %vm255, %v966, 0
      %v978 = vsel %vm255, %v961, 0
      %980 = vmatprep.subr.mxu0 %v972
      %981 = vmatpush1.msra.mxu0 %v970
      %982 = vmatprep.subr.mxu0 0.0
      %983 = vmatpush1.msra.mxu0 0.0
      %984 = vmatprep.subr.mxu0 0.0
      %985 = vmatpush1.msra.mxu0 0.0
      %986 = vmatprep.subr.mxu0 0.0
      %987 = vmatpush1.msra.mxu0 0.0
      %988 = vmatprep.subr.mxu0 0.0
      %989 = vmatpush1.msra.mxu0 0.0
      %990 = vmatprep.subr.mxu0 0.0
      %991 = vmatpush1.msra.mxu0 0.0
      %992 = vmatprep.subr.mxu0 0.0
      %993 = vmatpush1.msra.mxu0 0.0
      %994 = vmatprep.subr.mxu0 0.0
      %995 = vmatpush1.msra.mxu0 0.0
      %996 = vmatprep.subr.mxu0 0.0
      %997 = vmatpush1.msra.mxu0 0.0
      %998 = vmatprep.subr.mxu0 0.0
      %999 = vmatpush1.msra.mxu0 0.0
      %1000 = vmatprep.subr.mxu0 0.0
      %1001 = vmatpush1.msra.mxu0 0.0
      %1002 = vmatprep.subr.mxu0 0.0
      %1003 = vmatpush1.msra.mxu0 0.0
      %1004 = vmatprep.subr.mxu0 0.0
      %1005 = vmatpush1.msra.mxu0 0.0
      %1006 = vmatprep.subr.mxu0 0.0
      %1007 = vmatpush1.msra.mxu0 0.0
      %1008 = vmatprep.subr.mxu0 0.0
      %1009 = vmatpush1.msra.mxu0 0.0
      %1010 = vmatprep.subr.mxu0 0.0
      %1011 = vmatpush1.msra.mxu0 0.0
      %1012 = vmatprep.subr.mxu0 0.0
      %1013 = vmatpush1.msra.mxu0 0.0
      %1014 = vmatprep.subr.mxu0 0.0
      %1015 = vmatpush1.msra.mxu0 0.0
      %1016 = vmatprep.subr.mxu0 0.0
      %1017 = vmatpush1.msra.mxu0 0.0
      %1018 = vmatprep.subr.mxu0 0.0
      %1019 = vmatpush1.msra.mxu0 0.0
      %1020 = vmatprep.subr.mxu0 0.0
      %1021 = vmatpush1.msra.mxu0 0.0
      %1022 = vmatprep.subr.mxu0 0.0
      %1023 = vmatpush1.msra.mxu0 0.0
      %1024 = vmatprep.subr.mxu0 0.0
      %1025 = vmatpush1.msra.mxu0 0.0
      %1026 = vmatprep.subr.mxu0 0.0
      %1027 = vmatpush1.msra.mxu0 0.0
      %1028 = vmatprep.subr.mxu0 0.0
      %1029 = vmatpush1.msra.mxu0 0.0
      %1030 = vmatprep.subr.mxu0 0.0
      %1031 = vmatpush1.msra.mxu0 0.0
      %1032 = vmatprep.subr.mxu0 0.0
      %1033 = vmatpush1.msra.mxu0 0.0
      %1034 = vmatprep.subr.mxu0 0.0
      %1035 = vmatpush1.msra.mxu0 0.0
      %1036 = vmatprep.subr.mxu0 0.0
      %1037 = vmatpush1.msra.mxu0 0.0
      %1038 = vmatprep.subr.mxu0 0.0
      %1039 = vmatpush1.msra.mxu0 0.0
      %1040 = vmatprep.subr.mxu0 0.0
      %1041 = vmatpush1.msra.mxu0 0.0
      %1042 = vmatprep.subr.mxu0 0.0
      %1043 = vmatpush1.msra.mxu0 0.0
      %1044 = vmatprep.mubr.f32.mxu0 0.0
      %1045 = vmatmul.mubr.f32.gmra.mrb[0].mxu0 %v968
      %v1046 = vpop.f32.mrb[0].mxu0
      %v1047 = vadd.f32 0.0, %v1046
      %v1048 = vpop.f32.mrb[0].mxu0
      %v1049 = vadd.f32 0.0, %v1048
      %1050 = vdwg.mxu0
      %1051 = vmatprep.subr.mxu0 %v976
      %1052 = vmatpush1.msra.mxu0 %v974
      %1053 = vmatprep.subr.mxu0 0.0
      %1054 = vmatpush1.msra.mxu0 0.0
      %1055 = vmatprep.subr.mxu0 0.0
      %1056 = vmatpush1.msra.mxu0 0.0
      %1057 = vmatprep.subr.mxu0 0.0
      %1058 = vmatpush1.msra.mxu0 0.0
      %1059 = vmatprep.subr.mxu0 0.0
      %1060 = vmatpush1.msra.mxu0 0.0
      %1061 = vmatprep.subr.mxu0 0.0
      %1062 = vmatpush1.msra.mxu0 0.0
      %1063 = vmatprep.subr.mxu0 0.0
      %1064 = vmatpush1.msra.mxu0 0.0
      %1065 = vmatprep.subr.mxu0 0.0
      %1066 = vmatpush1.msra.mxu0 0.0
      %1067 = vmatprep.subr.mxu0 0.0
      %1068 = vmatpush1.msra.mxu0 0.0
      %1069 = vmatprep.subr.mxu0 0.0
      %1070 = vmatpush1.msra.mxu0 0.0
      %1071 = vmatprep.subr.mxu0 0.0
      %1072 = vmatpush1.msra.mxu0 0.0
      %1073 = vmatprep.subr.mxu0 0.0
      %1074 = vmatpush1.msra.mxu0 0.0
      %1075 = vmatprep.subr.mxu0 0.0
      %1076 = vmatpush1.msra.mxu0 0.0
      %1077 = vmatprep.subr.mxu0 0.0
      %1078 = vmatpush1.msra.mxu0 0.0
      %1079 = vmatprep.subr.mxu0 0.0
      %1080 = vmatpush1.msra.mxu0 0.0
      %1081 = vmatprep.subr.mxu0 0.0
      %1082 = vmatpush1.msra.mxu0 0.0
      %1083 = vmatprep.subr.mxu0 0.0
      %1084 = vmatpush1.msra.mxu0 0.0
      %1085 = vmatprep.subr.mxu0 0.0
      %1086 = vmatpush1.msra.mxu0 0.0
      %1087 = vmatprep.subr.mxu0 0.0
      %1088 = vmatpush1.msra.mxu0 0.0
      %1089 = vmatprep.subr.mxu0 0.0
      %1090 = vmatpush1.msra.mxu0 0.0
      %1091 = vmatprep.subr.mxu0 0.0
      %1092 = vmatpush1.msra.mxu0 0.0
      %1093 = vmatprep.subr.mxu0 0.0
      %1094 = vmatpush1.msra.mxu0 0.0
      %1095 = vmatprep.subr.mxu0 0.0
      %1096 = vmatpush1.msra.mxu0 0.0
      %1097 = vmatprep.subr.mxu0 0.0
      %1098 = vmatpush1.msra.mxu0 0.0
      %1099 = vmatprep.subr.mxu0 0.0
      %1100 = vmatpush1.msra.mxu0 0.0
      %1101 = vmatprep.subr.mxu0 0.0
      %1102 = vmatpush1.msra.mxu0 0.0
      %1103 = vmatprep.subr.mxu0 0.0
      %1104 = vmatpush1.msra.mxu0 0.0
      %1105 = vmatprep.subr.mxu0 0.0
      %1106 = vmatpush1.msra.mxu0 0.0
      %1107 = vmatprep.subr.mxu0 0.0
      %1108 = vmatpush1.msra.mxu0 0.0
      %1109 = vmatprep.subr.mxu0 0.0
      %1110 = vmatpush1.msra.mxu0 0.0
      %1111 = vmatprep.subr.mxu0 0.0
      %1112 = vmatpush1.msra.mxu0 0.0
      %1113 = vmatprep.subr.mxu0 0.0
      %1114 = vmatpush1.msra.mxu0 0.0
      %1115 = vmatprep.mubr.f32.mxu0 0.0
      %1116 = vmatmul.mubr.f32.gmra.mrb[0].mxu0 %v968
      %v1117 = vpop.f32.mrb[0].mxu0
      %v1118 = vadd.f32 0.0, %v1117
      %v1119 = vpop.f32.mrb[0].mxu0
      %v1120 = vadd.f32 0.0, %v1119
      %1121 = vdwg.mxu0
      %1122 = vmatprep.subr.mxu0 0.0
      %1123 = vmatpush1.msra.mxu0 %v978
      %1124 = vmatprep.subr.mxu0 0.0
      %1125 = vmatpush1.msra.mxu0 0.0
      %1126 = vmatprep.subr.mxu0 0.0
      %1127 = vmatpush1.msra.mxu0 0.0
      %1128 = vmatprep.subr.mxu0 0.0
      %1129 = vmatpush1.msra.mxu0 0.0
      %1130 = vmatprep.subr.mxu0 0.0
      %1131 = vmatpush1.msra.mxu0 0.0
      %1132 = vmatprep.subr.mxu0 0.0
      %1133 = vmatpush1.msra.mxu0 0.0
      %1134 = vmatprep.subr.mxu0 0.0
      %1135 = vmatpush1.msra.mxu0 0.0
      %1136 = vmatprep.subr.mxu0 0.0
      %1137 = vmatpush1.msra.mxu0 0.0
      %1138 = vmatprep.subr.mxu0 0.0
      %1139 = vmatpush1.msra.mxu0 0.0
      %1140 = vmatprep.subr.mxu0 0.0
      %1141 = vmatpush1.msra.mxu0 0.0
      %1142 = vmatprep.subr.mxu0 0.0
      %1143 = vmatpush1.msra.mxu0 0.0
      %1144 = vmatprep.subr.mxu0 0.0
      %1145 = vmatpush1.msra.mxu0 0.0
      %1146 = vmatprep.subr.mxu0 0.0
      %1147 = vmatpush1.msra.mxu0 0.0
      %1148 = vmatprep.subr.mxu0 0.0
      %1149 = vmatpush1.msra.mxu0 0.0
      %1150 = vmatprep.subr.mxu0 0.0
      %1151 = vmatpush1.msra.mxu0 0.0
      %1152 = vmatprep.subr.mxu0 0.0
      %1153 = vmatpush1.msra.mxu0 0.0
      %1154 = vmatprep.subr.mxu0 0.0
      %1155 = vmatpush1.msra.mxu0 0.0
      %1156 = vmatprep.subr.mxu0 0.0
      %1157 = vmatpush1.msra.mxu0 0.0
      %1158 = vmatprep.subr.mxu0 0.0
      %1159 = vmatpush1.msra.mxu0 0.0
      %1160 = vmatprep.subr.mxu0 0.0
      %1161 = vmatpush1.msra.mxu0 0.0
      %1162 = vmatprep.subr.mxu0 0.0
      %1163 = vmatpush1.msra.mxu0 0.0
      %1164 = vmatprep.subr.mxu0 0.0
      %1165 = vmatpush1.msra.mxu0 0.0
      %1166 = vmatprep.subr.mxu0 0.0
      %1167 = vmatpush1.msra.mxu0 0.0
      %1168 = vmatprep.subr.mxu0 0.0
      %1169 = vmatpush1.msra.mxu0 0.0
      %1170 = vmatprep.subr.mxu0 0.0
      %1171 = vmatpush1.msra.mxu0 0.0
      %1172 = vmatprep.subr.mxu0 0.0
      %1173 = vmatpush1.msra.mxu0 0.0
      %1174 = vmatprep.subr.mxu0 0.0
      %1175 = vmatpush1.msra.mxu0 0.0
      %1176 = vmatprep.subr.mxu0 0.0
      %1177 = vmatpush1.msra.mxu0 0.0
      %1178 = vmatprep.subr.mxu0 0.0
      %1179 = vmatpush1.msra.mxu0 0.0
      %1180 = vmatprep.subr.mxu0 0.0
      %1181 = vmatpush1.msra.mxu0 0.0
      %1182 = vmatprep.subr.mxu0 0.0
      %1183 = vmatpush1.msra.mxu0 0.0
      %1184 = vmatprep.subr.mxu0 0.0
      %1185 = vmatpush1.msra.mxu0 0.0
      %1186 = vmatprep.mubr.f32.mxu0 0.0
      %1187 = vmatmul.mubr.f32.gmra.mrb[0].mxu0 %v968
      %v1188 = vpop.f32.mrb[0].mxu0
      %v1189 = vadd.f32 0.0, %v1188
      %v1190 = vpop.f32.mrb[0].mxu0
      %1191 = vdwg.mxu0
      %v1192 = vadd.f32 %v945, %v1047
      %v1193 = vadd.f32 %v946, %v1049
      %v1194 = vadd.f32 %v947, %v1118
      %v1195 = vadd.f32 %v948, %v1120
      %v1196 = vadd.f32 %v949, %v1189
      %s1197 = scalar_lea.vmem %s1, 32
      %v1198 = vld [vmem:[%s1197] sm:$0xff]
      %v1199 = vcombine.high %v227, %v227
      %1200 = vrot.lane.b32.xlu0 %v225, 95
      %v1201 = vpop.permute.xlu0 %1200
      %1202 = vrot.lane.b32.xlu0 %v234, 95
      %v1203 = vpop.permute.xlu0 %1202
      %1204 = vrot.lane.b32.xlu0 %v226, 95
      %v1205 = vpop.permute.xlu0 %1204
      %1206 = vrot.lane.b32.xlu0 %v235, 95
      %v1207 = vpop.permute.xlu0 %1206
      %1208 = vrot.lane.b32.xlu0 %v227, 95
      %v1209 = vpop.permute.xlu0 %1208
      %1210 = vrot.lane.b32.xlu0 %v1199, 95
      %v1211 = vpop.permute.xlu0 %1210
      %vm1212 = vcmask 777216
      %v1213 = vsel %vm1212, %v1201, %v1203
      %v1214 = vsel %vm1212, %v1203, %v1205
      %v1215 = vsel %vm1212, %v1205, %v1207
      %v1216 = vsel %vm1212, %v1207, %v1209
      %v1217 = vsel %vm1212, %v1209, %v1211
      %v1219 = vsel %vm251, %v1198, 0
      %v1221 = vsel %vm255, %v1213, 0
      %v1223 = vsel %vm255, %v1214, 0
      %v1225 = vsel %vm255, %v1215, 0
      %v1227 = vsel %vm255, %v1216, 0
      %v1229 = vsel %vm255, %v1217, 0
      %1231 = vmatprep.subr.mxu0 %v1223
      %1232 = vmatpush1.msra.mxu0 %v1221
      %1233 = vmatprep.subr.mxu0 0.0
      %1234 = vmatpush1.msra.mxu0 0.0
      %1235 = vmatprep.subr.mxu0 0.0
      %1236 = vmatpush1.msra.mxu0 0.0
      %1237 = vmatprep.subr.mxu0 0.0
      %1238 = vmatpush1.msra.mxu0 0.0
      %1239 = vmatprep.subr.mxu0 0.0
      %1240 = vmatpush1.msra.mxu0 0.0
      %1241 = vmatprep.subr.mxu0 0.0
      %1242 = vmatpush1.msra.mxu0 0.0
      %1243 = vmatprep.subr.mxu0 0.0
      %1244 = vmatpush1.msra.mxu0 0.0
      %1245 = vmatprep.subr.mxu0 0.0
      %1246 = vmatpush1.msra.mxu0 0.0
      %1247 = vmatprep.subr.mxu0 0.0
      %1248 = vmatpush1.msra.mxu0 0.0
      %1249 = vmatprep.subr.mxu0 0.0
      %1250 = vmatpush1.msra.mxu0 0.0
      %1251 = vmatprep.subr.mxu0 0.0
      %1252 = vmatpush1.msra.mxu0 0.0
      %1253 = vmatprep.subr.mxu0 0.0
      %1254 = vmatpush1.msra.mxu0 0.0
      %1255 = vmatprep.subr.mxu0 0.0
      %1256 = vmatpush1.msra.mxu0 0.0
      %1257 = vmatprep.subr.mxu0 0.0
      %1258 = vmatpush1.msra.mxu0 0.0
      %1259 = vmatprep.subr.mxu0 0.0
      %1260 = vmatpush1.msra.mxu0 0.0
      %1261 = vmatprep.subr.mxu0 0.0
      %1262 = vmatpush1.msra.mxu0 0.0
      %1263 = vmatprep.subr.mxu0 0.0
      %1264 = vmatpush1.msra.mxu0 0.0
      %1265 = vmatprep.subr.mxu0 0.0
      %1266 = vmatpush1.msra.mxu0 0.0
      %1267 = vmatprep.subr.mxu0 0.0
      %1268 = vmatpush1.msra.mxu0 0.0
      %1269 = vmatprep.subr.mxu0 0.0
      %1270 = vmatpush1.msra.mxu0 0.0
      %1271 = vmatprep.subr.mxu0 0.0
      %1272 = vmatpush1.msra.mxu0 0.0
      %1273 = vmatprep.subr.mxu0 0.0
      %1274 = vmatpush1.msra.mxu0 0.0
      %1275 = vmatprep.subr.mxu0 0.0
      %1276 = vmatpush1.msra.mxu0 0.0
      %1277 = vmatprep.subr.mxu0 0.0
      %1278 = vmatpush1.msra.mxu0 0.0
      %1279 = vmatprep.subr.mxu0 0.0
      %1280 = vmatpush1.msra.mxu0 0.0
      %1281 = vmatprep.subr.mxu0 0.0
      %1282 = vmatpush1.msra.mxu0 0.0
      %1283 = vmatprep.subr.mxu0 0.0
      %1284 = vmatpush1.msra.mxu0 0.0
      %1285 = vmatprep.subr.mxu0 0.0
      %1286 = vmatpush1.msra.mxu0 0.0
      %1287 = vmatprep.subr.mxu0 0.0
      %1288 = vmatpush1.msra.mxu0 0.0
      %1289 = vmatprep.subr.mxu0 0.0
      %1290 = vmatpush1.msra.mxu0 0.0
      %1291 = vmatprep.subr.mxu0 0.0
      %1292 = vmatpush1.msra.mxu0 0.0
      %1293 = vmatprep.subr.mxu0 0.0
      %1294 = vmatpush1.msra.mxu0 0.0
      %1295 = vmatprep.mubr.f32.mxu0 0.0
      %1296 = vmatmul.mubr.f32.gmra.mrb[0].mxu0 %v1219
      %v1297 = vpop.f32.mrb[0].mxu0
      %v1298 = vadd.f32 0.0, %v1297
      %v1299 = vpop.f32.mrb[0].mxu0
      %v1300 = vadd.f32 0.0, %v1299
      %1301 = vdwg.mxu0
      %1302 = vmatprep.subr.mxu0 %v1227
      %1303 = vmatpush1.msra.mxu0 %v1225
      %1304 = vmatprep.subr.mxu0 0.0
      %1305 = vmatpush1.msra.mxu0 0.0
      %1306 = vmatprep.subr.mxu0 0.0
      %1307 = vmatpush1.msra.mxu0 0.0
      %1308 = vmatprep.subr.mxu0 0.0
      %1309 = vmatpush1.msra.mxu0 0.0
      %1310 = vmatprep.subr.mxu0 0.0
      %1311 = vmatpush1.msra.mxu0 0.0
      %1312 = vmatprep.subr.mxu0 0.0
      %1313 = vmatpush1.msra.mxu0 0.0
      %1314 = vmatprep.subr.mxu0 0.0
      %1315 = vmatpush1.msra.mxu0 0.0
      %1316 = vmatprep.subr.mxu0 0.0
      %1317 = vmatpush1.msra.mxu0 0.0
      %1318 = vmatprep.subr.mxu0 0.0
      %1319 = vmatpush1.msra.mxu0 0.0
      %1320 = vmatprep.subr.mxu0 0.0
      %1321 = vmatpush1.msra.mxu0 0.0
      %1322 = vmatprep.subr.mxu0 0.0
      %1323 = vmatpush1.msra.mxu0 0.0
      %1324 = vmatprep.subr.mxu0 0.0
      %1325 = vmatpush1.msra.mxu0 0.0
      %1326 = vmatprep.subr.mxu0 0.0
      %1327 = vmatpush1.msra.mxu0 0.0
      %1328 = vmatprep.subr.mxu0 0.0
      %1329 = vmatpush1.msra.mxu0 0.0
      %1330 = vmatprep.subr.mxu0 0.0
      %1331 = vmatpush1.msra.mxu0 0.0
      %1332 = vmatprep.subr.mxu0 0.0
      %1333 = vmatpush1.msra.mxu0 0.0
      %1334 = vmatprep.subr.mxu0 0.0
      %1335 = vmatpush1.msra.mxu0 0.0
      %1336 = vmatprep.subr.mxu0 0.0
      %1337 = vmatpush1.msra.mxu0 0.0
      %1338 = vmatprep.subr.mxu0 0.0
      %1339 = vmatpush1.msra.mxu0 0.0
      %1340 = vmatprep.subr.mxu0 0.0
      %1341 = vmatpush1.msra.mxu0 0.0
      %1342 = vmatprep.subr.mxu0 0.0
      %1343 = vmatpush1.msra.mxu0 0.0
      %1344 = vmatprep.subr.mxu0 0.0
      %1345 = vmatpush1.msra.mxu0 0.0
      %1346 = vmatprep.subr.mxu0 0.0
      %1347 = vmatpush1.msra.mxu0 0.0
      %1348 = vmatprep.subr.mxu0 0.0
      %1349 = vmatpush1.msra.mxu0 0.0
      %1350 = vmatprep.subr.mxu0 0.0
      %1351 = vmatpush1.msra.mxu0 0.0
      %1352 = vmatprep.subr.mxu0 0.0
      %1353 = vmatpush1.msra.mxu0 0.0
      %1354 = vmatprep.subr.mxu0 0.0
      %1355 = vmatpush1.msra.mxu0 0.0
      %1356 = vmatprep.subr.mxu0 0.0
      %1357 = vmatpush1.msra.mxu0 0.0
      %1358 = vmatprep.subr.mxu0 0.0
      %1359 = vmatpush1.msra.mxu0 0.0
      %1360 = vmatprep.subr.mxu0 0.0
      %1361 = vmatpush1.msra.mxu0 0.0
      %1362 = vmatprep.subr.mxu0 0.0
      %1363 = vmatpush1.msra.mxu0 0.0
      %1364 = vmatprep.subr.mxu0 0.0
      %1365 = vmatpush1.msra.mxu0 0.0
      %1366 = vmatprep.mubr.f32.mxu0 0.0
      %1367 = vmatmul.mubr.f32.gmra.mrb[0].mxu0 %v1219
      %v1368 = vpop.f32.mrb[0].mxu0
      %v1369 = vadd.f32 0.0, %v1368
      %v1370 = vpop.f32.mrb[0].mxu0
      %v1371 = vadd.f32 0.0, %v1370
      %1372 = vdwg.mxu0
      %1373 = vmatprep.subr.mxu0 0.0
      %1374 = vmatpush1.msra.mxu0 %v1229
      %1375 = vmatprep.subr.mxu0 0.0
      %1376 = vmatpush1.msra.mxu0 0.0
      %1377 = vmatprep.subr.mxu0 0.0
      %1378 = vmatpush1.msra.mxu0 0.0
      %1379 = vmatprep.subr.mxu0 0.0
      %1380 = vmatpush1.msra.mxu0 0.0
      %1381 = vmatprep.subr.mxu0 0.0
      %1382 = vmatpush1.msra.mxu0 0.0
      %1383 = vmatprep.subr.mxu0 0.0
      %1384 = vmatpush1.msra.mxu0 0.0
      %1385 = vmatprep.subr.mxu0 0.0
      %1386 = vmatpush1.msra.mxu0 0.0
      %1387 = vmatprep.subr.mxu0 0.0
      %1388 = vmatpush1.msra.mxu0 0.0
      %1389 = vmatprep.subr.mxu0 0.0
      %1390 = vmatpush1.msra.mxu0 0.0
      %1391 = vmatprep.subr.mxu0 0.0
      %1392 = vmatpush1.msra.mxu0 0.0
      %1393 = vmatprep.subr.mxu0 0.0
      %1394 = vmatpush1.msra.mxu0 0.0
      %1395 = vmatprep.subr.mxu0 0.0
      %1396 = vmatpush1.msra.mxu0 0.0
      %1397 = vmatprep.subr.mxu0 0.0
      %1398 = vmatpush1.msra.mxu0 0.0
      %1399 = vmatprep.subr.mxu0 0.0
      %1400 = vmatpush1.msra.mxu0 0.0
      %1401 = vmatprep.subr.mxu0 0.0
      %1402 = vmatpush1.msra.mxu0 0.0
      %1403 = vmatprep.subr.mxu0 0.0
      %1404 = vmatpush1.msra.mxu0 0.0
      %1405 = vmatprep.subr.mxu0 0.0
      %1406 = vmatpush1.msra.mxu0 0.0
      %1407 = vmatprep.subr.mxu0 0.0
      %1408 = vmatpush1.msra.mxu0 0.0
      %1409 = vmatprep.subr.mxu0 0.0
      %1410 = vmatpush1.msra.mxu0 0.0
      %1411 = vmatprep.subr.mxu0 0.0
      %1412 = vmatpush1.msra.mxu0 0.0
      %1413 = vmatprep.subr.mxu0 0.0
      %1414 = vmatpush1.msra.mxu0 0.0
      %1415 = vmatprep.subr.mxu0 0.0
      %1416 = vmatpush1.msra.mxu0 0.0
      %1417 = vmatprep.subr.mxu0 0.0
      %1418 = vmatpush1.msra.mxu0 0.0
      %1419 = vmatprep.subr.mxu0 0.0
      %1420 = vmatpush1.msra.mxu0 0.0
      %1421 = vmatprep.subr.mxu0 0.0
      %1422 = vmatpush1.msra.mxu0 0.0
      %1423 = vmatprep.subr.mxu0 0.0
      %1424 = vmatpush1.msra.mxu0 0.0
      %1425 = vmatprep.subr.mxu0 0.0
      %1426 = vmatpush1.msra.mxu0 0.0
      %1427 = vmatprep.subr.mxu0 0.0
      %1428 = vmatpush1.msra.mxu0 0.0
      %1429 = vmatprep.subr.mxu0 0.0
      %1430 = vmatpush1.msra.mxu0 0.0
      %1431 = vmatprep.subr.mxu0 0.0
      %1432 = vmatpush1.msra.mxu0 0.0
      %1433 = vmatprep.subr.mxu0 0.0
      %1434 = vmatpush1.msra.mxu0 0.0
      %1435 = vmatprep.subr.mxu0 0.0
      %1436 = vmatpush1.msra.mxu0 0.0
      %1437 = vmatprep.mubr.f32.mxu0 0.0
      %1438 = vmatmul.mubr.f32.gmra.mrb[0].mxu0 %v1219
      %v1439 = vpop.f32.mrb[0].mxu0
      %v1440 = vadd.f32 0.0, %v1439
      %v1441 = vpop.f32.mrb[0].mxu0
      %1442 = vdwg.mxu0
      %v1443 = vadd.f32 %v1192, %v1298
      %v1444 = vadd.f32 %v1193, %v1300
      %v1445 = vadd.f32 %v1194, %v1369
      %v1446 = vadd.f32 %v1195, %v1371
      %v1447 = vadd.f32 %v1196, %v1440
      %s1448 = scalar_lea.vmem %s1, 40
      %v1449 = vld [vmem:[%s1448] sm:$0xff]
      %1450 = vrot.lane.b32.xlu0 %v225, 94
      %v1451 = vpop.permute.xlu0 %1450
      %1452 = vrot.lane.b32.xlu0 %v234, 94
      %v1453 = vpop.permute.xlu0 %1452
      %1454 = vrot.lane.b32.xlu0 %v226, 94
      %v1455 = vpop.permute.xlu0 %1454
      %1456 = vrot.lane.b32.xlu0 %v235, 94
      %v1457 = vpop.permute.xlu0 %1456
      %1458 = vrot.lane.b32.xlu0 %v227, 94
      %v1459 = vpop.permute.xlu0 %1458
      %1460 = vrot.lane.b32.xlu0 %v1199, 94
      %v1461 = vpop.permute.xlu0 %1460
      %vm1462 = vcmask 769024
      %v1463 = vsel %vm1462, %v1451, %v1453
      %v1464 = vsel %vm1462, %v1453, %v1455
      %v1465 = vsel %vm1462, %v1455, %v1457
      %v1466 = vsel %vm1462, %v1457, %v1459
      %v1467 = vsel %vm1462, %v1459, %v1461
      %v1469 = vsel %vm251, %v1449, 0
      %v1471 = vsel %vm255, %v1463, 0
      %v1473 = vsel %vm255, %v1464, 0
      %v1475 = vsel %vm255, %v1465, 0
      %v1477 = vsel %vm255, %v1466, 0
      %v1479 = vsel %vm255, %v1467, 0
      %1481 = vmatprep.subr.mxu0 %v1473
      %1482 = vmatpush1.msra.mxu0 %v1471
      %1483 = vmatprep.subr.mxu0 0.0
      %1484 = vmatpush1.msra.mxu0 0.0
      %1485 = vmatprep.subr.mxu0 0.0
      %1486 = vmatpush1.msra.mxu0 0.0
      %1487 = vmatprep.subr.mxu0 0.0
      %1488 = vmatpush1.msra.mxu0 0.0
      %1489 = vmatprep.subr.mxu0 0.0
      %1490 = vmatpush1.msra.mxu0 0.0
      %1491 = vmatprep.subr.mxu0 0.0
      %1492 = vmatpush1.msra.mxu0 0.0
      %1493 = vmatprep.subr.mxu0 0.0
      %1494 = vmatpush1.msra.mxu0 0.0
      %1495 = vmatprep.subr.mxu0 0.0
      %1496 = vmatpush1.msra.mxu0 0.0
      %1497 = vmatprep.subr.mxu0 0.0
      %1498 = vmatpush1.msra.mxu0 0.0
      %1499 = vmatprep.subr.mxu0 0.0
      %1500 = vmatpush1.msra.mxu0 0.0
      %1501 = vmatprep.subr.mxu0 0.0
      %1502 = vmatpush1.msra.mxu0 0.0
      %1503 = vmatprep.subr.mxu0 0.0
      %1504 = vmatpush1.msra.mxu0 0.0
      %1505 = vmatprep.subr.mxu0 0.0
      %1506 = vmatpush1.msra.mxu0 0.0
      %1507 = vmatprep.subr.mxu0 0.0
      %1508 = vmatpush1.msra.mxu0 0.0
      %1509 = vmatprep.subr.mxu0 0.0
      %1510 = vmatpush1.msra.mxu0 0.0
      %1511 = vmatprep.subr.mxu0 0.0
      %1512 = vmatpush1.msra.mxu0 0.0
      %1513 = vmatprep.subr.mxu0 0.0
      %1514 = vmatpush1.msra.mxu0 0.0
      %1515 = vmatprep.subr.mxu0 0.0
      %1516 = vmatpush1.msra.mxu0 0.0
      %1517 = vmatprep.subr.mxu0 0.0
      %1518 = vmatpush1.msra.mxu0 0.0
      %1519 = vmatprep.subr.mxu0 0.0
      %1520 = vmatpush1.msra.mxu0 0.0
      %1521 = vmatprep.subr.mxu0 0.0
      %1522 = vmatpush1.msra.mxu0 0.0
      %1523 = vmatprep.subr.mxu0 0.0
      %1524 = vmatpush1.msra.mxu0 0.0
      %1525 = vmatprep.subr.mxu0 0.0
      %1526 = vmatpush1.msra.mxu0 0.0
      %1527 = vmatprep.subr.mxu0 0.0
      %1528 = vmatpush1.msra.mxu0 0.0
      %1529 = vmatprep.subr.mxu0 0.0
      %1530 = vmatpush1.msra.mxu0 0.0
      %1531 = vmatprep.subr.mxu0 0.0
      %1532 = vmatpush1.msra.mxu0 0.0
      %1533 = vmatprep.subr.mxu0 0.0
      %1534 = vmatpush1.msra.mxu0 0.0
      %1535 = vmatprep.subr.mxu0 0.0
      %1536 = vmatpush1.msra.mxu0 0.0
      %1537 = vmatprep.subr.mxu0 0.0
      %1538 = vmatpush1.msra.mxu0 0.0
      %1539 = vmatprep.subr.mxu0 0.0
      %1540 = vmatpush1.msra.mxu0 0.0
      %1541 = vmatprep.subr.mxu0 0.0
      %1542 = vmatpush1.msra.mxu0 0.0
      %1543 = vmatprep.subr.mxu0 0.0
      %1544 = vmatpush1.msra.mxu0 0.0
      %1545 = vmatprep.mubr.f32.mxu0 0.0
      %1546 = vmatmul.mubr.f32.gmra.mrb[0].mxu0 %v1469
      %v1547 = vpop.f32.mrb[0].mxu0
      %v1548 = vadd.f32 0.0, %v1547
      %v1549 = vpop.f32.mrb[0].mxu0
      %v1550 = vadd.f32 0.0, %v1549
      %1551 = vdwg.mxu0
      %1552 = vmatprep.subr.mxu0 %v1477
      %1553 = vmatpush1.msra.mxu0 %v1475
      %1554 = vmatprep.subr.mxu0 0.0
      %1555 = vmatpush1.msra.mxu0 0.0
      %1556 = vmatprep.subr.mxu0 0.0
      %1557 = vmatpush1.msra.mxu0 0.0
      %1558 = vmatprep.subr.mxu0 0.0
      %1559 = vmatpush1.msra.mxu0 0.0
      %1560 = vmatprep.subr.mxu0 0.0
      %1561 = vmatpush1.msra.mxu0 0.0
      %1562 = vmatprep.subr.mxu0 0.0
      %1563 = vmatpush1.msra.mxu0 0.0
      %1564 = vmatprep.subr.mxu0 0.0
      %1565 = vmatpush1.msra.mxu0 0.0
      %1566 = vmatprep.subr.mxu0 0.0
      %1567 = vmatpush1.msra.mxu0 0.0
      %1568 = vmatprep.subr.mxu0 0.0
      %1569 = vmatpush1.msra.mxu0 0.0
      %1570 = vmatprep.subr.mxu0 0.0
      %1571 = vmatpush1.msra.mxu0 0.0
      %1572 = vmatprep.subr.mxu0 0.0
      %1573 = vmatpush1.msra.mxu0 0.0
      %1574 = vmatprep.subr.mxu0 0.0
      %1575 = vmatpush1.msra.mxu0 0.0
      %1576 = vmatprep.subr.mxu0 0.0
      %1577 = vmatpush1.msra.mxu0 0.0
      %1578 = vmatprep.subr.mxu0 0.0
      %1579 = vmatpush1.msra.mxu0 0.0
      %1580 = vmatprep.subr.mxu0 0.0
      %1581 = vmatpush1.msra.mxu0 0.0
      %1582 = vmatprep.subr.mxu0 0.0
      %1583 = vmatpush1.msra.mxu0 0.0
      %1584 = vmatprep.subr.mxu0 0.0
      %1585 = vmatpush1.msra.mxu0 0.0
      %1586 = vmatprep.subr.mxu0 0.0
      %1587 = vmatpush1.msra.mxu0 0.0
      %1588 = vmatprep.subr.mxu0 0.0
      %1589 = vmatpush1.msra.mxu0 0.0
      %1590 = vmatprep.subr.mxu0 0.0
      %1591 = vmatpush1.msra.mxu0 0.0
      %1592 = vmatprep.subr.mxu0 0.0
      %1593 = vmatpush1.msra.mxu0 0.0
      %1594 = vmatprep.subr.mxu0 0.0
      %1595 = vmatpush1.msra.mxu0 0.0
      %1596 = vmatprep.subr.mxu0 0.0
      %1597 = vmatpush1.msra.mxu0 0.0
      %1598 = vmatprep.subr.mxu0 0.0
      %1599 = vmatpush1.msra.mxu0 0.0
      %1600 = vmatprep.subr.mxu0 0.0
      %1601 = vmatpush1.msra.mxu0 0.0
      %1602 = vmatprep.subr.mxu0 0.0
      %1603 = vmatpush1.msra.mxu0 0.0
      %1604 = vmatprep.subr.mxu0 0.0
      %1605 = vmatpush1.msra.mxu0 0.0
      %1606 = vmatprep.subr.mxu0 0.0
      %1607 = vmatpush1.msra.mxu0 0.0
      %1608 = vmatprep.subr.mxu0 0.0
      %1609 = vmatpush1.msra.mxu0 0.0
      %1610 = vmatprep.subr.mxu0 0.0
      %1611 = vmatpush1.msra.mxu0 0.0
      %1612 = vmatprep.subr.mxu0 0.0
      %1613 = vmatpush1.msra.mxu0 0.0
      %1614 = vmatprep.subr.mxu0 0.0
      %1615 = vmatpush1.msra.mxu0 0.0
      %1616 = vmatprep.mubr.f32.mxu0 0.0
      %1617 = vmatmul.mubr.f32.gmra.mrb[0].mxu0 %v1469
      %v1618 = vpop.f32.mrb[0].mxu0
      %v1619 = vadd.f32 0.0, %v1618
      %v1620 = vpop.f32.mrb[0].mxu0
      %v1621 = vadd.f32 0.0, %v1620
      %1622 = vdwg.mxu0
      %1623 = vmatprep.subr.mxu0 0.0
      %1624 = vmatpush1.msra.mxu0 %v1479
      %1625 = vmatprep.subr.mxu0 0.0
      %1626 = vmatpush1.msra.mxu0 0.0
      %1627 = vmatprep.subr.mxu0 0.0
      %1628 = vmatpush1.msra.mxu0 0.0
      %1629 = vmatprep.subr.mxu0 0.0
      %1630 = vmatpush1.msra.mxu0 0.0
      %1631 = vmatprep.subr.mxu0 0.0
      %1632 = vmatpush1.msra.mxu0 0.0
      %1633 = vmatprep.subr.mxu0 0.0
      %1634 = vmatpush1.msra.mxu0 0.0
      %1635 = vmatprep.subr.mxu0 0.0
      %1636 = vmatpush1.msra.mxu0 0.0
      %1637 = vmatprep.subr.mxu0 0.0
      %1638 = vmatpush1.msra.mxu0 0.0
      %1639 = vmatprep.subr.mxu0 0.0
      %1640 = vmatpush1.msra.mxu0 0.0
      %1641 = vmatprep.subr.mxu0 0.0
      %1642 = vmatpush1.msra.mxu0 0.0
      %1643 = vmatprep.subr.mxu0 0.0
      %1644 = vmatpush1.msra.mxu0 0.0
      %1645 = vmatprep.subr.mxu0 0.0
      %1646 = vmatpush1.msra.mxu0 0.0
      %1647 = vmatprep.subr.mxu0 0.0
      %1648 = vmatpush1.msra.mxu0 0.0
      %1649 = vmatprep.subr.mxu0 0.0
      %1650 = vmatpush1.msra.mxu0 0.0
      %1651 = vmatprep.subr.mxu0 0.0
      %1652 = vmatpush1.msra.mxu0 0.0
      %1653 = vmatprep.subr.mxu0 0.0
      %1654 = vmatpush1.msra.mxu0 0.0
      %1655 = vmatprep.subr.mxu0 0.0
      %1656 = vmatpush1.msra.mxu0 0.0
      %1657 = vmatprep.subr.mxu0 0.0
      %1658 = vmatpush1.msra.mxu0 0.0
      %1659 = vmatprep.subr.mxu0 0.0
      %1660 = vmatpush1.msra.mxu0 0.0
      %1661 = vmatprep.subr.mxu0 0.0
      %1662 = vmatpush1.msra.mxu0 0.0
      %1663 = vmatprep.subr.mxu0 0.0
      %1664 = vmatpush1.msra.mxu0 0.0
      %1665 = vmatprep.subr.mxu0 0.0
      %1666 = vmatpush1.msra.mxu0 0.0
      %1667 = vmatprep.subr.mxu0 0.0
      %1668 = vmatpush1.msra.mxu0 0.0
      %1669 = vmatprep.subr.mxu0 0.0
      %1670 = vmatpush1.msra.mxu0 0.0
      %1671 = vmatprep.subr.mxu0 0.0
      %1672 = vmatpush1.msra.mxu0 0.0
      %1673 = vmatprep.subr.mxu0 0.0
      %1674 = vmatpush1.msra.mxu0 0.0
      %1675 = vmatprep.subr.mxu0 0.0
      %1676 = vmatpush1.msra.mxu0 0.0
      %1677 = vmatprep.subr.mxu0 0.0
      %1678 = vmatpush1.msra.mxu0 0.0
      %1679 = vmatprep.subr.mxu0 0.0
      %1680 = vmatpush1.msra.mxu0 0.0
      %1681 = vmatprep.subr.mxu0 0.0
      %1682 = vmatpush1.msra.mxu0 0.0
      %1683 = vmatprep.subr.mxu0 0.0
      %1684 = vmatpush1.msra.mxu0 0.0
      %1685 = vmatprep.subr.mxu0 0.0
      %1686 = vmatpush1.msra.mxu0 0.0
      %1687 = vmatprep.mubr.f32.mxu0 0.0
      %1688 = vmatmul.mubr.f32.gmra.mrb[0].mxu0 %v1469
      %v1689 = vpop.f32.mrb[0].mxu0
      %v1690 = vadd.f32 0.0, %v1689
      %v1691 = vpop.f32.mrb[0].mxu0
      %1692 = vdwg.mxu0
      %v1693 = vadd.f32 %v1443, %v1548
      %v1694 = vadd.f32 %v1444, %v1550
      %v1695 = vadd.f32 %v1445, %v1619
      %v1696 = vadd.f32 %v1446, %v1621
      %v1697 = vadd.f32 %v1447, %v1690
      %s1698 = scalar_lea.vmem %s1, 48
      %v1699 = vld [vmem:[%s1698] sm:$0xff]
      %1700 = vrot.lane.b32.xlu0 %v225, 64
      %v1701 = vpop.permute.xlu0 %1700
      %1702 = vrot.lane.b32.xlu0 %v234, 64
      %v1703 = vpop.permute.xlu0 %1702
      %1704 = vrot.lane.b32.xlu0 %v226, 64
      %v1705 = vpop.permute.xlu0 %1704
      %1706 = vrot.lane.b32.xlu0 %v235, 64
      %v1707 = vpop.permute.xlu0 %1706
      %1708 = vrot.lane.b32.xlu0 %v227, 64
      %v1709 = vpop.permute.xlu0 %1708
      %1710 = vrot.lane.b32.xlu0 %v1199, 64
      %v1711 = vpop.permute.xlu0 %1710
      %vm1712 = vcmask 523264
      %v1713 = vsel %vm1712, %v1701, %v1703
      %v1714 = vsel %vm1712, %v1703, %v1705
      %v1715 = vsel %vm1712, %v1705, %v1707
      %v1716 = vsel %vm1712, %v1707, %v1709
      %v1717 = vsel %vm1712, %v1709, %v1711
      %v1719 = vsel %vm251, %v1699, 0
      %v1721 = vsel %vm255, %v1713, 0
      %v1723 = vsel %vm255, %v1714, 0
      %v1725 = vsel %vm255, %v1715, 0
      %v1727 = vsel %vm255, %v1716, 0
      %v1729 = vsel %vm255, %v1717, 0
      %1731 = vmatprep.subr.mxu0 %v1723
      %1732 = vmatpush1.msra.mxu0 %v1721
      %1733 = vmatprep.subr.mxu0 0.0
      %1734 = vmatpush1.msra.mxu0 0.0
      %1735 = vmatprep.subr.mxu0 0.0
      %1736 = vmatpush1.msra.mxu0 0.0
      %1737 = vmatprep.subr.mxu0 0.0
      %1738 = vmatpush1.msra.mxu0 0.0
      %1739 = vmatprep.subr.mxu0 0.0
      %1740 = vmatpush1.msra.mxu0 0.0
      %1741 = vmatprep.subr.mxu0 0.0
      %1742 = vmatpush1.msra.mxu0 0.0
      %1743 = vmatprep.subr.mxu0 0.0
      %1744 = vmatpush1.msra.mxu0 0.0
      %1745 = vmatprep.subr.mxu0 0.0
      %1746 = vmatpush1.msra.mxu0 0.0
      %1747 = vmatprep.subr.mxu0 0.0
      %1748 = vmatpush1.msra.mxu0 0.0
      %1749 = vmatprep.subr.mxu0 0.0
      %1750 = vmatpush1.msra.mxu0 0.0
      %1751 = vmatprep.subr.mxu0 0.0
      %1752 = vmatpush1.msra.mxu0 0.0
      %1753 = vmatprep.subr.mxu0 0.0
      %1754 = vmatpush1.msra.mxu0 0.0
      %1755 = vmatprep.subr.mxu0 0.0
      %1756 = vmatpush1.msra.mxu0 0.0
      %1757 = vmatprep.subr.mxu0 0.0
      %1758 = vmatpush1.msra.mxu0 0.0
      %1759 = vmatprep.subr.mxu0 0.0
      %1760 = vmatpush1.msra.mxu0 0.0
      %1761 = vmatprep.subr.mxu0 0.0
      %1762 = vmatpush1.msra.mxu0 0.0
      %1763 = vmatprep.subr.mxu0 0.0
      %1764 = vmatpush1.msra.mxu0 0.0
      %1765 = vmatprep.subr.mxu0 0.0
      %1766 = vmatpush1.msra.mxu0 0.0
      %1767 = vmatprep.subr.mxu0 0.0
      %1768 = vmatpush1.msra.mxu0 0.0
      %1769 = vmatprep.subr.mxu0 0.0
      %1770 = vmatpush1.msra.mxu0 0.0
      %1771 = vmatprep.subr.mxu0 0.0
      %1772 = vmatpush1.msra.mxu0 0.0
      %1773 = vmatprep.subr.mxu0 0.0
      %1774 = vmatpush1.msra.mxu0 0.0
      %1775 = vmatprep.subr.mxu0 0.0
      %1776 = vmatpush1.msra.mxu0 0.0
      %1777 = vmatprep.subr.mxu0 0.0
      %1778 = vmatpush1.msra.mxu0 0.0
      %1779 = vmatprep.subr.mxu0 0.0
      %1780 = vmatpush1.msra.mxu0 0.0
      %1781 = vmatprep.subr.mxu0 0.0
      %1782 = vmatpush1.msra.mxu0 0.0
      %1783 = vmatprep.subr.mxu0 0.0
      %1784 = vmatpush1.msra.mxu0 0.0
      %1785 = vmatprep.subr.mxu0 0.0
      %1786 = vmatpush1.msra.mxu0 0.0
      %1787 = vmatprep.subr.mxu0 0.0
      %1788 = vmatpush1.msra.mxu0 0.0
      %1789 = vmatprep.subr.mxu0 0.0
      %1790 = vmatpush1.msra.mxu0 0.0
      %1791 = vmatprep.subr.mxu0 0.0
      %1792 = vmatpush1.msra.mxu0 0.0
      %1793 = vmatprep.subr.mxu0 0.0
      %1794 = vmatpush1.msra.mxu0 0.0
      %1795 = vmatprep.mubr.f32.mxu0 0.0
      %1796 = vmatmul.mubr.f32.gmra.mrb[0].mxu0 %v1719
      %v1797 = vpop.f32.mrb[0].mxu0
      %v1798 = vadd.f32 0.0, %v1797
      %v1799 = vpop.f32.mrb[0].mxu0
      %v1800 = vadd.f32 0.0, %v1799
      %1801 = vdwg.mxu0
      %1802 = vmatprep.subr.mxu0 %v1727
      %1803 = vmatpush1.msra.mxu0 %v1725
      %1804 = vmatprep.subr.mxu0 0.0
      %1805 = vmatpush1.msra.mxu0 0.0
      %1806 = vmatprep.subr.mxu0 0.0
      %1807 = vmatpush1.msra.mxu0 0.0
      %1808 = vmatprep.subr.mxu0 0.0
      %1809 = vmatpush1.msra.mxu0 0.0
      %1810 = vmatprep.subr.mxu0 0.0
      %1811 = vmatpush1.msra.mxu0 0.0
      %1812 = vmatprep.subr.mxu0 0.0
      %1813 = vmatpush1.msra.mxu0 0.0
      %1814 = vmatprep.subr.mxu0 0.0
      %1815 = vmatpush1.msra.mxu0 0.0
      %1816 = vmatprep.subr.mxu0 0.0
      %1817 = vmatpush1.msra.mxu0 0.0
      %1818 = vmatprep.subr.mxu0 0.0
      %1819 = vmatpush1.msra.mxu0 0.0
      %1820 = vmatprep.subr.mxu0 0.0
      %1821 = vmatpush1.msra.mxu0 0.0
      %1822 = vmatprep.subr.mxu0 0.0
      %1823 = vmatpush1.msra.mxu0 0.0
      %1824 = vmatprep.subr.mxu0 0.0
      %1825 = vmatpush1.msra.mxu0 0.0
      %1826 = vmatprep.subr.mxu0 0.0
      %1827 = vmatpush1.msra.mxu0 0.0
      %1828 = vmatprep.subr.mxu0 0.0
      %1829 = vmatpush1.msra.mxu0 0.0
      %1830 = vmatprep.subr.mxu0 0.0
      %1831 = vmatpush1.msra.mxu0 0.0
      %1832 = vmatprep.subr.mxu0 0.0
      %1833 = vmatpush1.msra.mxu0 0.0
      %1834 = vmatprep.subr.mxu0 0.0
      %1835 = vmatpush1.msra.mxu0 0.0
      %1836 = vmatprep.subr.mxu0 0.0
      %1837 = vmatpush1.msra.mxu0 0.0
      %1838 = vmatprep.subr.mxu0 0.0
      %1839 = vmatpush1.msra.mxu0 0.0
      %1840 = vmatprep.subr.mxu0 0.0
      %1841 = vmatpush1.msra.mxu0 0.0
      %1842 = vmatprep.subr.mxu0 0.0
      %1843 = vmatpush1.msra.mxu0 0.0
      %1844 = vmatprep.subr.mxu0 0.0
      %1845 = vmatpush1.msra.mxu0 0.0
      %1846 = vmatprep.subr.mxu0 0.0
      %1847 = vmatpush1.msra.mxu0 0.0
      %1848 = vmatprep.subr.mxu0 0.0
      %1849 = vmatpush1.msra.mxu0 0.0
      %1850 = vmatprep.subr.mxu0 0.0
      %1851 = vmatpush1.msra.mxu0 0.0
      %1852 = vmatprep.subr.mxu0 0.0
      %1853 = vmatpush1.msra.mxu0 0.0
      %1854 = vmatprep.subr.mxu0 0.0
      %1855 = vmatpush1.msra.mxu0 0.0
      %1856 = vmatprep.subr.mxu0 0.0
      %1857 = vmatpush1.msra.mxu0 0.0
      %1858 = vmatprep.subr.mxu0 0.0
      %1859 = vmatpush1.msra.mxu0 0.0
      %1860 = vmatprep.subr.mxu0 0.0
      %1861 = vmatpush1.msra.mxu0 0.0
      %1862 = vmatprep.subr.mxu0 0.0
      %1863 = vmatpush1.msra.mxu0 0.0
      %1864 = vmatprep.subr.mxu0 0.0
      %1865 = vmatpush1.msra.mxu0 0.0
      %1866 = vmatprep.mubr.f32.mxu0 0.0
      %1867 = vmatmul.mubr.f32.gmra.mrb[0].mxu0 %v1719
      %v1868 = vpop.f32.mrb[0].mxu0
      %v1869 = vadd.f32 0.0, %v1868
      %v1870 = vpop.f32.mrb[0].mxu0
      %v1871 = vadd.f32 0.0, %v1870
      %1872 = vdwg.mxu0
      %1873 = vmatprep.subr.mxu0 0.0
      %1874 = vmatpush1.msra.mxu0 %v1729
      %1875 = vmatprep.subr.mxu0 0.0
      %1876 = vmatpush1.msra.mxu0 0.0
      %1877 = vmatprep.subr.mxu0 0.0
      %1878 = vmatpush1.msra.mxu0 0.0
      %1879 = vmatprep.subr.mxu0 0.0
      %1880 = vmatpush1.msra.mxu0 0.0
      %1881 = vmatprep.subr.mxu0 0.0
      %1882 = vmatpush1.msra.mxu0 0.0
      %1883 = vmatprep.subr.mxu0 0.0
      %1884 = vmatpush1.msra.mxu0 0.0
      %1885 = vmatprep.subr.mxu0 0.0
      %1886 = vmatpush1.msra.mxu0 0.0
      %1887 = vmatprep.subr.mxu0 0.0
      %1888 = vmatpush1.msra.mxu0 0.0
      %1889 = vmatprep.subr.mxu0 0.0
      %1890 = vmatpush1.msra.mxu0 0.0
      %1891 = vmatprep.subr.mxu0 0.0
      %1892 = vmatpush1.msra.mxu0 0.0
      %1893 = vmatprep.subr.mxu0 0.0
      %1894 = vmatpush1.msra.mxu0 0.0
      %1895 = vmatprep.subr.mxu0 0.0
      %1896 = vmatpush1.msra.mxu0 0.0
      %1897 = vmatprep.subr.mxu0 0.0
      %1898 = vmatpush1.msra.mxu0 0.0
      %1899 = vmatprep.subr.mxu0 0.0
      %1900 = vmatpush1.msra.mxu0 0.0
      %1901 = vmatprep.subr.mxu0 0.0
      %1902 = vmatpush1.msra.mxu0 0.0
      %1903 = vmatprep.subr.mxu0 0.0
      %1904 = vmatpush1.msra.mxu0 0.0
      %1905 = vmatprep.subr.mxu0 0.0
      %1906 = vmatpush1.msra.mxu0 0.0
      %1907 = vmatprep.subr.mxu0 0.0
      %1908 = vmatpush1.msra.mxu0 0.0
      %1909 = vmatprep.subr.mxu0 0.0
      %1910 = vmatpush1.msra.mxu0 0.0
      %1911 = vmatprep.subr.mxu0 0.0
      %1912 = vmatpush1.msra.mxu0 0.0
      %1913 = vmatprep.subr.mxu0 0.0
      %1914 = vmatpush1.msra.mxu0 0.0
      %1915 = vmatprep.subr.mxu0 0.0
      %1916 = vmatpush1.msra.mxu0 0.0
      %1917 = vmatprep.subr.mxu0 0.0
      %1918 = vmatpush1.msra.mxu0 0.0
      %1919 = vmatprep.subr.mxu0 0.0
      %1920 = vmatpush1.msra.mxu0 0.0
      %1921 = vmatprep.subr.mxu0 0.0
      %1922 = vmatpush1.msra.mxu0 0.0
      %1923 = vmatprep.subr.mxu0 0.0
      %1924 = vmatpush1.msra.mxu0 0.0
      %1925 = vmatprep.subr.mxu0 0.0
      %1926 = vmatpush1.msra.mxu0 0.0
      %1927 = vmatprep.subr.mxu0 0.0
      %1928 = vmatpush1.msra.mxu0 0.0
      %1929 = vmatprep.subr.mxu0 0.0
      %1930 = vmatpush1.msra.mxu0 0.0
      %1931 = vmatprep.subr.mxu0 0.0
      %1932 = vmatpush1.msra.mxu0 0.0
      %1933 = vmatprep.subr.mxu0 0.0
      %1934 = vmatpush1.msra.mxu0 0.0
      %1935 = vmatprep.subr.mxu0 0.0
      %1936 = vmatpush1.msra.mxu0 0.0
      %1937 = vmatprep.mubr.f32.mxu0 0.0
      %1938 = vmatmul.mubr.f32.gmra.mrb[0].mxu0 %v1719
      %v1939 = vpop.f32.mrb[0].mxu0
      %v1940 = vadd.f32 0.0, %v1939
      %v1941 = vpop.f32.mrb[0].mxu0
      %1942 = vdwg.mxu0
      %v1943 = vadd.f32 %v1693, %v1798
      %v1944 = vadd.f32 %v1694, %v1800
      %v1945 = vadd.f32 %v1695, %v1869
      %v1946 = vadd.f32 %v1696, %v1871
      %v1947 = vadd.f32 %v1697, %v1940
      %s1948 = scalar_lea.vmem %s1, 56
      %v1949 = vld [vmem:[%s1948] sm:$0xff]
      %1950 = vrot.lane.b32.xlu0 %v225, 63
      %v1951 = vpop.permute.xlu0 %1950
      %1952 = vrot.lane.b32.xlu0 %v234, 63
      %v1953 = vpop.permute.xlu0 %1952
      %1954 = vrot.lane.b32.xlu0 %v226, 63
      %v1955 = vpop.permute.xlu0 %1954
      %1956 = vrot.lane.b32.xlu0 %v235, 63
      %v1957 = vpop.permute.xlu0 %1956
      %1958 = vrot.lane.b32.xlu0 %v227, 63
      %v1959 = vpop.permute.xlu0 %1958
      %1960 = vrot.lane.b32.xlu0 %v1199, 63
      %v1961 = vpop.permute.xlu0 %1960
      %vm1962 = vcmask 515072
      %v1963 = vsel %vm1962, %v1951, %v1953
      %v1964 = vsel %vm1962, %v1953, %v1955
      %v1965 = vsel %vm1962, %v1955, %v1957
      %v1966 = vsel %vm1962, %v1957, %v1959
      %v1967 = vsel %vm1962, %v1959, %v1961
      %v1969 = vsel %vm251, %v1949, 0
      %v1971 = vsel %vm255, %v1963, 0
      %v1973 = vsel %vm255, %v1964, 0
      %v1975 = vsel %vm255, %v1965, 0
      %v1977 = vsel %vm255, %v1966, 0
      %v1979 = vsel %vm255, %v1967, 0
      %1981 = vmatprep.subr.mxu0 %v1973
      %1982 = vmatpush1.msra.mxu0 %v1971
      %1983 = vmatprep.subr.mxu0 0.0
      %1984 = vmatpush1.msra.mxu0 0.0
      %1985 = vmatprep.subr.mxu0 0.0
      %1986 = vmatpush1.msra.mxu0 0.0
      %1987 = vmatprep.subr.mxu0 0.0
      %1988 = vmatpush1.msra.mxu0 0.0
      %1989 = vmatprep.subr.mxu0 0.0
      %1990 = vmatpush1.msra.mxu0 0.0
      %1991 = vmatprep.subr.mxu0 0.0
      %1992 = vmatpush1.msra.mxu0 0.0
      %1993 = vmatprep.subr.mxu0 0.0
      %1994 = vmatpush1.msra.mxu0 0.0
      %1995 = vmatprep.subr.mxu0 0.0
      %1996 = vmatpush1.msra.mxu0 0.0
      %1997 = vmatprep.subr.mxu0 0.0
      %1998 = vmatpush1.msra.mxu0 0.0
      %1999 = vmatprep.subr.mxu0 0.0
      %2000 = vmatpush1.msra.mxu0 0.0
      %2001 = vmatprep.subr.mxu0 0.0
      %2002 = vmatpush1.msra.mxu0 0.0
      %2003 = vmatprep.subr.mxu0 0.0
      %2004 = vmatpush1.msra.mxu0 0.0
      %2005 = vmatprep.subr.mxu0 0.0
      %2006 = vmatpush1.msra.mxu0 0.0
      %2007 = vmatprep.subr.mxu0 0.0
      %2008 = vmatpush1.msra.mxu0 0.0
      %2009 = vmatprep.subr.mxu0 0.0
      %2010 = vmatpush1.msra.mxu0 0.0
      %2011 = vmatprep.subr.mxu0 0.0
      %2012 = vmatpush1.msra.mxu0 0.0
      %2013 = vmatprep.subr.mxu0 0.0
      %2014 = vmatpush1.msra.mxu0 0.0
      %2015 = vmatprep.subr.mxu0 0.0
      %2016 = vmatpush1.msra.mxu0 0.0
      %2017 = vmatprep.subr.mxu0 0.0
      %2018 = vmatpush1.msra.mxu0 0.0
      %2019 = vmatprep.subr.mxu0 0.0
      %2020 = vmatpush1.msra.mxu0 0.0
      %2021 = vmatprep.subr.mxu0 0.0
      %2022 = vmatpush1.msra.mxu0 0.0
      %2023 = vmatprep.subr.mxu0 0.0
      %2024 = vmatpush1.msra.mxu0 0.0
      %2025 = vmatprep.subr.mxu0 0.0
      %2026 = vmatpush1.msra.mxu0 0.0
      %2027 = vmatprep.subr.mxu0 0.0
      %2028 = vmatpush1.msra.mxu0 0.0
      %2029 = vmatprep.subr.mxu0 0.0
      %2030 = vmatpush1.msra.mxu0 0.0
      %2031 = vmatprep.subr.mxu0 0.0
      %2032 = vmatpush1.msra.mxu0 0.0
      %2033 = vmatprep.subr.mxu0 0.0
      %2034 = vmatpush1.msra.mxu0 0.0
      %2035 = vmatprep.subr.mxu0 0.0
      %2036 = vmatpush1.msra.mxu0 0.0
      %2037 = vmatprep.subr.mxu0 0.0
      %2038 = vmatpush1.msra.mxu0 0.0
      %2039 = vmatprep.subr.mxu0 0.0
      %2040 = vmatpush1.msra.mxu0 0.0
      %2041 = vmatprep.subr.mxu0 0.0
      %2042 = vmatpush1.msra.mxu0 0.0
      %2043 = vmatprep.subr.mxu0 0.0
      %2044 = vmatpush1.msra.mxu0 0.0
      %2045 = vmatprep.mubr.f32.mxu0 0.0
      %2046 = vmatmul.mubr.f32.gmra.mrb[0].mxu0 %v1969
      %v2047 = vpop.f32.mrb[0].mxu0
      %v2048 = vadd.f32 0.0, %v2047
      %v2049 = vpop.f32.mrb[0].mxu0
      %v2050 = vadd.f32 0.0, %v2049
      %2051 = vdwg.mxu0
      %2052 = vmatprep.subr.mxu0 %v1977
      %2053 = vmatpush1.msra.mxu0 %v1975
      %2054 = vmatprep.subr.mxu0 0.0
      %2055 = vmatpush1.msra.mxu0 0.0
      %2056 = vmatprep.subr.mxu0 0.0
      %2057 = vmatpush1.msra.mxu0 0.0
      %2058 = vmatprep.subr.mxu0 0.0
      %2059 = vmatpush1.msra.mxu0 0.0
      %2060 = vmatprep.subr.mxu0 0.0
      %2061 = vmatpush1.msra.mxu0 0.0
      %2062 = vmatprep.subr.mxu0 0.0
      %2063 = vmatpush1.msra.mxu0 0.0
      %2064 = vmatprep.subr.mxu0 0.0
      %2065 = vmatpush1.msra.mxu0 0.0
      %2066 = vmatprep.subr.mxu0 0.0
      %2067 = vmatpush1.msra.mxu0 0.0
      %2068 = vmatprep.subr.mxu0 0.0
      %2069 = vmatpush1.msra.mxu0 0.0
      %2070 = vmatprep.subr.mxu0 0.0
      %2071 = vmatpush1.msra.mxu0 0.0
      %2072 = vmatprep.subr.mxu0 0.0
      %2073 = vmatpush1.msra.mxu0 0.0
      %2074 = vmatprep.subr.mxu0 0.0
      %2075 = vmatpush1.msra.mxu0 0.0
      %2076 = vmatprep.subr.mxu0 0.0
      %2077 = vmatpush1.msra.mxu0 0.0
      %2078 = vmatprep.subr.mxu0 0.0
      %2079 = vmatpush1.msra.mxu0 0.0
      %2080 = vmatprep.subr.mxu0 0.0
      %2081 = vmatpush1.msra.mxu0 0.0
      %2082 = vmatprep.subr.mxu0 0.0
      %2083 = vmatpush1.msra.mxu0 0.0
      %2084 = vmatprep.subr.mxu0 0.0
      %2085 = vmatpush1.msra.mxu0 0.0
      %2086 = vmatprep.subr.mxu0 0.0
      %2087 = vmatpush1.msra.mxu0 0.0
      %2088 = vmatprep.subr.mxu0 0.0
      %2089 = vmatpush1.msra.mxu0 0.0
      %2090 = vmatprep.subr.mxu0 0.0
      %2091 = vmatpush1.msra.mxu0 0.0
      %2092 = vmatprep.subr.mxu0 0.0
      %2093 = vmatpush1.msra.mxu0 0.0
      %2094 = vmatprep.subr.mxu0 0.0
      %2095 = vmatpush1.msra.mxu0 0.0
      %2096 = vmatprep.subr.mxu0 0.0
      %2097 = vmatpush1.msra.mxu0 0.0
      %2098 = vmatprep.subr.mxu0 0.0
      %2099 = vmatpush1.msra.mxu0 0.0
      %2100 = vmatprep.subr.mxu0 0.0
      %2101 = vmatpush1.msra.mxu0 0.0
      %2102 = vmatprep.subr.mxu0 0.0
      %2103 = vmatpush1.msra.mxu0 0.0
      %2104 = vmatprep.subr.mxu0 0.0
      %2105 = vmatpush1.msra.mxu0 0.0
      %2106 = vmatprep.subr.mxu0 0.0
      %2107 = vmatpush1.msra.mxu0 0.0
      %2108 = vmatprep.subr.mxu0 0.0
      %2109 = vmatpush1.msra.mxu0 0.0
      %2110 = vmatprep.subr.mxu0 0.0
      %2111 = vmatpush1.msra.mxu0 0.0
      %2112 = vmatprep.subr.mxu0 0.0
      %2113 = vmatpush1.msra.mxu0 0.0
      %2114 = vmatprep.subr.mxu0 0.0
      %2115 = vmatpush1.msra.mxu0 0.0
      %2116 = vmatprep.mubr.f32.mxu0 0.0
      %2117 = vmatmul.mubr.f32.gmra.mrb[0].mxu0 %v1969
      %v2118 = vpop.f32.mrb[0].mxu0
      %v2119 = vadd.f32 0.0, %v2118
      %v2120 = vpop.f32.mrb[0].mxu0
      %v2121 = vadd.f32 0.0, %v2120
      %2122 = vdwg.mxu0
      %2123 = vmatprep.subr.mxu0 0.0
      %2124 = vmatpush1.msra.mxu0 %v1979
      %2125 = vmatprep.subr.mxu0 0.0
      %2126 = vmatpush1.msra.mxu0 0.0
      %2127 = vmatprep.subr.mxu0 0.0
      %2128 = vmatpush1.msra.mxu0 0.0
      %2129 = vmatprep.subr.mxu0 0.0
      %2130 = vmatpush1.msra.mxu0 0.0
      %2131 = vmatprep.subr.mxu0 0.0
      %2132 = vmatpush1.msra.mxu0 0.0
      %2133 = vmatprep.subr.mxu0 0.0
      %2134 = vmatpush1.msra.mxu0 0.0
      %2135 = vmatprep.subr.mxu0 0.0
      %2136 = vmatpush1.msra.mxu0 0.0
      %2137 = vmatprep.subr.mxu0 0.0
      %2138 = vmatpush1.msra.mxu0 0.0
      %2139 = vmatprep.subr.mxu0 0.0
      %2140 = vmatpush1.msra.mxu0 0.0
      %2141 = vmatprep.subr.mxu0 0.0
      %2142 = vmatpush1.msra.mxu0 0.0
      %2143 = vmatprep.subr.mxu0 0.0
      %2144 = vmatpush1.msra.mxu0 0.0
      %2145 = vmatprep.subr.mxu0 0.0
      %2146 = vmatpush1.msra.mxu0 0.0
      %2147 = vmatprep.subr.mxu0 0.0
      %2148 = vmatpush1.msra.mxu0 0.0
      %2149 = vmatprep.subr.mxu0 0.0
      %2150 = vmatpush1.msra.mxu0 0.0
      %2151 = vmatprep.subr.mxu0 0.0
      %2152 = vmatpush1.msra.mxu0 0.0
      %2153 = vmatprep.subr.mxu0 0.0
      %2154 = vmatpush1.msra.mxu0 0.0
      %2155 = vmatprep.subr.mxu0 0.0
      %2156 = vmatpush1.msra.mxu0 0.0
      %2157 = vmatprep.subr.mxu0 0.0
      %2158 = vmatpush1.msra.mxu0 0.0
      %2159 = vmatprep.subr.mxu0 0.0
      %2160 = vmatpush1.msra.mxu0 0.0
      %2161 = vmatprep.subr.mxu0 0.0
      %2162 = vmatpush1.msra.mxu0 0.0
      %2163 = vmatprep.subr.mxu0 0.0
      %2164 = vmatpush1.msra.mxu0 0.0
      %2165 = vmatprep.subr.mxu0 0.0
      %2166 = vmatpush1.msra.mxu0 0.0
      %2167 = vmatprep.subr.mxu0 0.0
      %2168 = vmatpush1.msra.mxu0 0.0
      %2169 = vmatprep.subr.mxu0 0.0
      %2170 = vmatpush1.msra.mxu0 0.0
      %2171 = vmatprep.subr.mxu0 0.0
      %2172 = vmatpush1.msra.mxu0 0.0
      %2173 = vmatprep.subr.mxu0 0.0
      %2174 = vmatpush1.msra.mxu0 0.0
      %2175 = vmatprep.subr.mxu0 0.0
      %2176 = vmatpush1.msra.mxu0 0.0
      %2177 = vmatprep.subr.mxu0 0.0
      %2178 = vmatpush1.msra.mxu0 0.0
      %2179 = vmatprep.subr.mxu0 0.0
      %2180 = vmatpush1.msra.mxu0 0.0
      %2181 = vmatprep.subr.mxu0 0.0
      %2182 = vmatpush1.msra.mxu0 0.0
      %2183 = vmatprep.subr.mxu0 0.0
      %2184 = vmatpush1.msra.mxu0 0.0
      %2185 = vmatprep.subr.mxu0 0.0
      %2186 = vmatpush1.msra.mxu0 0.0
      %2187 = vmatprep.mubr.f32.mxu0 0.0
      %2188 = vmatmul.mubr.f32.gmra.mrb[0].mxu0 %v1969
      %v2189 = vpop.f32.mrb[0].mxu0
      %v2190 = vadd.f32 0.0, %v2189
      %v2191 = vpop.f32.mrb[0].mxu0
      %2192 = vdwg.mxu0
      %v2193 = vadd.f32 %v1943, %v2048
      %v2194 = vadd.f32 %v1944, %v2050
      %v2195 = vadd.f32 %v1945, %v2119
      %v2196 = vadd.f32 %v1946, %v2121
      %v2197 = vadd.f32 %v1947, %v2190
      %s2198 = scalar_lea.vmem %s1, 64
      %v2199 = vld [vmem:[%s2198] sm:$0xff]
      %2200 = vrot.lane.b32.xlu0 %v225, 62
      %v2201 = vpop.permute.xlu0 %2200
      %2202 = vrot.lane.b32.xlu0 %v234, 62
      %v2203 = vpop.permute.xlu0 %2202
      %2204 = vrot.lane.b32.xlu0 %v226, 62
      %v2205 = vpop.permute.xlu0 %2204
      %2206 = vrot.lane.b32.xlu0 %v235, 62
      %v2207 = vpop.permute.xlu0 %2206
      %2208 = vrot.lane.b32.xlu0 %v227, 62
      %v2209 = vpop.permute.xlu0 %2208
      %2210 = vrot.lane.b32.xlu0 %v1199, 62
      %v2211 = vpop.permute.xlu0 %2210
      %vm2212 = vcmask 506880
      %v2213 = vsel %vm2212, %v2201, %v2203
      %v2214 = vsel %vm2212, %v2203, %v2205
      %v2215 = vsel %vm2212, %v2205, %v2207
      %v2216 = vsel %vm2212, %v2207, %v2209
      %v2217 = vsel %vm2212, %v2209, %v2211
      %v2219 = vsel %vm251, %v2199, 0
      %v2221 = vsel %vm255, %v2213, 0
      %v2223 = vsel %vm255, %v2214, 0
      %v2225 = vsel %vm255, %v2215, 0
      %v2227 = vsel %vm255, %v2216, 0
      %v2229 = vsel %vm255, %v2217, 0
      %2231 = vmatprep.subr.mxu0 %v2223
      %2232 = vmatpush1.msra.mxu0 %v2221
      %2233 = vmatprep.subr.mxu0 0.0
      %2234 = vmatpush1.msra.mxu0 0.0
      %2235 = vmatprep.subr.mxu0 0.0
      %2236 = vmatpush1.msra.mxu0 0.0
      %2237 = vmatprep.subr.mxu0 0.0
      %2238 = vmatpush1.msra.mxu0 0.0
      %2239 = vmatprep.subr.mxu0 0.0
      %2240 = vmatpush1.msra.mxu0 0.0
      %2241 = vmatprep.subr.mxu0 0.0
      %2242 = vmatpush1.msra.mxu0 0.0
      %2243 = vmatprep.subr.mxu0 0.0
      %2244 = vmatpush1.msra.mxu0 0.0
      %2245 = vmatprep.subr.mxu0 0.0
      %2246 = vmatpush1.msra.mxu0 0.0
      %2247 = vmatprep.subr.mxu0 0.0
      %2248 = vmatpush1.msra.mxu0 0.0
      %2249 = vmatprep.subr.mxu0 0.0
      %2250 = vmatpush1.msra.mxu0 0.0
      %2251 = vmatprep.subr.mxu0 0.0
      %2252 = vmatpush1.msra.mxu0 0.0
      %2253 = vmatprep.subr.mxu0 0.0
      %2254 = vmatpush1.msra.mxu0 0.0
      %2255 = vmatprep.subr.mxu0 0.0
      %2256 = vmatpush1.msra.mxu0 0.0
      %2257 = vmatprep.subr.mxu0 0.0
      %2258 = vmatpush1.msra.mxu0 0.0
      %2259 = vmatprep.subr.mxu0 0.0
      %2260 = vmatpush1.msra.mxu0 0.0
      %2261 = vmatprep.subr.mxu0 0.0
      %2262 = vmatpush1.msra.mxu0 0.0
      %2263 = vmatprep.subr.mxu0 0.0
      %2264 = vmatpush1.msra.mxu0 0.0
      %2265 = vmatprep.subr.mxu0 0.0
      %2266 = vmatpush1.msra.mxu0 0.0
      %2267 = vmatprep.subr.mxu0 0.0
      %2268 = vmatpush1.msra.mxu0 0.0
      %2269 = vmatprep.subr.mxu0 0.0
      %2270 = vmatpush1.msra.mxu0 0.0
      %2271 = vmatprep.subr.mxu0 0.0
      %2272 = vmatpush1.msra.mxu0 0.0
      %2273 = vmatprep.subr.mxu0 0.0
      %2274 = vmatpush1.msra.mxu0 0.0
      %2275 = vmatprep.subr.mxu0 0.0
      %2276 = vmatpush1.msra.mxu0 0.0
      %2277 = vmatprep.subr.mxu0 0.0
      %2278 = vmatpush1.msra.mxu0 0.0
      %2279 = vmatprep.subr.mxu0 0.0
      %2280 = vmatpush1.msra.mxu0 0.0
      %2281 = vmatprep.subr.mxu0 0.0
      %2282 = vmatpush1.msra.mxu0 0.0
      %2283 = vmatprep.subr.mxu0 0.0
      %2284 = vmatpush1.msra.mxu0 0.0
      %2285 = vmatprep.subr.mxu0 0.0
      %2286 = vmatpush1.msra.mxu0 0.0
      %2287 = vmatprep.subr.mxu0 0.0
      %2288 = vmatpush1.msra.mxu0 0.0
      %2289 = vmatprep.subr.mxu0 0.0
      %2290 = vmatpush1.msra.mxu0 0.0
      %2291 = vmatprep.subr.mxu0 0.0
      %2292 = vmatpush1.msra.mxu0 0.0
      %2293 = vmatprep.subr.mxu0 0.0
      %2294 = vmatpush1.msra.mxu0 0.0
      %2295 = vmatprep.mubr.f32.mxu0 0.0
      %2296 = vmatmul.mubr.f32.gmra.mrb[0].mxu0 %v2219
      %v2297 = vpop.f32.mrb[0].mxu0
      %v2298 = vadd.f32 0.0, %v2297
      %v2299 = vpop.f32.mrb[0].mxu0
      %v2300 = vadd.f32 0.0, %v2299
      %2301 = vdwg.mxu0
      %2302 = vmatprep.subr.mxu0 %v2227
      %2303 = vmatpush1.msra.mxu0 %v2225
      %2304 = vmatprep.subr.mxu0 0.0
      %2305 = vmatpush1.msra.mxu0 0.0
      %2306 = vmatprep.subr.mxu0 0.0
      %2307 = vmatpush1.msra.mxu0 0.0
      %2308 = vmatprep.subr.mxu0 0.0
      %2309 = vmatpush1.msra.mxu0 0.0
      %2310 = vmatprep.subr.mxu0 0.0
      %2311 = vmatpush1.msra.mxu0 0.0
      %2312 = vmatprep.subr.mxu0 0.0
      %2313 = vmatpush1.msra.mxu0 0.0
      %2314 = vmatprep.subr.mxu0 0.0
      %2315 = vmatpush1.msra.mxu0 0.0
      %2316 = vmatprep.subr.mxu0 0.0
      %2317 = vmatpush1.msra.mxu0 0.0
      %2318 = vmatprep.subr.mxu0 0.0
      %2319 = vmatpush1.msra.mxu0 0.0
      %2320 = vmatprep.subr.mxu0 0.0
      %2321 = vmatpush1.msra.mxu0 0.0
      %2322 = vmatprep.subr.mxu0 0.0
      %2323 = vmatpush1.msra.mxu0 0.0
      %2324 = vmatprep.subr.mxu0 0.0
      %2325 = vmatpush1.msra.mxu0 0.0
      %2326 = vmatprep.subr.mxu0 0.0
      %2327 = vmatpush1.msra.mxu0 0.0
      %2328 = vmatprep.subr.mxu0 0.0
      %2329 = vmatpush1.msra.mxu0 0.0
      %2330 = vmatprep.subr.mxu0 0.0
      %2331 = vmatpush1.msra.mxu0 0.0
      %2332 = vmatprep.subr.mxu0 0.0
      %2333 = vmatpush1.msra.mxu0 0.0
      %2334 = vmatprep.subr.mxu0 0.0
      %2335 = vmatpush1.msra.mxu0 0.0
      %2336 = vmatprep.subr.mxu0 0.0
      %2337 = vmatpush1.msra.mxu0 0.0
      %2338 = vmatprep.subr.mxu0 0.0
      %2339 = vmatpush1.msra.mxu0 0.0
      %2340 = vmatprep.subr.mxu0 0.0
      %2341 = vmatpush1.msra.mxu0 0.0
      %2342 = vmatprep.subr.mxu0 0.0
      %2343 = vmatpush1.msra.mxu0 0.0
      %2344 = vmatprep.subr.mxu0 0.0
      %2345 = vmatpush1.msra.mxu0 0.0
      %2346 = vmatprep.subr.mxu0 0.0
      %2347 = vmatpush1.msra.mxu0 0.0
      %2348 = vmatprep.subr.mxu0 0.0
      %2349 = vmatpush1.msra.mxu0 0.0
      %2350 = vmatprep.subr.mxu0 0.0
      %2351 = vmatpush1.msra.mxu0 0.0
      %2352 = vmatprep.subr.mxu0 0.0
      %2353 = vmatpush1.msra.mxu0 0.0
      %2354 = vmatprep.subr.mxu0 0.0
      %2355 = vmatpush1.msra.mxu0 0.0
      %2356 = vmatprep.subr.mxu0 0.0
      %2357 = vmatpush1.msra.mxu0 0.0
      %2358 = vmatprep.subr.mxu0 0.0
      %2359 = vmatpush1.msra.mxu0 0.0
      %2360 = vmatprep.subr.mxu0 0.0
      %2361 = vmatpush1.msra.mxu0 0.0
      %2362 = vmatprep.subr.mxu0 0.0
      %2363 = vmatpush1.msra.mxu0 0.0
      %2364 = vmatprep.subr.mxu0 0.0
      %2365 = vmatpush1.msra.mxu0 0.0
      %2366 = vmatprep.mubr.f32.mxu0 0.0
      %2367 = vmatmul.mubr.f32.gmra.mrb[0].mxu0 %v2219
      %v2368 = vpop.f32.mrb[0].mxu0
      %v2369 = vadd.f32 0.0, %v2368
      %v2370 = vpop.f32.mrb[0].mxu0
      %v2371 = vadd.f32 0.0, %v2370
      %2372 = vdwg.mxu0
      %2373 = vmatprep.subr.mxu0 0.0
      %2374 = vmatpush1.msra.mxu0 %v2229
      %2375 = vmatprep.subr.mxu0 0.0
      %2376 = vmatpush1.msra.mxu0 0.0
      %2377 = vmatprep.subr.mxu0 0.0
      %2378 = vmatpush1.msra.mxu0 0.0
      %2379 = vmatprep.subr.mxu0 0.0
      %2380 = vmatpush1.msra.mxu0 0.0
      %2381 = vmatprep.subr.mxu0 0.0
      %2382 = vmatpush1.msra.mxu0 0.0
      %2383 = vmatprep.subr.mxu0 0.0
      %2384 = vmatpush1.msra.mxu0 0.0
      %2385 = vmatprep.subr.mxu0 0.0
      %2386 = vmatpush1.msra.mxu0 0.0
      %2387 = vmatprep.subr.mxu0 0.0
      %2388 = vmatpush1.msra.mxu0 0.0
      %2389 = vmatprep.subr.mxu0 0.0
      %2390 = vmatpush1.msra.mxu0 0.0
      %2391 = vmatprep.subr.mxu0 0.0
      %2392 = vmatpush1.msra.mxu0 0.0
      %2393 = vmatprep.subr.mxu0 0.0
      %2394 = vmatpush1.msra.mxu0 0.0
      %2395 = vmatprep.subr.mxu0 0.0
      %2396 = vmatpush1.msra.mxu0 0.0
      %2397 = vmatprep.subr.mxu0 0.0
      %2398 = vmatpush1.msra.mxu0 0.0
      %2399 = vmatprep.subr.mxu0 0.0
      %2400 = vmatpush1.msra.mxu0 0.0
      %2401 = vmatprep.subr.mxu0 0.0
      %2402 = vmatpush1.msra.mxu0 0.0
      %2403 = vmatprep.subr.mxu0 0.0
      %2404 = vmatpush1.msra.mxu0 0.0
      %2405 = vmatprep.subr.mxu0 0.0
      %2406 = vmatpush1.msra.mxu0 0.0
      %2407 = vmatprep.subr.mxu0 0.0
      %2408 = vmatpush1.msra.mxu0 0.0
      %2409 = vmatprep.subr.mxu0 0.0
      %2410 = vmatpush1.msra.mxu0 0.0
      %2411 = vmatprep.subr.mxu0 0.0
      %2412 = vmatpush1.msra.mxu0 0.0
      %2413 = vmatprep.subr.mxu0 0.0
      %2414 = vmatpush1.msra.mxu0 0.0
      %2415 = vmatprep.subr.mxu0 0.0
      %2416 = vmatpush1.msra.mxu0 0.0
      %2417 = vmatprep.subr.mxu0 0.0
      %2418 = vmatpush1.msra.mxu0 0.0
      %2419 = vmatprep.subr.mxu0 0.0
      %2420 = vmatpush1.msra.mxu0 0.0
      %2421 = vmatprep.subr.mxu0 0.0
      %2422 = vmatpush1.msra.mxu0 0.0
      %2423 = vmatprep.subr.mxu0 0.0
      %2424 = vmatpush1.msra.mxu0 0.0
      %2425 = vmatprep.subr.mxu0 0.0
      %2426 = vmatpush1.msra.mxu0 0.0
      %2427 = vmatprep.subr.mxu0 0.0
      %2428 = vmatpush1.msra.mxu0 0.0
      %2429 = vmatprep.subr.mxu0 0.0
      %2430 = vmatpush1.msra.mxu0 0.0
      %2431 = vmatprep.subr.mxu0 0.0
      %2432 = vmatpush1.msra.mxu0 0.0
      %2433 = vmatprep.subr.mxu0 0.0
      %2434 = vmatpush1.msra.mxu0 0.0
      %2435 = vmatprep.subr.mxu0 0.0
      %2436 = vmatpush1.msra.mxu0 0.0
      %2437 = vmatprep.mubr.f32.mxu0 0.0
      %2438 = vmatmul.mubr.f32.gmra.mrb[0].mxu0 %v2219
      %v2439 = vpop.f32.mrb[0].mxu0
      %v2440 = vadd.f32 0.0, %v2439
      %v2441 = vpop.f32.mrb[0].mxu0
      %2442 = vdwg.mxu0
      %v2443 = vadd.f32 %v2193, %v2298
      %v2444 = vadd.f32 %v2194, %v2300
      %v2445 = vadd.f32 %v2195, %v2369
      %v2446 = vadd.f32 %v2196, %v2371
      %v2447 = vadd.f32 %v2197, %v2440
      %v2448 = vld [vmem:[%s2] sm:$0xff]
      %2450 = vset.pattern.permute.xlu0 0
      %2451 = vperm.xlu0 %2450, %v2448
      %v2452 = vpop.permute.xlu0 %2451
      %v2454 = vadd.f32 %v2443, %v2452
      %v2455 = vadd.f32 %v2444, %v2452
      %v2456 = vadd.f32 %v2445, %v2452
      %v2457 = vadd.f32 %v2446, %v2452
      %v2458 = vadd.f32 %v2447, %v2452
      %v2459 = vmax.f32 %v2454, 0.0
      %v2460 = vmax.f32 %v2455, 0.0
      %v2461 = vmax.f32 %v2456, 0.0
      %v2462 = vmax.f32 %v2457, 0.0
      %v2463 = vmax.f32 %v2458, 0.0
      %v2464 = vlaneseq
      %v2465 = vand.u32 %v2464, 127
      %v2466 = vadd.s32 %v2465, 128
      %v2467 = vadd.s32 %v2465, 256
      %v2468 = vadd.s32 %v2465, 384
      %v2469 = vadd.s32 %v2465, 512
      %v2470 = vand.u32 %v2465, 31
      %v2471 = vand.u32 %v2466, 31
      %v2472 = vand.u32 %v2467, 31
      %v2473 = vand.u32 %v2468, 31
      %v2474 = vand.u32 %v2469, 31
      %vm2475 = vcmp.ge.s32.totalorder %v2465, 32
      %vm2476 = vcmp.ge.s32.totalorder %v2466, 32
      %vm2477 = vcmp.ge.s32.totalorder %v2467, 32
      %vm2478 = vcmp.ge.s32.totalorder %v2468, 32
      %vm2479 = vcmp.ge.s32.totalorder %v2469, 32
      %vm2480 = vcmp.lt.s32.totalorder %v2465, 544
      %vm2481 = vcmp.lt.s32.totalorder %v2466, 544
      %vm2482 = vcmp.lt.s32.totalorder %v2467, 544
      %vm2483 = vcmp.lt.s32.totalorder %v2468, 544
      %vm2484 = vcmp.lt.s32.totalorder %v2469, 544
      %vm2485 = vmand %vm2475, %vm2480
      %vm2486 = vmand %vm2476, %vm2481
      %vm2487 = vmand %vm2477, %vm2482
      %vm2488 = vmand %vm2478, %vm2483
      %vm2489 = vmand %vm2479, %vm2484
      %vm2490 = vcmp.ge.s32.totalorder %v2470, 1
      %vm2491 = vcmp.ge.s32.totalorder %v2471, 1
      %vm2492 = vcmp.ge.s32.totalorder %v2472, 1
      %vm2493 = vcmp.ge.s32.totalorder %v2473, 1
      %vm2494 = vcmp.ge.s32.totalorder %v2474, 1
      %vm2495 = vmand %vm2485, %vm2490
      %vm2496 = vmand %vm2486, %vm2491
      %vm2497 = vmand %vm2487, %vm2492
      %vm2498 = vmand %vm2488, %vm2493
      %vm2499 = vmand %vm2489, %vm2494
      %vm2500 = vcmp.lt.s32.totalorder %v2470, 17
      %vm2501 = vcmp.lt.s32.totalorder %v2471, 17
      %vm2502 = vcmp.lt.s32.totalorder %v2472, 17
      %vm2503 = vcmp.lt.s32.totalorder %v2473, 17
      %vm2504 = vcmp.lt.s32.totalorder %v2474, 17
      %vm2505 = vmand %vm2495, %vm2500
      %vm2506 = vmand %vm2496, %vm2501
      %vm2507 = vmand %vm2497, %vm2502
      %vm2508 = vmand %vm2498, %vm2503
      %vm2509 = vmand %vm2499, %vm2504
      %v2510 = vsel %vm2505, 1, 0
      %v2511 = vsel %vm2506, 1, 0
      %v2512 = vsel %vm2507, 1, 0
      %v2513 = vsel %vm2508, 1, 0
      %v2514 = vsel %vm2509, 1, 0
      %vm2515 = vcmp.eq.s32.totalorder %v2510, 1
      %vm2516 = vcmp.eq.s32.totalorder %v2511, 1
      %vm2517 = vcmp.eq.s32.totalorder %v2512, 1
      %vm2518 = vcmp.eq.s32.totalorder %v2513, 1
      %vm2519 = vcmp.eq.s32.totalorder %v2514, 1
      %v2520 = vsel %vm2515, %v2459, 0.0
      %v2521 = vsel %vm2516, %v2460, 0.0
      %v2522 = vsel %vm2517, %v2461, 0.0
      %v2523 = vsel %vm2518, %v2462, 0.0
      %v2524 = vsel %vm2519, %v2463, 0.0
      %v2525 = vld [vmem:[%s3] sm:$0xff]
      %s2526 = scalar_lea.vmem %s3, 8
      %v2527 = vld [vmem:[%s2526] sm:$0xff]
      %2533 = vrot.lane.b32.xlu0 %v2520, 127
      %v2534 = vpop.permute.xlu0 %2533
      %2535 = vrot.lane.b32.xlu0 %v2521, 127
      %v2536 = vpop.permute.xlu0 %2535
      %2537 = vrot.lane.b32.xlu0 %v2522, 127
      %v2538 = vpop.permute.xlu0 %2537
      %2539 = vrot.lane.b32.xlu0 %v2523, 127
      %v2540 = vpop.permute.xlu0 %2539
      %2541 = vrot.lane.b32.xlu0 %v2524, 127
      %v2542 = vpop.permute.xlu0 %2541
      %v2543 = vsel %vm246, %v2534, %v2536
      %v2544 = vsel %vm246, %v2536, %v2538
      %v2545 = vsel %vm246, %v2538, %v2540
      %v2546 = vsel %vm246, %v2540, %v2542
      %vm2551 = vcmask 64512
      %v2553 = vsel %vm2551, %v2527, 0
      %2555 = vmatprep.subr.mxu0 %v2544
      %2556 = vmatpush1.msra.mxu0 %v2543
      %2557 = vmatprep.subr.mxu0 0.0
      %2558 = vmatpush1.msra.mxu0 0.0
      %2559 = vmatprep.subr.mxu0 0.0
      %2560 = vmatpush1.msra.mxu0 0.0
      %2561 = vmatprep.subr.mxu0 0.0
      %2562 = vmatpush1.msra.mxu0 0.0
      %2563 = vmatprep.subr.mxu0 0.0
      %2564 = vmatpush1.msra.mxu0 0.0
      %2565 = vmatprep.subr.mxu0 0.0
      %2566 = vmatpush1.msra.mxu0 0.0
      %2567 = vmatprep.subr.mxu0 0.0
      %2568 = vmatpush1.msra.mxu0 0.0
      %2569 = vmatprep.subr.mxu0 0.0
      %2570 = vmatpush1.msra.mxu0 0.0
      %2571 = vmatprep.subr.mxu0 0.0
      %2572 = vmatpush1.msra.mxu0 0.0
      %2573 = vmatprep.subr.mxu0 0.0
      %2574 = vmatpush1.msra.mxu0 0.0
      %2575 = vmatprep.subr.mxu0 0.0
      %2576 = vmatpush1.msra.mxu0 0.0
      %2577 = vmatprep.subr.mxu0 0.0
      %2578 = vmatpush1.msra.mxu0 0.0
      %2579 = vmatprep.subr.mxu0 0.0
      %2580 = vmatpush1.msra.mxu0 0.0
      %2581 = vmatprep.subr.mxu0 0.0
      %2582 = vmatpush1.msra.mxu0 0.0
      %2583 = vmatprep.subr.mxu0 0.0
      %2584 = vmatpush1.msra.mxu0 0.0
      %2585 = vmatprep.subr.mxu0 0.0
      %2586 = vmatpush1.msra.mxu0 0.0
      %2587 = vmatprep.subr.mxu0 0.0
      %2588 = vmatpush1.msra.mxu0 0.0
      %2589 = vmatprep.subr.mxu0 0.0
      %2590 = vmatpush1.msra.mxu0 0.0
      %2591 = vmatprep.subr.mxu0 0.0
      %2592 = vmatpush1.msra.mxu0 0.0
      %2593 = vmatprep.subr.mxu0 0.0
      %2594 = vmatpush1.msra.mxu0 0.0
      %2595 = vmatprep.subr.mxu0 0.0
      %2596 = vmatpush1.msra.mxu0 0.0
      %2597 = vmatprep.subr.mxu0 0.0
      %2598 = vmatpush1.msra.mxu0 0.0
      %2599 = vmatprep.subr.mxu0 0.0
      %2600 = vmatpush1.msra.mxu0 0.0
      %2601 = vmatprep.subr.mxu0 0.0
      %2602 = vmatpush1.msra.mxu0 0.0
      %2603 = vmatprep.subr.mxu0 0.0
      %2604 = vmatpush1.msra.mxu0 0.0
      %2605 = vmatprep.subr.mxu0 0.0
      %2606 = vmatpush1.msra.mxu0 0.0
      %2607 = vmatprep.subr.mxu0 0.0
      %2608 = vmatpush1.msra.mxu0 0.0
      %2609 = vmatprep.subr.mxu0 0.0
      %2610 = vmatpush1.msra.mxu0 0.0
      %2611 = vmatprep.subr.mxu0 0.0
      %2612 = vmatpush1.msra.mxu0 0.0
      %2613 = vmatprep.subr.mxu0 0.0
      %2614 = vmatpush1.msra.mxu0 0.0
      %2615 = vmatprep.subr.mxu0 0.0
      %2616 = vmatpush1.msra.mxu0 0.0
      %2617 = vmatprep.subr.mxu0 0.0
      %2618 = vmatpush1.msra.mxu0 0.0
      %2619 = vmatprep.mubr.f32.mxu0 0.0
      %2620 = vmatmul.mubr.f32.gmra.mrb[0].mxu0 %v2553
      %v2621 = vpop.f32.mrb[0].mxu0
      %v2622 = vadd.f32 0.0, %v2621
      %v2623 = vpop.f32.mrb[0].mxu0
      %v2624 = vadd.f32 0.0, %v2623
      %2625 = vdwg.mxu0
      %2626 = vmatprep.subr.mxu0 %v2546
      %2627 = vmatpush1.msra.mxu0 %v2545
      %2628 = vmatprep.subr.mxu0 0.0
      %2629 = vmatpush1.msra.mxu0 0.0
      %2630 = vmatprep.subr.mxu0 0.0
      %2631 = vmatpush1.msra.mxu0 0.0
      %2632 = vmatprep.subr.mxu0 0.0
      %2633 = vmatpush1.msra.mxu0 0.0
      %2634 = vmatprep.subr.mxu0 0.0
      %2635 = vmatpush1.msra.mxu0 0.0
      %2636 = vmatprep.subr.mxu0 0.0
      %2637 = vmatpush1.msra.mxu0 0.0
      %2638 = vmatprep.subr.mxu0 0.0
      %2639 = vmatpush1.msra.mxu0 0.0
      %2640 = vmatprep.subr.mxu0 0.0
      %2641 = vmatpush1.msra.mxu0 0.0
      %2642 = vmatprep.subr.mxu0 0.0
      %2643 = vmatpush1.msra.mxu0 0.0
      %2644 = vmatprep.subr.mxu0 0.0
      %2645 = vmatpush1.msra.mxu0 0.0
      %2646 = vmatprep.subr.mxu0 0.0
      %2647 = vmatpush1.msra.mxu0 0.0
      %2648 = vmatprep.subr.mxu0 0.0
      %2649 = vmatpush1.msra.mxu0 0.0
      %2650 = vmatprep.subr.mxu0 0.0
      %2651 = vmatpush1.msra.mxu0 0.0
      %2652 = vmatprep.subr.mxu0 0.0
      %2653 = vmatpush1.msra.mxu0 0.0
      %2654 = vmatprep.subr.mxu0 0.0
      %2655 = vmatpush1.msra.mxu0 0.0
      %2656 = vmatprep.subr.mxu0 0.0
      %2657 = vmatpush1.msra.mxu0 0.0
      %2658 = vmatprep.subr.mxu0 0.0
      %2659 = vmatpush1.msra.mxu0 0.0
      %2660 = vmatprep.subr.mxu0 0.0
      %2661 = vmatpush1.msra.mxu0 0.0
      %2662 = vmatprep.subr.mxu0 0.0
      %2663 = vmatpush1.msra.mxu0 0.0
      %2664 = vmatprep.subr.mxu0 0.0
      %2665 = vmatpush1.msra.mxu0 0.0
      %2666 = vmatprep.subr.mxu0 0.0
      %2667 = vmatpush1.msra.mxu0 0.0
      %2668 = vmatprep.subr.mxu0 0.0
      %2669 = vmatpush1.msra.mxu0 0.0
      %2670 = vmatprep.subr.mxu0 0.0
      %2671 = vmatpush1.msra.mxu0 0.0
      %2672 = vmatprep.subr.mxu0 0.0
      %2673 = vmatpush1.msra.mxu0 0.0
      %2674 = vmatprep.subr.mxu0 0.0
      %2675 = vmatpush1.msra.mxu0 0.0
      %2676 = vmatprep.subr.mxu0 0.0
      %2677 = vmatpush1.msra.mxu0 0.0
      %2678 = vmatprep.subr.mxu0 0.0
      %2679 = vmatpush1.msra.mxu0 0.0
      %2680 = vmatprep.subr.mxu0 0.0
      %2681 = vmatpush1.msra.mxu0 0.0
      %2682 = vmatprep.subr.mxu0 0.0
      %2683 = vmatpush1.msra.mxu0 0.0
      %2684 = vmatprep.subr.mxu0 0.0
      %2685 = vmatpush1.msra.mxu0 0.0
      %2686 = vmatprep.subr.mxu0 0.0
      %2687 = vmatpush1.msra.mxu0 0.0
      %2688 = vmatprep.subr.mxu0 0.0
      %2689 = vmatpush1.msra.mxu0 0.0
      %2690 = vmatprep.mubr.f32.mxu0 0.0
      %2691 = vmatmul.mubr.f32.gmra.mrb[0].mxu0 %v2553
      %v2692 = vpop.f32.mrb[0].mxu0
      %v2693 = vadd.f32 0.0, %v2692
      %v2694 = vpop.f32.mrb[0].mxu0
      %v2695 = vadd.f32 0.0, %v2694
      %2696 = vdwg.mxu0
      %v2698 = vsel %vm2551, %v2525, 0
      %2700 = vmatprep.subr.mxu0 %v2521
      %2701 = vmatpush1.msra.mxu0 %v2520
      %2702 = vmatprep.subr.mxu0 0.0
      %2703 = vmatpush1.msra.mxu0 0.0
      %2704 = vmatprep.subr.mxu0 0.0
      %2705 = vmatpush1.msra.mxu0 0.0
      %2706 = vmatprep.subr.mxu0 0.0
      %2707 = vmatpush1.msra.mxu0 0.0
      %2708 = vmatprep.subr.mxu0 0.0
      %2709 = vmatpush1.msra.mxu0 0.0
      %2710 = vmatprep.subr.mxu0 0.0
      %2711 = vmatpush1.msra.mxu0 0.0
      %2712 = vmatprep.subr.mxu0 0.0
      %2713 = vmatpush1.msra.mxu0 0.0
      %2714 = vmatprep.subr.mxu0 0.0
      %2715 = vmatpush1.msra.mxu0 0.0
      %2716 = vmatprep.subr.mxu0 0.0
      %2717 = vmatpush1.msra.mxu0 0.0
      %2718 = vmatprep.subr.mxu0 0.0
      %2719 = vmatpush1.msra.mxu0 0.0
      %2720 = vmatprep.subr.mxu0 0.0
      %2721 = vmatpush1.msra.mxu0 0.0
      %2722 = vmatprep.subr.mxu0 0.0
      %2723 = vmatpush1.msra.mxu0 0.0
      %2724 = vmatprep.subr.mxu0 0.0
      %2725 = vmatpush1.msra.mxu0 0.0
      %2726 = vmatprep.subr.mxu0 0.0
      %2727 = vmatpush1.msra.mxu0 0.0
      %2728 = vmatprep.subr.mxu0 0.0
      %2729 = vmatpush1.msra.mxu0 0.0
      %2730 = vmatprep.subr.mxu0 0.0
      %2731 = vmatpush1.msra.mxu0 0.0
      %2732 = vmatprep.subr.mxu0 0.0
      %2733 = vmatpush1.msra.mxu0 0.0
      %2734 = vmatprep.subr.mxu0 0.0
      %2735 = vmatpush1.msra.mxu0 0.0
      %2736 = vmatprep.subr.mxu0 0.0
      %2737 = vmatpush1.msra.mxu0 0.0
      %2738 = vmatprep.subr.mxu0 0.0
      %2739 = vmatpush1.msra.mxu0 0.0
      %2740 = vmatprep.subr.mxu0 0.0
      %2741 = vmatpush1.msra.mxu0 0.0
      %2742 = vmatprep.subr.mxu0 0.0
      %2743 = vmatpush1.msra.mxu0 0.0
      %2744 = vmatprep.subr.mxu0 0.0
      %2745 = vmatpush1.msra.mxu0 0.0
      %2746 = vmatprep.subr.mxu0 0.0
      %2747 = vmatpush1.msra.mxu0 0.0
      %2748 = vmatprep.subr.mxu0 0.0
      %2749 = vmatpush1.msra.mxu0 0.0
      %2750 = vmatprep.subr.mxu0 0.0
      %2751 = vmatpush1.msra.mxu0 0.0
      %2752 = vmatprep.subr.mxu0 0.0
      %2753 = vmatpush1.msra.mxu0 0.0
      %2754 = vmatprep.subr.mxu0 0.0
      %2755 = vmatpush1.msra.mxu0 0.0
      %2756 = vmatprep.subr.mxu0 0.0
      %2757 = vmatpush1.msra.mxu0 0.0
      %2758 = vmatprep.subr.mxu0 0.0
      %2759 = vmatpush1.msra.mxu0 0.0
      %2760 = vmatprep.subr.mxu0 0.0
      %2761 = vmatpush1.msra.mxu0 0.0
      %2762 = vmatprep.subr.mxu0 0.0
      %2763 = vmatpush1.msra.mxu0 0.0
      %2764 = vmatprep.mubr.f32.mxu0 0.0
      %2765 = vmatmul.mubr.f32.gmra.mrb[0].mxu0 %v2698
      %v2766 = vpop.f32.mrb[0].mxu0
      %v2767 = vadd.f32 %v2622, %v2766
      %v2768 = vpop.f32.mrb[0].mxu0
      %v2769 = vadd.f32 %v2624, %v2768
      %2770 = vdwg.mxu0
      %2771 = vmatprep.subr.mxu0 %v2523
      %2772 = vmatpush1.msra.mxu0 %v2522
      %2773 = vmatprep.subr.mxu0 0.0
      %2774 = vmatpush1.msra.mxu0 0.0
      %2775 = vmatprep.subr.mxu0 0.0
      %2776 = vmatpush1.msra.mxu0 0.0
      %2777 = vmatprep.subr.mxu0 0.0
      %2778 = vmatpush1.msra.mxu0 0.0
      %2779 = vmatprep.subr.mxu0 0.0
      %2780 = vmatpush1.msra.mxu0 0.0
      %2781 = vmatprep.subr.mxu0 0.0
      %2782 = vmatpush1.msra.mxu0 0.0
      %2783 = vmatprep.subr.mxu0 0.0
      %2784 = vmatpush1.msra.mxu0 0.0
      %2785 = vmatprep.subr.mxu0 0.0
      %2786 = vmatpush1.msra.mxu0 0.0
      %2787 = vmatprep.subr.mxu0 0.0
      %2788 = vmatpush1.msra.mxu0 0.0
      %2789 = vmatprep.subr.mxu0 0.0
      %2790 = vmatpush1.msra.mxu0 0.0
      %2791 = vmatprep.subr.mxu0 0.0
      %2792 = vmatpush1.msra.mxu0 0.0
      %2793 = vmatprep.subr.mxu0 0.0
      %2794 = vmatpush1.msra.mxu0 0.0
      %2795 = vmatprep.subr.mxu0 0.0
      %2796 = vmatpush1.msra.mxu0 0.0
      %2797 = vmatprep.subr.mxu0 0.0
      %2798 = vmatpush1.msra.mxu0 0.0
      %2799 = vmatprep.subr.mxu0 0.0
      %2800 = vmatpush1.msra.mxu0 0.0
      %2801 = vmatprep.subr.mxu0 0.0
      %2802 = vmatpush1.msra.mxu0 0.0
      %2803 = vmatprep.subr.mxu0 0.0
      %2804 = vmatpush1.msra.mxu0 0.0
      %2805 = vmatprep.subr.mxu0 0.0
      %2806 = vmatpush1.msra.mxu0 0.0
      %2807 = vmatprep.subr.mxu0 0.0
      %2808 = vmatpush1.msra.mxu0 0.0
      %2809 = vmatprep.subr.mxu0 0.0
      %2810 = vmatpush1.msra.mxu0 0.0
      %2811 = vmatprep.subr.mxu0 0.0
      %2812 = vmatpush1.msra.mxu0 0.0
      %2813 = vmatprep.subr.mxu0 0.0
      %2814 = vmatpush1.msra.mxu0 0.0
      %2815 = vmatprep.subr.mxu0 0.0
      %2816 = vmatpush1.msra.mxu0 0.0
      %2817 = vmatprep.subr.mxu0 0.0
      %2818 = vmatpush1.msra.mxu0 0.0
      %2819 = vmatprep.subr.mxu0 0.0
      %2820 = vmatpush1.msra.mxu0 0.0
      %2821 = vmatprep.subr.mxu0 0.0
      %2822 = vmatpush1.msra.mxu0 0.0
      %2823 = vmatprep.subr.mxu0 0.0
      %2824 = vmatpush1.msra.mxu0 0.0
      %2825 = vmatprep.subr.mxu0 0.0
      %2826 = vmatpush1.msra.mxu0 0.0
      %2827 = vmatprep.subr.mxu0 0.0
      %2828 = vmatpush1.msra.mxu0 0.0
      %2829 = vmatprep.subr.mxu0 0.0
      %2830 = vmatpush1.msra.mxu0 0.0
      %2831 = vmatprep.subr.mxu0 0.0
      %2832 = vmatpush1.msra.mxu0 0.0
      %2833 = vmatprep.subr.mxu0 0.0
      %2834 = vmatpush1.msra.mxu0 0.0
      %2835 = vmatprep.mubr.f32.mxu0 0.0
      %2836 = vmatmul.mubr.f32.gmra.mrb[0].mxu0 %v2698
      %v2837 = vpop.f32.mrb[0].mxu0
      %v2838 = vadd.f32 %v2693, %v2837
      %v2839 = vpop.f32.mrb[0].mxu0
      %v2840 = vadd.f32 %v2695, %v2839
      %2841 = vdwg.mxu0
      %s2842 = scalar_lea.vmem %s3, 16
      %v2843 = vld [vmem:[%s2842] sm:$0xff]
      %2844 = vrot.lane.b32.xlu0 %v2520, 126
      %v2845 = vpop.permute.xlu0 %2844
      %2846 = vrot.lane.b32.xlu0 %v2521, 126
      %v2847 = vpop.permute.xlu0 %2846
      %2848 = vrot.lane.b32.xlu0 %v2522, 126
      %v2849 = vpop.permute.xlu0 %2848
      %2850 = vrot.lane.b32.xlu0 %v2523, 126
      %v2851 = vpop.permute.xlu0 %2850
      %2852 = vrot.lane.b32.xlu0 %v2524, 126
      %v2853 = vpop.permute.xlu0 %2852
      %v2854 = vsel %vm715, %v2845, %v2847
      %v2855 = vsel %vm715, %v2847, %v2849
      %v2856 = vsel %vm715, %v2849, %v2851
      %v2857 = vsel %vm715, %v2851, %v2853
      %v2863 = vsel %vm2551, %v2843, 0
      %2865 = vmatprep.subr.mxu0 %v2855
      %2866 = vmatpush1.msra.mxu0 %v2854
      %2867 = vmatprep.subr.mxu0 0.0
      %2868 = vmatpush1.msra.mxu0 0.0
      %2869 = vmatprep.subr.mxu0 0.0
      %2870 = vmatpush1.msra.mxu0 0.0
      %2871 = vmatprep.subr.mxu0 0.0
      %2872 = vmatpush1.msra.mxu0 0.0
      %2873 = vmatprep.subr.mxu0 0.0
      %2874 = vmatpush1.msra.mxu0 0.0
      %2875 = vmatprep.subr.mxu0 0.0
      %2876 = vmatpush1.msra.mxu0 0.0
      %2877 = vmatprep.subr.mxu0 0.0
      %2878 = vmatpush1.msra.mxu0 0.0
      %2879 = vmatprep.subr.mxu0 0.0
      %2880 = vmatpush1.msra.mxu0 0.0
      %2881 = vmatprep.subr.mxu0 0.0
      %2882 = vmatpush1.msra.mxu0 0.0
      %2883 = vmatprep.subr.mxu0 0.0
      %2884 = vmatpush1.msra.mxu0 0.0
      %2885 = vmatprep.subr.mxu0 0.0
      %2886 = vmatpush1.msra.mxu0 0.0
      %2887 = vmatprep.subr.mxu0 0.0
      %2888 = vmatpush1.msra.mxu0 0.0
      %2889 = vmatprep.subr.mxu0 0.0
      %2890 = vmatpush1.msra.mxu0 0.0
      %2891 = vmatprep.subr.mxu0 0.0
      %2892 = vmatpush1.msra.mxu0 0.0
      %2893 = vmatprep.subr.mxu0 0.0
      %2894 = vmatpush1.msra.mxu0 0.0
      %2895 = vmatprep.subr.mxu0 0.0
      %2896 = vmatpush1.msra.mxu0 0.0
      %2897 = vmatprep.subr.mxu0 0.0
      %2898 = vmatpush1.msra.mxu0 0.0
      %2899 = vmatprep.subr.mxu0 0.0
      %2900 = vmatpush1.msra.mxu0 0.0
      %2901 = vmatprep.subr.mxu0 0.0
      %2902 = vmatpush1.msra.mxu0 0.0
      %2903 = vmatprep.subr.mxu0 0.0
      %2904 = vmatpush1.msra.mxu0 0.0
      %2905 = vmatprep.subr.mxu0 0.0
      %2906 = vmatpush1.msra.mxu0 0.0
      %2907 = vmatprep.subr.mxu0 0.0
      %2908 = vmatpush1.msra.mxu0 0.0
      %2909 = vmatprep.subr.mxu0 0.0
      %2910 = vmatpush1.msra.mxu0 0.0
      %2911 = vmatprep.subr.mxu0 0.0
      %2912 = vmatpush1.msra.mxu0 0.0
      %2913 = vmatprep.subr.mxu0 0.0
      %2914 = vmatpush1.msra.mxu0 0.0
      %2915 = vmatprep.subr.mxu0 0.0
      %2916 = vmatpush1.msra.mxu0 0.0
      %2917 = vmatprep.subr.mxu0 0.0
      %2918 = vmatpush1.msra.mxu0 0.0
      %2919 = vmatprep.subr.mxu0 0.0
      %2920 = vmatpush1.msra.mxu0 0.0
      %2921 = vmatprep.subr.mxu0 0.0
      %2922 = vmatpush1.msra.mxu0 0.0
      %2923 = vmatprep.subr.mxu0 0.0
      %2924 = vmatpush1.msra.mxu0 0.0
      %2925 = vmatprep.subr.mxu0 0.0
      %2926 = vmatpush1.msra.mxu0 0.0
      %2927 = vmatprep.subr.mxu0 0.0
      %2928 = vmatpush1.msra.mxu0 0.0
      %2929 = vmatprep.mubr.f32.mxu0 0.0
      %2930 = vmatmul.mubr.f32.gmra.mrb[0].mxu0 %v2863
      %v2931 = vpop.f32.mrb[0].mxu0
      %v2932 = vadd.f32 0.0, %v2931
      %v2933 = vpop.f32.mrb[0].mxu0
      %v2934 = vadd.f32 0.0, %v2933
      %2935 = vdwg.mxu0
      %2936 = vmatprep.subr.mxu0 %v2857
      %2937 = vmatpush1.msra.mxu0 %v2856
      %2938 = vmatprep.subr.mxu0 0.0
      %2939 = vmatpush1.msra.mxu0 0.0
      %2940 = vmatprep.subr.mxu0 0.0
      %2941 = vmatpush1.msra.mxu0 0.0
      %2942 = vmatprep.subr.mxu0 0.0
      %2943 = vmatpush1.msra.mxu0 0.0
      %2944 = vmatprep.subr.mxu0 0.0
      %2945 = vmatpush1.msra.mxu0 0.0
      %2946 = vmatprep.subr.mxu0 0.0
      %2947 = vmatpush1.msra.mxu0 0.0
      %2948 = vmatprep.subr.mxu0 0.0
      %2949 = vmatpush1.msra.mxu0 0.0
      %2950 = vmatprep.subr.mxu0 0.0
      %2951 = vmatpush1.msra.mxu0 0.0
      %2952 = vmatprep.subr.mxu0 0.0
      %2953 = vmatpush1.msra.mxu0 0.0
      %2954 = vmatprep.subr.mxu0 0.0
      %2955 = vmatpush1.msra.mxu0 0.0
      %2956 = vmatprep.subr.mxu0 0.0
      %2957 = vmatpush1.msra.mxu0 0.0
      %2958 = vmatprep.subr.mxu0 0.0
      %2959 = vmatpush1.msra.mxu0 0.0
      %2960 = vmatprep.subr.mxu0 0.0
      %2961 = vmatpush1.msra.mxu0 0.0
      %2962 = vmatprep.subr.mxu0 0.0
      %2963 = vmatpush1.msra.mxu0 0.0
      %2964 = vmatprep.subr.mxu0 0.0
      %2965 = vmatpush1.msra.mxu0 0.0
      %2966 = vmatprep.subr.mxu0 0.0
      %2967 = vmatpush1.msra.mxu0 0.0
      %2968 = vmatprep.subr.mxu0 0.0
      %2969 = vmatpush1.msra.mxu0 0.0
      %2970 = vmatprep.subr.mxu0 0.0
      %2971 = vmatpush1.msra.mxu0 0.0
      %2972 = vmatprep.subr.mxu0 0.0
      %2973 = vmatpush1.msra.mxu0 0.0
      %2974 = vmatprep.subr.mxu0 0.0
      %2975 = vmatpush1.msra.mxu0 0.0
      %2976 = vmatprep.subr.mxu0 0.0
      %2977 = vmatpush1.msra.mxu0 0.0
      %2978 = vmatprep.subr.mxu0 0.0
      %2979 = vmatpush1.msra.mxu0 0.0
      %2980 = vmatprep.subr.mxu0 0.0
      %2981 = vmatpush1.msra.mxu0 0.0
      %2982 = vmatprep.subr.mxu0 0.0
      %2983 = vmatpush1.msra.mxu0 0.0
      %2984 = vmatprep.subr.mxu0 0.0
      %2985 = vmatpush1.msra.mxu0 0.0
      %2986 = vmatprep.subr.mxu0 0.0
      %2987 = vmatpush1.msra.mxu0 0.0
      %2988 = vmatprep.subr.mxu0 0.0
      %2989 = vmatpush1.msra.mxu0 0.0
      %2990 = vmatprep.subr.mxu0 0.0
      %2991 = vmatpush1.msra.mxu0 0.0
      %2992 = vmatprep.subr.mxu0 0.0
      %2993 = vmatpush1.msra.mxu0 0.0
      %2994 = vmatprep.subr.mxu0 0.0
      %2995 = vmatpush1.msra.mxu0 0.0
      %2996 = vmatprep.subr.mxu0 0.0
      %2997 = vmatpush1.msra.mxu0 0.0
      %2998 = vmatprep.subr.mxu0 0.0
      %2999 = vmatpush1.msra.mxu0 0.0
      %3000 = vmatprep.mubr.f32.mxu0 0.0
      %3001 = vmatmul.mubr.f32.gmra.mrb[0].mxu0 %v2863
      %v3002 = vpop.f32.mrb[0].mxu0
      %v3003 = vadd.f32 0.0, %v3002
      %v3004 = vpop.f32.mrb[0].mxu0
      %v3005 = vadd.f32 0.0, %v3004
      %3006 = vdwg.mxu0
      %v3007 = vadd.f32 %v2767, %v2932
      %v3008 = vadd.f32 %v2769, %v2934
      %v3009 = vadd.f32 %v2838, %v3003
      %v3010 = vadd.f32 %v2840, %v3005
      %s3011 = scalar_lea.vmem %s3, 24
      %v3012 = vld [vmem:[%s3011] sm:$0xff]
      %3013 = vrot.lane.b32.xlu0 %v2520, 96
      %v3014 = vpop.permute.xlu0 %3013
      %3015 = vrot.lane.b32.xlu0 %v2521, 96
      %v3016 = vpop.permute.xlu0 %3015
      %3017 = vrot.lane.b32.xlu0 %v2522, 96
      %v3018 = vpop.permute.xlu0 %3017
      %3019 = vrot.lane.b32.xlu0 %v2523, 96
      %v3020 = vpop.permute.xlu0 %3019
      %3021 = vrot.lane.b32.xlu0 %v2524, 96
      %v3022 = vpop.permute.xlu0 %3021
      %v3023 = vsel %vm962, %v3014, %v3016
      %v3024 = vsel %vm962, %v3016, %v3018
      %v3025 = vsel %vm962, %v3018, %v3020
      %v3026 = vsel %vm962, %v3020, %v3022
      %v3032 = vsel %vm2551, %v3012, 0
      %3034 = vmatprep.subr.mxu0 %v3024
      %3035 = vmatpush1.msra.mxu0 %v3023
      %3036 = vmatprep.subr.mxu0 0.0
      %3037 = vmatpush1.msra.mxu0 0.0
      %3038 = vmatprep.subr.mxu0 0.0
      %3039 = vmatpush1.msra.mxu0 0.0
      %3040 = vmatprep.subr.mxu0 0.0
      %3041 = vmatpush1.msra.mxu0 0.0
      %3042 = vmatprep.subr.mxu0 0.0
      %3043 = vmatpush1.msra.mxu0 0.0
      %3044 = vmatprep.subr.mxu0 0.0
      %3045 = vmatpush1.msra.mxu0 0.0
      %3046 = vmatprep.subr.mxu0 0.0
      %3047 = vmatpush1.msra.mxu0 0.0
      %3048 = vmatprep.subr.mxu0 0.0
      %3049 = vmatpush1.msra.mxu0 0.0
      %3050 = vmatprep.subr.mxu0 0.0
      %3051 = vmatpush1.msra.mxu0 0.0
      %3052 = vmatprep.subr.mxu0 0.0
      %3053 = vmatpush1.msra.mxu0 0.0
      %3054 = vmatprep.subr.mxu0 0.0
      %3055 = vmatpush1.msra.mxu0 0.0
      %3056 = vmatprep.subr.mxu0 0.0
      %3057 = vmatpush1.msra.mxu0 0.0
      %3058 = vmatprep.subr.mxu0 0.0
      %3059 = vmatpush1.msra.mxu0 0.0
      %3060 = vmatprep.subr.mxu0 0.0
      %3061 = vmatpush1.msra.mxu0 0.0
      %3062 = vmatprep.subr.mxu0 0.0
      %3063 = vmatpush1.msra.mxu0 0.0
      %3064 = vmatprep.subr.mxu0 0.0
      %3065 = vmatpush1.msra.mxu0 0.0
      %3066 = vmatprep.subr.mxu0 0.0
      %3067 = vmatpush1.msra.mxu0 0.0
      %3068 = vmatprep.subr.mxu0 0.0
      %3069 = vmatpush1.msra.mxu0 0.0
      %3070 = vmatprep.subr.mxu0 0.0
      %3071 = vmatpush1.msra.mxu0 0.0
      %3072 = vmatprep.subr.mxu0 0.0
      %3073 = vmatpush1.msra.mxu0 0.0
      %3074 = vmatprep.subr.mxu0 0.0
      %3075 = vmatpush1.msra.mxu0 0.0
      %3076 = vmatprep.subr.mxu0 0.0
      %3077 = vmatpush1.msra.mxu0 0.0
      %3078 = vmatprep.subr.mxu0 0.0
      %3079 = vmatpush1.msra.mxu0 0.0
      %3080 = vmatprep.subr.mxu0 0.0
      %3081 = vmatpush1.msra.mxu0 0.0
      %3082 = vmatprep.subr.mxu0 0.0
      %3083 = vmatpush1.msra.mxu0 0.0
      %3084 = vmatprep.subr.mxu0 0.0
      %3085 = vmatpush1.msra.mxu0 0.0
      %3086 = vmatprep.subr.mxu0 0.0
      %3087 = vmatpush1.msra.mxu0 0.0
      %3088 = vmatprep.subr.mxu0 0.0
      %3089 = vmatpush1.msra.mxu0 0.0
      %3090 = vmatprep.subr.mxu0 0.0
      %3091 = vmatpush1.msra.mxu0 0.0
      %3092 = vmatprep.subr.mxu0 0.0
      %3093 = vmatpush1.msra.mxu0 0.0
      %3094 = vmatprep.subr.mxu0 0.0
      %3095 = vmatpush1.msra.mxu0 0.0
      %3096 = vmatprep.subr.mxu0 0.0
      %3097 = vmatpush1.msra.mxu0 0.0
      %3098 = vmatprep.mubr.f32.mxu0 0.0
      %3099 = vmatmul.mubr.f32.gmra.mrb[0].mxu0 %v3032
      %v3100 = vpop.f32.mrb[0].mxu0
      %v3101 = vadd.f32 0.0, %v3100
      %v3102 = vpop.f32.mrb[0].mxu0
      %v3103 = vadd.f32 0.0, %v3102
      %3104 = vdwg.mxu0
      %3105 = vmatprep.subr.mxu0 %v3026
      %3106 = vmatpush1.msra.mxu0 %v3025
      %3107 = vmatprep.subr.mxu0 0.0
      %3108 = vmatpush1.msra.mxu0 0.0
      %3109 = vmatprep.subr.mxu0 0.0
      %3110 = vmatpush1.msra.mxu0 0.0
      %3111 = vmatprep.subr.mxu0 0.0
      %3112 = vmatpush1.msra.mxu0 0.0
      %3113 = vmatprep.subr.mxu0 0.0
      %3114 = vmatpush1.msra.mxu0 0.0
      %3115 = vmatprep.subr.mxu0 0.0
      %3116 = vmatpush1.msra.mxu0 0.0
      %3117 = vmatprep.subr.mxu0 0.0
      %3118 = vmatpush1.msra.mxu0 0.0
      %3119 = vmatprep.subr.mxu0 0.0
      %3120 = vmatpush1.msra.mxu0 0.0
      %3121 = vmatprep.subr.mxu0 0.0
      %3122 = vmatpush1.msra.mxu0 0.0
      %3123 = vmatprep.subr.mxu0 0.0
      %3124 = vmatpush1.msra.mxu0 0.0
      %3125 = vmatprep.subr.mxu0 0.0
      %3126 = vmatpush1.msra.mxu0 0.0
      %3127 = vmatprep.subr.mxu0 0.0
      %3128 = vmatpush1.msra.mxu0 0.0
      %3129 = vmatprep.subr.mxu0 0.0
      %3130 = vmatpush1.msra.mxu0 0.0
      %3131 = vmatprep.subr.mxu0 0.0
      %3132 = vmatpush1.msra.mxu0 0.0
      %3133 = vmatprep.subr.mxu0 0.0
      %3134 = vmatpush1.msra.mxu0 0.0
      %3135 = vmatprep.subr.mxu0 0.0
      %3136 = vmatpush1.msra.mxu0 0.0
      %3137 = vmatprep.subr.mxu0 0.0
      %3138 = vmatpush1.msra.mxu0 0.0
      %3139 = vmatprep.subr.mxu0 0.0
      %3140 = vmatpush1.msra.mxu0 0.0
      %3141 = vmatprep.subr.mxu0 0.0
      %3142 = vmatpush1.msra.mxu0 0.0
      %3143 = vmatprep.subr.mxu0 0.0
      %3144 = vmatpush1.msra.mxu0 0.0
      %3145 = vmatprep.subr.mxu0 0.0
      %3146 = vmatpush1.msra.mxu0 0.0
      %3147 = vmatprep.subr.mxu0 0.0
      %3148 = vmatpush1.msra.mxu0 0.0
      %3149 = vmatprep.subr.mxu0 0.0
      %3150 = vmatpush1.msra.mxu0 0.0
      %3151 = vmatprep.subr.mxu0 0.0
      %3152 = vmatpush1.msra.mxu0 0.0
      %3153 = vmatprep.subr.mxu0 0.0
      %3154 = vmatpush1.msra.mxu0 0.0
      %3155 = vmatprep.subr.mxu0 0.0
      %3156 = vmatpush1.msra.mxu0 0.0
      %3157 = vmatprep.subr.mxu0 0.0
      %3158 = vmatpush1.msra.mxu0 0.0
      %3159 = vmatprep.subr.mxu0 0.0
      %3160 = vmatpush1.msra.mxu0 0.0
      %3161 = vmatprep.subr.mxu0 0.0
      %3162 = vmatpush1.msra.mxu0 0.0
      %3163 = vmatprep.subr.mxu0 0.0
      %3164 = vmatpush1.msra.mxu0 0.0
      %3165 = vmatprep.subr.mxu0 0.0
      %3166 = vmatpush1.msra.mxu0 0.0
      %3167 = vmatprep.subr.mxu0 0.0
      %3168 = vmatpush1.msra.mxu0 0.0
      %3169 = vmatprep.mubr.f32.mxu0 0.0
      %3170 = vmatmul.mubr.f32.gmra.mrb[0].mxu0 %v3032
      %v3171 = vpop.f32.mrb[0].mxu0
      %v3172 = vadd.f32 0.0, %v3171
      %v3173 = vpop.f32.mrb[0].mxu0
      %v3174 = vadd.f32 0.0, %v3173
      %3175 = vdwg.mxu0
      %v3176 = vadd.f32 %v3007, %v3101
      %v3177 = vadd.f32 %v3008, %v3103
      %v3178 = vadd.f32 %v3009, %v3172
      %v3179 = vadd.f32 %v3010, %v3174
      %s3180 = scalar_lea.vmem %s3, 32
      %v3181 = vld [vmem:[%s3180] sm:$0xff]
      %3182 = vrot.lane.b32.xlu0 %v2520, 95
      %v3183 = vpop.permute.xlu0 %3182
      %3184 = vrot.lane.b32.xlu0 %v2521, 95
      %v3185 = vpop.permute.xlu0 %3184
      %3186 = vrot.lane.b32.xlu0 %v2522, 95
      %v3187 = vpop.permute.xlu0 %3186
      %3188 = vrot.lane.b32.xlu0 %v2523, 95
      %v3189 = vpop.permute.xlu0 %3188
      %3190 = vrot.lane.b32.xlu0 %v2524, 95
      %v3191 = vpop.permute.xlu0 %3190
      %v3192 = vsel %vm1212, %v3183, %v3185
      %v3193 = vsel %vm1212, %v3185, %v3187
      %v3194 = vsel %vm1212, %v3187, %v3189
      %v3195 = vsel %vm1212, %v3189, %v3191
      %v3201 = vsel %vm2551, %v3181, 0
      %3203 = vmatprep.subr.mxu0 %v3193
      %3204 = vmatpush1.msra.mxu0 %v3192
      %3205 = vmatprep.subr.mxu0 0.0
      %3206 = vmatpush1.msra.mxu0 0.0
      %3207 = vmatprep.subr.mxu0 0.0
      %3208 = vmatpush1.msra.mxu0 0.0
      %3209 = vmatprep.subr.mxu0 0.0
      %3210 = vmatpush1.msra.mxu0 0.0
      %3211 = vmatprep.subr.mxu0 0.0
      %3212 = vmatpush1.msra.mxu0 0.0
      %3213 = vmatprep.subr.mxu0 0.0
      %3214 = vmatpush1.msra.mxu0 0.0
      %3215 = vmatprep.subr.mxu0 0.0
      %3216 = vmatpush1.msra.mxu0 0.0
      %3217 = vmatprep.subr.mxu0 0.0
      %3218 = vmatpush1.msra.mxu0 0.0
      %3219 = vmatprep.subr.mxu0 0.0
      %3220 = vmatpush1.msra.mxu0 0.0
      %3221 = vmatprep.subr.mxu0 0.0
      %3222 = vmatpush1.msra.mxu0 0.0
      %3223 = vmatprep.subr.mxu0 0.0
      %3224 = vmatpush1.msra.mxu0 0.0
      %3225 = vmatprep.subr.mxu0 0.0
      %3226 = vmatpush1.msra.mxu0 0.0
      %3227 = vmatprep.subr.mxu0 0.0
      %3228 = vmatpush1.msra.mxu0 0.0
      %3229 = vmatprep.subr.mxu0 0.0
      %3230 = vmatpush1.msra.mxu0 0.0
      %3231 = vmatprep.subr.mxu0 0.0
      %3232 = vmatpush1.msra.mxu0 0.0
      %3233 = vmatprep.subr.mxu0 0.0
      %3234 = vmatpush1.msra.mxu0 0.0
      %3235 = vmatprep.subr.mxu0 0.0
      %3236 = vmatpush1.msra.mxu0 0.0
      %3237 = vmatprep.subr.mxu0 0.0
      %3238 = vmatpush1.msra.mxu0 0.0
      %3239 = vmatprep.subr.mxu0 0.0
      %3240 = vmatpush1.msra.mxu0 0.0
      %3241 = vmatprep.subr.mxu0 0.0
      %3242 = vmatpush1.msra.mxu0 0.0
      %3243 = vmatprep.subr.mxu0 0.0
      %3244 = vmatpush1.msra.mxu0 0.0
      %3245 = vmatprep.subr.mxu0 0.0
      %3246 = vmatpush1.msra.mxu0 0.0
      %3247 = vmatprep.subr.mxu0 0.0
      %3248 = vmatpush1.msra.mxu0 0.0
      %3249 = vmatprep.subr.mxu0 0.0
      %3250 = vmatpush1.msra.mxu0 0.0
      %3251 = vmatprep.subr.mxu0 0.0
      %3252 = vmatpush1.msra.mxu0 0.0
      %3253 = vmatprep.subr.mxu0 0.0
      %3254 = vmatpush1.msra.mxu0 0.0
      %3255 = vmatprep.subr.mxu0 0.0
      %3256 = vmatpush1.msra.mxu0 0.0
      %3257 = vmatprep.subr.mxu0 0.0
      %3258 = vmatpush1.msra.mxu0 0.0
      %3259 = vmatprep.subr.mxu0 0.0
      %3260 = vmatpush1.msra.mxu0 0.0
      %3261 = vmatprep.subr.mxu0 0.0
      %3262 = vmatpush1.msra.mxu0 0.0
      %3263 = vmatprep.subr.mxu0 0.0
      %3264 = vmatpush1.msra.mxu0 0.0
      %3265 = vmatprep.subr.mxu0 0.0
      %3266 = vmatpush1.msra.mxu0 0.0
      %3267 = vmatprep.mubr.f32.mxu0 0.0
      %3268 = vmatmul.mubr.f32.gmra.mrb[0].mxu0 %v3201
      %v3269 = vpop.f32.mrb[0].mxu0
      %v3270 = vadd.f32 0.0, %v3269
      %v3271 = vpop.f32.mrb[0].mxu0
      %v3272 = vadd.f32 0.0, %v3271
      %3273 = vdwg.mxu0
      %3274 = vmatprep.subr.mxu0 %v3195
      %3275 = vmatpush1.msra.mxu0 %v3194
      %3276 = vmatprep.subr.mxu0 0.0
      %3277 = vmatpush1.msra.mxu0 0.0
      %3278 = vmatprep.subr.mxu0 0.0
      %3279 = vmatpush1.msra.mxu0 0.0
      %3280 = vmatprep.subr.mxu0 0.0
      %3281 = vmatpush1.msra.mxu0 0.0
      %3282 = vmatprep.subr.mxu0 0.0
      %3283 = vmatpush1.msra.mxu0 0.0
      %3284 = vmatprep.subr.mxu0 0.0
      %3285 = vmatpush1.msra.mxu0 0.0
      %3286 = vmatprep.subr.mxu0 0.0
      %3287 = vmatpush1.msra.mxu0 0.0
      %3288 = vmatprep.subr.mxu0 0.0
      %3289 = vmatpush1.msra.mxu0 0.0
      %3290 = vmatprep.subr.mxu0 0.0
      %3291 = vmatpush1.msra.mxu0 0.0
      %3292 = vmatprep.subr.mxu0 0.0
      %3293 = vmatpush1.msra.mxu0 0.0
      %3294 = vmatprep.subr.mxu0 0.0
      %3295 = vmatpush1.msra.mxu0 0.0
      %3296 = vmatprep.subr.mxu0 0.0
      %3297 = vmatpush1.msra.mxu0 0.0
      %3298 = vmatprep.subr.mxu0 0.0
      %3299 = vmatpush1.msra.mxu0 0.0
      %3300 = vmatprep.subr.mxu0 0.0
      %3301 = vmatpush1.msra.mxu0 0.0
      %3302 = vmatprep.subr.mxu0 0.0
      %3303 = vmatpush1.msra.mxu0 0.0
      %3304 = vmatprep.subr.mxu0 0.0
      %3305 = vmatpush1.msra.mxu0 0.0
      %3306 = vmatprep.subr.mxu0 0.0
      %3307 = vmatpush1.msra.mxu0 0.0
      %3308 = vmatprep.subr.mxu0 0.0
      %3309 = vmatpush1.msra.mxu0 0.0
      %3310 = vmatprep.subr.mxu0 0.0
      %3311 = vmatpush1.msra.mxu0 0.0
      %3312 = vmatprep.subr.mxu0 0.0
      %3313 = vmatpush1.msra.mxu0 0.0
      %3314 = vmatprep.subr.mxu0 0.0
      %3315 = vmatpush1.msra.mxu0 0.0
      %3316 = vmatprep.subr.mxu0 0.0
      %3317 = vmatpush1.msra.mxu0 0.0
      %3318 = vmatprep.subr.mxu0 0.0
      %3319 = vmatpush1.msra.mxu0 0.0
      %3320 = vmatprep.subr.mxu0 0.0
      %3321 = vmatpush1.msra.mxu0 0.0
      %3322 = vmatprep.subr.mxu0 0.0
      %3323 = vmatpush1.msra.mxu0 0.0
      %3324 = vmatprep.subr.mxu0 0.0
      %3325 = vmatpush1.msra.mxu0 0.0
      %3326 = vmatprep.subr.mxu0 0.0
      %3327 = vmatpush1.msra.mxu0 0.0
      %3328 = vmatprep.subr.mxu0 0.0
      %3329 = vmatpush1.msra.mxu0 0.0
      %3330 = vmatprep.subr.mxu0 0.0
      %3331 = vmatpush1.msra.mxu0 0.0
      %3332 = vmatprep.subr.mxu0 0.0
      %3333 = vmatpush1.msra.mxu0 0.0
      %3334 = vmatprep.subr.mxu0 0.0
      %3335 = vmatpush1.msra.mxu0 0.0
      %3336 = vmatprep.subr.mxu0 0.0
      %3337 = vmatpush1.msra.mxu0 0.0
      %3338 = vmatprep.mubr.f32.mxu0 0.0
      %3339 = vmatmul.mubr.f32.gmra.mrb[0].mxu0 %v3201
      %v3340 = vpop.f32.mrb[0].mxu0
      %v3341 = vadd.f32 0.0, %v3340
      %v3342 = vpop.f32.mrb[0].mxu0
      %v3343 = vadd.f32 0.0, %v3342
      %3344 = vdwg.mxu0
      %v3345 = vadd.f32 %v3176, %v3270
      %v3346 = vadd.f32 %v3177, %v3272
      %v3347 = vadd.f32 %v3178, %v3341
      %v3348 = vadd.f32 %v3179, %v3343
      %s3349 = scalar_lea.vmem %s3, 40
      %v3350 = vld [vmem:[%s3349] sm:$0xff]
      %3351 = vrot.lane.b32.xlu0 %v2520, 94
      %v3352 = vpop.permute.xlu0 %3351
      %3353 = vrot.lane.b32.xlu0 %v2521, 94
      %v3354 = vpop.permute.xlu0 %3353
      %3355 = vrot.lane.b32.xlu0 %v2522, 94
      %v3356 = vpop.permute.xlu0 %3355
      %3357 = vrot.lane.b32.xlu0 %v2523, 94
      %v3358 = vpop.permute.xlu0 %3357
      %3359 = vrot.lane.b32.xlu0 %v2524, 94
      %v3360 = vpop.permute.xlu0 %3359
      %v3361 = vsel %vm1462, %v3352, %v3354
      %v3362 = vsel %vm1462, %v3354, %v3356
      %v3363 = vsel %vm1462, %v3356, %v3358
      %v3364 = vsel %vm1462, %v3358, %v3360
      %v3370 = vsel %vm2551, %v3350, 0
      %3372 = vmatprep.subr.mxu0 %v3362
      %3373 = vmatpush1.msra.mxu0 %v3361
      %3374 = vmatprep.subr.mxu0 0.0
      %3375 = vmatpush1.msra.mxu0 0.0
      %3376 = vmatprep.subr.mxu0 0.0
      %3377 = vmatpush1.msra.mxu0 0.0
      %3378 = vmatprep.subr.mxu0 0.0
      %3379 = vmatpush1.msra.mxu0 0.0
      %3380 = vmatprep.subr.mxu0 0.0
      %3381 = vmatpush1.msra.mxu0 0.0
      %3382 = vmatprep.subr.mxu0 0.0
      %3383 = vmatpush1.msra.mxu0 0.0
      %3384 = vmatprep.subr.mxu0 0.0
      %3385 = vmatpush1.msra.mxu0 0.0
      %3386 = vmatprep.subr.mxu0 0.0
      %3387 = vmatpush1.msra.mxu0 0.0
      %3388 = vmatprep.subr.mxu0 0.0
      %3389 = vmatpush1.msra.mxu0 0.0
      %3390 = vmatprep.subr.mxu0 0.0
      %3391 = vmatpush1.msra.mxu0 0.0
      %3392 = vmatprep.subr.mxu0 0.0
      %3393 = vmatpush1.msra.mxu0 0.0
      %3394 = vmatprep.subr.mxu0 0.0
      %3395 = vmatpush1.msra.mxu0 0.0
      %3396 = vmatprep.subr.mxu0 0.0
      %3397 = vmatpush1.msra.mxu0 0.0
      %3398 = vmatprep.subr.mxu0 0.0
      %3399 = vmatpush1.msra.mxu0 0.0
      %3400 = vmatprep.subr.mxu0 0.0
      %3401 = vmatpush1.msra.mxu0 0.0
      %3402 = vmatprep.subr.mxu0 0.0
      %3403 = vmatpush1.msra.mxu0 0.0
      %3404 = vmatprep.subr.mxu0 0.0
      %3405 = vmatpush1.msra.mxu0 0.0
      %3406 = vmatprep.subr.mxu0 0.0
      %3407 = vmatpush1.msra.mxu0 0.0
      %3408 = vmatprep.subr.mxu0 0.0
      %3409 = vmatpush1.msra.mxu0 0.0
      %3410 = vmatprep.subr.mxu0 0.0
      %3411 = vmatpush1.msra.mxu0 0.0
      %3412 = vmatprep.subr.mxu0 0.0
      %3413 = vmatpush1.msra.mxu0 0.0
      %3414 = vmatprep.subr.mxu0 0.0
      %3415 = vmatpush1.msra.mxu0 0.0
      %3416 = vmatprep.subr.mxu0 0.0
      %3417 = vmatpush1.msra.mxu0 0.0
      %3418 = vmatprep.subr.mxu0 0.0
      %3419 = vmatpush1.msra.mxu0 0.0
      %3420 = vmatprep.subr.mxu0 0.0
      %3421 = vmatpush1.msra.mxu0 0.0
      %3422 = vmatprep.subr.mxu0 0.0
      %3423 = vmatpush1.msra.mxu0 0.0
      %3424 = vmatprep.subr.mxu0 0.0
      %3425 = vmatpush1.msra.mxu0 0.0
      %3426 = vmatprep.subr.mxu0 0.0
      %3427 = vmatpush1.msra.mxu0 0.0
      %3428 = vmatprep.subr.mxu0 0.0
      %3429 = vmatpush1.msra.mxu0 0.0
      %3430 = vmatprep.subr.mxu0 0.0
      %3431 = vmatpush1.msra.mxu0 0.0
      %3432 = vmatprep.subr.mxu0 0.0
      %3433 = vmatpush1.msra.mxu0 0.0
      %3434 = vmatprep.subr.mxu0 0.0
      %3435 = vmatpush1.msra.mxu0 0.0
      %3436 = vmatprep.mubr.f32.mxu0 0.0
      %3437 = vmatmul.mubr.f32.gmra.mrb[0].mxu0 %v3370
      %v3438 = vpop.f32.mrb[0].mxu0
      %v3439 = vadd.f32 0.0, %v3438
      %v3440 = vpop.f32.mrb[0].mxu0
      %v3441 = vadd.f32 0.0, %v3440
      %3442 = vdwg.mxu0
      %3443 = vmatprep.subr.mxu0 %v3364
      %3444 = vmatpush1.msra.mxu0 %v3363
      %3445 = vmatprep.subr.mxu0 0.0
      %3446 = vmatpush1.msra.mxu0 0.0
      %3447 = vmatprep.subr.mxu0 0.0
      %3448 = vmatpush1.msra.mxu0 0.0
      %3449 = vmatprep.subr.mxu0 0.0
      %3450 = vmatpush1.msra.mxu0 0.0
      %3451 = vmatprep.subr.mxu0 0.0
      %3452 = vmatpush1.msra.mxu0 0.0
      %3453 = vmatprep.subr.mxu0 0.0
      %3454 = vmatpush1.msra.mxu0 0.0
      %3455 = vmatprep.subr.mxu0 0.0
      %3456 = vmatpush1.msra.mxu0 0.0
      %3457 = vmatprep.subr.mxu0 0.0
      %3458 = vmatpush1.msra.mxu0 0.0
      %3459 = vmatprep.subr.mxu0 0.0
      %3460 = vmatpush1.msra.mxu0 0.0
      %3461 = vmatprep.subr.mxu0 0.0
      %3462 = vmatpush1.msra.mxu0 0.0
      %3463 = vmatprep.subr.mxu0 0.0
      %3464 = vmatpush1.msra.mxu0 0.0
      %3465 = vmatprep.subr.mxu0 0.0
      %3466 = vmatpush1.msra.mxu0 0.0
      %3467 = vmatprep.subr.mxu0 0.0
      %3468 = vmatpush1.msra.mxu0 0.0
      %3469 = vmatprep.subr.mxu0 0.0
      %3470 = vmatpush1.msra.mxu0 0.0
      %3471 = vmatprep.subr.mxu0 0.0
      %3472 = vmatpush1.msra.mxu0 0.0
      %3473 = vmatprep.subr.mxu0 0.0
      %3474 = vmatpush1.msra.mxu0 0.0
      %3475 = vmatprep.subr.mxu0 0.0
      %3476 = vmatpush1.msra.mxu0 0.0
      %3477 = vmatprep.subr.mxu0 0.0
      %3478 = vmatpush1.msra.mxu0 0.0
      %3479 = vmatprep.subr.mxu0 0.0
      %3480 = vmatpush1.msra.mxu0 0.0
      %3481 = vmatprep.subr.mxu0 0.0
      %3482 = vmatpush1.msra.mxu0 0.0
      %3483 = vmatprep.subr.mxu0 0.0
      %3484 = vmatpush1.msra.mxu0 0.0
      %3485 = vmatprep.subr.mxu0 0.0
      %3486 = vmatpush1.msra.mxu0 0.0
      %3487 = vmatprep.subr.mxu0 0.0
      %3488 = vmatpush1.msra.mxu0 0.0
      %3489 = vmatprep.subr.mxu0 0.0
      %3490 = vmatpush1.msra.mxu0 0.0
      %3491 = vmatprep.subr.mxu0 0.0
      %3492 = vmatpush1.msra.mxu0 0.0
      %3493 = vmatprep.subr.mxu0 0.0
      %3494 = vmatpush1.msra.mxu0 0.0
      %3495 = vmatprep.subr.mxu0 0.0
      %3496 = vmatpush1.msra.mxu0 0.0
      %3497 = vmatprep.subr.mxu0 0.0
      %3498 = vmatpush1.msra.mxu0 0.0
      %3499 = vmatprep.subr.mxu0 0.0
      %3500 = vmatpush1.msra.mxu0 0.0
      %3501 = vmatprep.subr.mxu0 0.0
      %3502 = vmatpush1.msra.mxu0 0.0
      %3503 = vmatprep.subr.mxu0 0.0
      %3504 = vmatpush1.msra.mxu0 0.0
      %3505 = vmatprep.subr.mxu0 0.0
      %3506 = vmatpush1.msra.mxu0 0.0
      %3507 = vmatprep.mubr.f32.mxu0 0.0
      %3508 = vmatmul.mubr.f32.gmra.mrb[0].mxu0 %v3370
      %v3509 = vpop.f32.mrb[0].mxu0
      %v3510 = vadd.f32 0.0, %v3509
      %v3511 = vpop.f32.mrb[0].mxu0
      %v3512 = vadd.f32 0.0, %v3511
      %3513 = vdwg.mxu0
      %v3514 = vadd.f32 %v3345, %v3439
      %v3515 = vadd.f32 %v3346, %v3441
      %v3516 = vadd.f32 %v3347, %v3510
      %v3517 = vadd.f32 %v3348, %v3512
      %s3518 = scalar_lea.vmem %s3, 48
      %v3519 = vld [vmem:[%s3518] sm:$0xff]
      %3520 = vrot.lane.b32.xlu0 %v2520, 64
      %v3521 = vpop.permute.xlu0 %3520
      %3522 = vrot.lane.b32.xlu0 %v2521, 64
      %v3523 = vpop.permute.xlu0 %3522
      %3524 = vrot.lane.b32.xlu0 %v2522, 64
      %v3525 = vpop.permute.xlu0 %3524
      %3526 = vrot.lane.b32.xlu0 %v2523, 64
      %v3527 = vpop.permute.xlu0 %3526
      %3528 = vrot.lane.b32.xlu0 %v2524, 64
      %v3529 = vpop.permute.xlu0 %3528
      %v3530 = vsel %vm1712, %v3521, %v3523
      %v3531 = vsel %vm1712, %v3523, %v3525
      %v3532 = vsel %vm1712, %v3525, %v3527
      %v3533 = vsel %vm1712, %v3527, %v3529
      %v3539 = vsel %vm2551, %v3519, 0
      %3541 = vmatprep.subr.mxu0 %v3531
      %3542 = vmatpush1.msra.mxu0 %v3530
      %3543 = vmatprep.subr.mxu0 0.0
      %3544 = vmatpush1.msra.mxu0 0.0
      %3545 = vmatprep.subr.mxu0 0.0
      %3546 = vmatpush1.msra.mxu0 0.0
      %3547 = vmatprep.subr.mxu0 0.0
      %3548 = vmatpush1.msra.mxu0 0.0
      %3549 = vmatprep.subr.mxu0 0.0
      %3550 = vmatpush1.msra.mxu0 0.0
      %3551 = vmatprep.subr.mxu0 0.0
      %3552 = vmatpush1.msra.mxu0 0.0
      %3553 = vmatprep.subr.mxu0 0.0
      %3554 = vmatpush1.msra.mxu0 0.0
      %3555 = vmatprep.subr.mxu0 0.0
      %3556 = vmatpush1.msra.mxu0 0.0
      %3557 = vmatprep.subr.mxu0 0.0
      %3558 = vmatpush1.msra.mxu0 0.0
      %3559 = vmatprep.subr.mxu0 0.0
      %3560 = vmatpush1.msra.mxu0 0.0
      %3561 = vmatprep.subr.mxu0 0.0
      %3562 = vmatpush1.msra.mxu0 0.0
      %3563 = vmatprep.subr.mxu0 0.0
      %3564 = vmatpush1.msra.mxu0 0.0
      %3565 = vmatprep.subr.mxu0 0.0
      %3566 = vmatpush1.msra.mxu0 0.0
      %3567 = vmatprep.subr.mxu0 0.0
      %3568 = vmatpush1.msra.mxu0 0.0
      %3569 = vmatprep.subr.mxu0 0.0
      %3570 = vmatpush1.msra.mxu0 0.0
      %3571 = vmatprep.subr.mxu0 0.0
      %3572 = vmatpush1.msra.mxu0 0.0
      %3573 = vmatprep.subr.mxu0 0.0
      %3574 = vmatpush1.msra.mxu0 0.0
      %3575 = vmatprep.subr.mxu0 0.0
      %3576 = vmatpush1.msra.mxu0 0.0
      %3577 = vmatprep.subr.mxu0 0.0
      %3578 = vmatpush1.msra.mxu0 0.0
      %3579 = vmatprep.subr.mxu0 0.0
      %3580 = vmatpush1.msra.mxu0 0.0
      %3581 = vmatprep.subr.mxu0 0.0
      %3582 = vmatpush1.msra.mxu0 0.0
      %3583 = vmatprep.subr.mxu0 0.0
      %3584 = vmatpush1.msra.mxu0 0.0
      %3585 = vmatprep.subr.mxu0 0.0
      %3586 = vmatpush1.msra.mxu0 0.0
      %3587 = vmatprep.subr.mxu0 0.0
      %3588 = vmatpush1.msra.mxu0 0.0
      %3589 = vmatprep.subr.mxu0 0.0
      %3590 = vmatpush1.msra.mxu0 0.0
      %3591 = vmatprep.subr.mxu0 0.0
      %3592 = vmatpush1.msra.mxu0 0.0
      %3593 = vmatprep.subr.mxu0 0.0
      %3594 = vmatpush1.msra.mxu0 0.0
      %3595 = vmatprep.subr.mxu0 0.0
      %3596 = vmatpush1.msra.mxu0 0.0
      %3597 = vmatprep.subr.mxu0 0.0
      %3598 = vmatpush1.msra.mxu0 0.0
      %3599 = vmatprep.subr.mxu0 0.0
      %3600 = vmatpush1.msra.mxu0 0.0
      %3601 = vmatprep.subr.mxu0 0.0
      %3602 = vmatpush1.msra.mxu0 0.0
      %3603 = vmatprep.subr.mxu0 0.0
      %3604 = vmatpush1.msra.mxu0 0.0
      %3605 = vmatprep.mubr.f32.mxu0 0.0
      %3606 = vmatmul.mubr.f32.gmra.mrb[0].mxu0 %v3539
      %v3607 = vpop.f32.mrb[0].mxu0
      %v3608 = vadd.f32 0.0, %v3607
      %v3609 = vpop.f32.mrb[0].mxu0
      %v3610 = vadd.f32 0.0, %v3609
      %3611 = vdwg.mxu0
      %3612 = vmatprep.subr.mxu0 %v3533
      %3613 = vmatpush1.msra.mxu0 %v3532
      %3614 = vmatprep.subr.mxu0 0.0
      %3615 = vmatpush1.msra.mxu0 0.0
      %3616 = vmatprep.subr.mxu0 0.0
      %3617 = vmatpush1.msra.mxu0 0.0
      %3618 = vmatprep.subr.mxu0 0.0
      %3619 = vmatpush1.msra.mxu0 0.0
      %3620 = vmatprep.subr.mxu0 0.0
      %3621 = vmatpush1.msra.mxu0 0.0
      %3622 = vmatprep.subr.mxu0 0.0
      %3623 = vmatpush1.msra.mxu0 0.0
      %3624 = vmatprep.subr.mxu0 0.0
      %3625 = vmatpush1.msra.mxu0 0.0
      %3626 = vmatprep.subr.mxu0 0.0
      %3627 = vmatpush1.msra.mxu0 0.0
      %3628 = vmatprep.subr.mxu0 0.0
      %3629 = vmatpush1.msra.mxu0 0.0
      %3630 = vmatprep.subr.mxu0 0.0
      %3631 = vmatpush1.msra.mxu0 0.0
      %3632 = vmatprep.subr.mxu0 0.0
      %3633 = vmatpush1.msra.mxu0 0.0
      %3634 = vmatprep.subr.mxu0 0.0
      %3635 = vmatpush1.msra.mxu0 0.0
      %3636 = vmatprep.subr.mxu0 0.0
      %3637 = vmatpush1.msra.mxu0 0.0
      %3638 = vmatprep.subr.mxu0 0.0
      %3639 = vmatpush1.msra.mxu0 0.0
      %3640 = vmatprep.subr.mxu0 0.0
      %3641 = vmatpush1.msra.mxu0 0.0
      %3642 = vmatprep.subr.mxu0 0.0
      %3643 = vmatpush1.msra.mxu0 0.0
      %3644 = vmatprep.subr.mxu0 0.0
      %3645 = vmatpush1.msra.mxu0 0.0
      %3646 = vmatprep.subr.mxu0 0.0
      %3647 = vmatpush1.msra.mxu0 0.0
      %3648 = vmatprep.subr.mxu0 0.0
      %3649 = vmatpush1.msra.mxu0 0.0
      %3650 = vmatprep.subr.mxu0 0.0
      %3651 = vmatpush1.msra.mxu0 0.0
      %3652 = vmatprep.subr.mxu0 0.0
      %3653 = vmatpush1.msra.mxu0 0.0
      %3654 = vmatprep.subr.mxu0 0.0
      %3655 = vmatpush1.msra.mxu0 0.0
      %3656 = vmatprep.subr.mxu0 0.0
      %3657 = vmatpush1.msra.mxu0 0.0
      %3658 = vmatprep.subr.mxu0 0.0
      %3659 = vmatpush1.msra.mxu0 0.0
      %3660 = vmatprep.subr.mxu0 0.0
      %3661 = vmatpush1.msra.mxu0 0.0
      %3662 = vmatprep.subr.mxu0 0.0
      %3663 = vmatpush1.msra.mxu0 0.0
      %3664 = vmatprep.subr.mxu0 0.0
      %3665 = vmatpush1.msra.mxu0 0.0
      %3666 = vmatprep.subr.mxu0 0.0
      %3667 = vmatpush1.msra.mxu0 0.0
      %3668 = vmatprep.subr.mxu0 0.0
      %3669 = vmatpush1.msra.mxu0 0.0
      %3670 = vmatprep.subr.mxu0 0.0
      %3671 = vmatpush1.msra.mxu0 0.0
      %3672 = vmatprep.subr.mxu0 0.0
      %3673 = vmatpush1.msra.mxu0 0.0
      %3674 = vmatprep.subr.mxu0 0.0
      %3675 = vmatpush1.msra.mxu0 0.0
      %3676 = vmatprep.mubr.f32.mxu0 0.0
      %3677 = vmatmul.mubr.f32.gmra.mrb[0].mxu0 %v3539
      %v3678 = vpop.f32.mrb[0].mxu0
      %v3679 = vadd.f32 0.0, %v3678
      %v3680 = vpop.f32.mrb[0].mxu0
      %v3681 = vadd.f32 0.0, %v3680
      %3682 = vdwg.mxu0
      %v3683 = vadd.f32 %v3514, %v3608
      %v3684 = vadd.f32 %v3515, %v3610
      %v3685 = vadd.f32 %v3516, %v3679
      %v3686 = vadd.f32 %v3517, %v3681
      %s3687 = scalar_lea.vmem %s3, 56
      %v3688 = vld [vmem:[%s3687] sm:$0xff]
      %3689 = vrot.lane.b32.xlu0 %v2520, 63
      %v3690 = vpop.permute.xlu0 %3689
      %3691 = vrot.lane.b32.xlu0 %v2521, 63
      %v3692 = vpop.permute.xlu0 %3691
      %3693 = vrot.lane.b32.xlu0 %v2522, 63
      %v3694 = vpop.permute.xlu0 %3693
      %3695 = vrot.lane.b32.xlu0 %v2523, 63
      %v3696 = vpop.permute.xlu0 %3695
      %3697 = vrot.lane.b32.xlu0 %v2524, 63
      %v3698 = vpop.permute.xlu0 %3697
      %v3699 = vsel %vm1962, %v3690, %v3692
      %v3700 = vsel %vm1962, %v3692, %v3694
      %v3701 = vsel %vm1962, %v3694, %v3696
      %v3702 = vsel %vm1962, %v3696, %v3698
      %v3708 = vsel %vm2551, %v3688, 0
      %3710 = vmatprep.subr.mxu0 %v3700
      %3711 = vmatpush1.msra.mxu0 %v3699
      %3712 = vmatprep.subr.mxu0 0.0
      %3713 = vmatpush1.msra.mxu0 0.0
      %3714 = vmatprep.subr.mxu0 0.0
      %3715 = vmatpush1.msra.mxu0 0.0
      %3716 = vmatprep.subr.mxu0 0.0
      %3717 = vmatpush1.msra.mxu0 0.0
      %3718 = vmatprep.subr.mxu0 0.0
      %3719 = vmatpush1.msra.mxu0 0.0
      %3720 = vmatprep.subr.mxu0 0.0
      %3721 = vmatpush1.msra.mxu0 0.0
      %3722 = vmatprep.subr.mxu0 0.0
      %3723 = vmatpush1.msra.mxu0 0.0
      %3724 = vmatprep.subr.mxu0 0.0
      %3725 = vmatpush1.msra.mxu0 0.0
      %3726 = vmatprep.subr.mxu0 0.0
      %3727 = vmatpush1.msra.mxu0 0.0
      %3728 = vmatprep.subr.mxu0 0.0
      %3729 = vmatpush1.msra.mxu0 0.0
      %3730 = vmatprep.subr.mxu0 0.0
      %3731 = vmatpush1.msra.mxu0 0.0
      %3732 = vmatprep.subr.mxu0 0.0
      %3733 = vmatpush1.msra.mxu0 0.0
      %3734 = vmatprep.subr.mxu0 0.0
      %3735 = vmatpush1.msra.mxu0 0.0
      %3736 = vmatprep.subr.mxu0 0.0
      %3737 = vmatpush1.msra.mxu0 0.0
      %3738 = vmatprep.subr.mxu0 0.0
      %3739 = vmatpush1.msra.mxu0 0.0
      %3740 = vmatprep.subr.mxu0 0.0
      %3741 = vmatpush1.msra.mxu0 0.0
      %3742 = vmatprep.subr.mxu0 0.0
      %3743 = vmatpush1.msra.mxu0 0.0
      %3744 = vmatprep.subr.mxu0 0.0
      %3745 = vmatpush1.msra.mxu0 0.0
      %3746 = vmatprep.subr.mxu0 0.0
      %3747 = vmatpush1.msra.mxu0 0.0
      %3748 = vmatprep.subr.mxu0 0.0
      %3749 = vmatpush1.msra.mxu0 0.0
      %3750 = vmatprep.subr.mxu0 0.0
      %3751 = vmatpush1.msra.mxu0 0.0
      %3752 = vmatprep.subr.mxu0 0.0
      %3753 = vmatpush1.msra.mxu0 0.0
      %3754 = vmatprep.subr.mxu0 0.0
      %3755 = vmatpush1.msra.mxu0 0.0
      %3756 = vmatprep.subr.mxu0 0.0
      %3757 = vmatpush1.msra.mxu0 0.0
      %3758 = vmatprep.subr.mxu0 0.0
      %3759 = vmatpush1.msra.mxu0 0.0
      %3760 = vmatprep.subr.mxu0 0.0
      %3761 = vmatpush1.msra.mxu0 0.0
      %3762 = vmatprep.subr.mxu0 0.0
      %3763 = vmatpush1.msra.mxu0 0.0
      %3764 = vmatprep.subr.mxu0 0.0
      %3765 = vmatpush1.msra.mxu0 0.0
      %3766 = vmatprep.subr.mxu0 0.0
      %3767 = vmatpush1.msra.mxu0 0.0
      %3768 = vmatprep.subr.mxu0 0.0
      %3769 = vmatpush1.msra.mxu0 0.0
      %3770 = vmatprep.subr.mxu0 0.0
      %3771 = vmatpush1.msra.mxu0 0.0
      %3772 = vmatprep.subr.mxu0 0.0
      %3773 = vmatpush1.msra.mxu0 0.0
      %3774 = vmatprep.mubr.f32.mxu0 0.0
      %3775 = vmatmul.mubr.f32.gmra.mrb[0].mxu0 %v3708
      %v3776 = vpop.f32.mrb[0].mxu0
      %v3777 = vadd.f32 0.0, %v3776
      %v3778 = vpop.f32.mrb[0].mxu0
      %v3779 = vadd.f32 0.0, %v3778
      %3780 = vdwg.mxu0
      %3781 = vmatprep.subr.mxu0 %v3702
      %3782 = vmatpush1.msra.mxu0 %v3701
      %3783 = vmatprep.subr.mxu0 0.0
      %3784 = vmatpush1.msra.mxu0 0.0
      %3785 = vmatprep.subr.mxu0 0.0
      %3786 = vmatpush1.msra.mxu0 0.0
      %3787 = vmatprep.subr.mxu0 0.0
      %3788 = vmatpush1.msra.mxu0 0.0
      %3789 = vmatprep.subr.mxu0 0.0
      %3790 = vmatpush1.msra.mxu0 0.0
      %3791 = vmatprep.subr.mxu0 0.0
      %3792 = vmatpush1.msra.mxu0 0.0
      %3793 = vmatprep.subr.mxu0 0.0
      %3794 = vmatpush1.msra.mxu0 0.0
      %3795 = vmatprep.subr.mxu0 0.0
      %3796 = vmatpush1.msra.mxu0 0.0
      %3797 = vmatprep.subr.mxu0 0.0
      %3798 = vmatpush1.msra.mxu0 0.0
      %3799 = vmatprep.subr.mxu0 0.0
      %3800 = vmatpush1.msra.mxu0 0.0
      %3801 = vmatprep.subr.mxu0 0.0
      %3802 = vmatpush1.msra.mxu0 0.0
      %3803 = vmatprep.subr.mxu0 0.0
      %3804 = vmatpush1.msra.mxu0 0.0
      %3805 = vmatprep.subr.mxu0 0.0
      %3806 = vmatpush1.msra.mxu0 0.0
      %3807 = vmatprep.subr.mxu0 0.0
      %3808 = vmatpush1.msra.mxu0 0.0
      %3809 = vmatprep.subr.mxu0 0.0
      %3810 = vmatpush1.msra.mxu0 0.0
      %3811 = vmatprep.subr.mxu0 0.0
      %3812 = vmatpush1.msra.mxu0 0.0
      %3813 = vmatprep.subr.mxu0 0.0
      %3814 = vmatpush1.msra.mxu0 0.0
      %3815 = vmatprep.subr.mxu0 0.0
      %3816 = vmatpush1.msra.mxu0 0.0
      %3817 = vmatprep.subr.mxu0 0.0
      %3818 = vmatpush1.msra.mxu0 0.0
      %3819 = vmatprep.subr.mxu0 0.0
      %3820 = vmatpush1.msra.mxu0 0.0
      %3821 = vmatprep.subr.mxu0 0.0
      %3822 = vmatpush1.msra.mxu0 0.0
      %3823 = vmatprep.subr.mxu0 0.0
      %3824 = vmatpush1.msra.mxu0 0.0
      %3825 = vmatprep.subr.mxu0 0.0
      %3826 = vmatpush1.msra.mxu0 0.0
      %3827 = vmatprep.subr.mxu0 0.0
      %3828 = vmatpush1.msra.mxu0 0.0
      %3829 = vmatprep.subr.mxu0 0.0
      %3830 = vmatpush1.msra.mxu0 0.0
      %3831 = vmatprep.subr.mxu0 0.0
      %3832 = vmatpush1.msra.mxu0 0.0
      %3833 = vmatprep.subr.mxu0 0.0
      %3834 = vmatpush1.msra.mxu0 0.0
      %3835 = vmatprep.subr.mxu0 0.0
      %3836 = vmatpush1.msra.mxu0 0.0
      %3837 = vmatprep.subr.mxu0 0.0
      %3838 = vmatpush1.msra.mxu0 0.0
      %3839 = vmatprep.subr.mxu0 0.0
      %3840 = vmatpush1.msra.mxu0 0.0
      %3841 = vmatprep.subr.mxu0 0.0
      %3842 = vmatpush1.msra.mxu0 0.0
      %3843 = vmatprep.subr.mxu0 0.0
      %3844 = vmatpush1.msra.mxu0 0.0
      %3845 = vmatprep.mubr.f32.mxu0 0.0
      %3846 = vmatmul.mubr.f32.gmra.mrb[0].mxu0 %v3708
      %v3847 = vpop.f32.mrb[0].mxu0
      %v3848 = vadd.f32 0.0, %v3847
      %v3849 = vpop.f32.mrb[0].mxu0
      %v3850 = vadd.f32 0.0, %v3849
      %3851 = vdwg.mxu0
      %v3852 = vadd.f32 %v3683, %v3777
      %v3853 = vadd.f32 %v3684, %v3779
      %v3854 = vadd.f32 %v3685, %v3848
      %v3855 = vadd.f32 %v3686, %v3850
      %s3856 = scalar_lea.vmem %s3, 64
      %v3857 = vld [vmem:[%s3856] sm:$0xff]
      %3858 = vrot.lane.b32.xlu0 %v2520, 62
      %v3859 = vpop.permute.xlu0 %3858
      %3860 = vrot.lane.b32.xlu0 %v2521, 62
      %v3861 = vpop.permute.xlu0 %3860
      %3862 = vrot.lane.b32.xlu0 %v2522, 62
      %v3863 = vpop.permute.xlu0 %3862
      %3864 = vrot.lane.b32.xlu0 %v2523, 62
      %v3865 = vpop.permute.xlu0 %3864
      %3866 = vrot.lane.b32.xlu0 %v2524, 62
      %v3867 = vpop.permute.xlu0 %3866
      %v3868 = vsel %vm2212, %v3859, %v3861
      %v3869 = vsel %vm2212, %v3861, %v3863
      %v3870 = vsel %vm2212, %v3863, %v3865
      %v3871 = vsel %vm2212, %v3865, %v3867
      %v3877 = vsel %vm2551, %v3857, 0
      %3879 = vmatprep.subr.mxu0 %v3869
      %3880 = vmatpush1.msra.mxu0 %v3868
      %3881 = vmatprep.subr.mxu0 0.0
      %3882 = vmatpush1.msra.mxu0 0.0
      %3883 = vmatprep.subr.mxu0 0.0
      %3884 = vmatpush1.msra.mxu0 0.0
      %3885 = vmatprep.subr.mxu0 0.0
      %3886 = vmatpush1.msra.mxu0 0.0
      %3887 = vmatprep.subr.mxu0 0.0
      %3888 = vmatpush1.msra.mxu0 0.0
      %3889 = vmatprep.subr.mxu0 0.0
      %3890 = vmatpush1.msra.mxu0 0.0
      %3891 = vmatprep.subr.mxu0 0.0
      %3892 = vmatpush1.msra.mxu0 0.0
      %3893 = vmatprep.subr.mxu0 0.0
      %3894 = vmatpush1.msra.mxu0 0.0
      %3895 = vmatprep.subr.mxu0 0.0
      %3896 = vmatpush1.msra.mxu0 0.0
      %3897 = vmatprep.subr.mxu0 0.0
      %3898 = vmatpush1.msra.mxu0 0.0
      %3899 = vmatprep.subr.mxu0 0.0
      %3900 = vmatpush1.msra.mxu0 0.0
      %3901 = vmatprep.subr.mxu0 0.0
      %3902 = vmatpush1.msra.mxu0 0.0
      %3903 = vmatprep.subr.mxu0 0.0
      %3904 = vmatpush1.msra.mxu0 0.0
      %3905 = vmatprep.subr.mxu0 0.0
      %3906 = vmatpush1.msra.mxu0 0.0
      %3907 = vmatprep.subr.mxu0 0.0
      %3908 = vmatpush1.msra.mxu0 0.0
      %3909 = vmatprep.subr.mxu0 0.0
      %3910 = vmatpush1.msra.mxu0 0.0
      %3911 = vmatprep.subr.mxu0 0.0
      %3912 = vmatpush1.msra.mxu0 0.0
      %3913 = vmatprep.subr.mxu0 0.0
      %3914 = vmatpush1.msra.mxu0 0.0
      %3915 = vmatprep.subr.mxu0 0.0
      %3916 = vmatpush1.msra.mxu0 0.0
      %3917 = vmatprep.subr.mxu0 0.0
      %3918 = vmatpush1.msra.mxu0 0.0
      %3919 = vmatprep.subr.mxu0 0.0
      %3920 = vmatpush1.msra.mxu0 0.0
      %3921 = vmatprep.subr.mxu0 0.0
      %3922 = vmatpush1.msra.mxu0 0.0
      %3923 = vmatprep.subr.mxu0 0.0
      %3924 = vmatpush1.msra.mxu0 0.0
      %3925 = vmatprep.subr.mxu0 0.0
      %3926 = vmatpush1.msra.mxu0 0.0
      %3927 = vmatprep.subr.mxu0 0.0
      %3928 = vmatpush1.msra.mxu0 0.0
      %3929 = vmatprep.subr.mxu0 0.0
      %3930 = vmatpush1.msra.mxu0 0.0
      %3931 = vmatprep.subr.mxu0 0.0
      %3932 = vmatpush1.msra.mxu0 0.0
      %3933 = vmatprep.subr.mxu0 0.0
      %3934 = vmatpush1.msra.mxu0 0.0
      %3935 = vmatprep.subr.mxu0 0.0
      %3936 = vmatpush1.msra.mxu0 0.0
      %3937 = vmatprep.subr.mxu0 0.0
      %3938 = vmatpush1.msra.mxu0 0.0
      %3939 = vmatprep.subr.mxu0 0.0
      %3940 = vmatpush1.msra.mxu0 0.0
      %3941 = vmatprep.subr.mxu0 0.0
      %3942 = vmatpush1.msra.mxu0 0.0
      %3943 = vmatprep.mubr.f32.mxu0 0.0
      %3944 = vmatmul.mubr.f32.gmra.mrb[0].mxu0 %v3877
      %v3945 = vpop.f32.mrb[0].mxu0
      %v3946 = vadd.f32 0.0, %v3945
      %v3947 = vpop.f32.mrb[0].mxu0
      %v3948 = vadd.f32 0.0, %v3947
      %3949 = vdwg.mxu0
      %3950 = vmatprep.subr.mxu0 %v3871
      %3951 = vmatpush1.msra.mxu0 %v3870
      %3952 = vmatprep.subr.mxu0 0.0
      %3953 = vmatpush1.msra.mxu0 0.0
      %3954 = vmatprep.subr.mxu0 0.0
      %3955 = vmatpush1.msra.mxu0 0.0
      %3956 = vmatprep.subr.mxu0 0.0
      %3957 = vmatpush1.msra.mxu0 0.0
      %3958 = vmatprep.subr.mxu0 0.0
      %3959 = vmatpush1.msra.mxu0 0.0
      %3960 = vmatprep.subr.mxu0 0.0
      %3961 = vmatpush1.msra.mxu0 0.0
      %3962 = vmatprep.subr.mxu0 0.0
      %3963 = vmatpush1.msra.mxu0 0.0
      %3964 = vmatprep.subr.mxu0 0.0
      %3965 = vmatpush1.msra.mxu0 0.0
      %3966 = vmatprep.subr.mxu0 0.0
      %3967 = vmatpush1.msra.mxu0 0.0
      %3968 = vmatprep.subr.mxu0 0.0
      %3969 = vmatpush1.msra.mxu0 0.0
      %3970 = vmatprep.subr.mxu0 0.0
      %3971 = vmatpush1.msra.mxu0 0.0
      %3972 = vmatprep.subr.mxu0 0.0
      %3973 = vmatpush1.msra.mxu0 0.0
      %3974 = vmatprep.subr.mxu0 0.0
      %3975 = vmatpush1.msra.mxu0 0.0
      %3976 = vmatprep.subr.mxu0 0.0
      %3977 = vmatpush1.msra.mxu0 0.0
      %3978 = vmatprep.subr.mxu0 0.0
      %3979 = vmatpush1.msra.mxu0 0.0
      %3980 = vmatprep.subr.mxu0 0.0
      %3981 = vmatpush1.msra.mxu0 0.0
      %3982 = vmatprep.subr.mxu0 0.0
      %3983 = vmatpush1.msra.mxu0 0.0
      %3984 = vmatprep.subr.mxu0 0.0
      %3985 = vmatpush1.msra.mxu0 0.0
      %3986 = vmatprep.subr.mxu0 0.0
      %3987 = vmatpush1.msra.mxu0 0.0
      %3988 = vmatprep.subr.mxu0 0.0
      %3989 = vmatpush1.msra.mxu0 0.0
      %3990 = vmatprep.subr.mxu0 0.0
      %3991 = vmatpush1.msra.mxu0 0.0
      %3992 = vmatprep.subr.mxu0 0.0
      %3993 = vmatpush1.msra.mxu0 0.0
      %3994 = vmatprep.subr.mxu0 0.0
      %3995 = vmatpush1.msra.mxu0 0.0
      %3996 = vmatprep.subr.mxu0 0.0
      %3997 = vmatpush1.msra.mxu0 0.0
      %3998 = vmatprep.subr.mxu0 0.0
      %3999 = vmatpush1.msra.mxu0 0.0
      %4000 = vmatprep.subr.mxu0 0.0
      %4001 = vmatpush1.msra.mxu0 0.0
      %4002 = vmatprep.subr.mxu0 0.0
      %4003 = vmatpush1.msra.mxu0 0.0
      %4004 = vmatprep.subr.mxu0 0.0
      %4005 = vmatpush1.msra.mxu0 0.0
      %4006 = vmatprep.subr.mxu0 0.0
      %4007 = vmatpush1.msra.mxu0 0.0
      %4008 = vmatprep.subr.mxu0 0.0
      %4009 = vmatpush1.msra.mxu0 0.0
      %4010 = vmatprep.subr.mxu0 0.0
      %4011 = vmatpush1.msra.mxu0 0.0
      %4012 = vmatprep.subr.mxu0 0.0
      %4013 = vmatpush1.msra.mxu0 0.0
      %4014 = vmatprep.mubr.f32.mxu0 0.0
      %4015 = vmatmul.mubr.f32.gmra.mrb[0].mxu0 %v3877
      %v4016 = vpop.f32.mrb[0].mxu0
      %v4017 = vadd.f32 0.0, %v4016
      %v4018 = vpop.f32.mrb[0].mxu0
      %v4019 = vadd.f32 0.0, %v4018
      %4020 = vdwg.mxu0
      %v4021 = vadd.f32 %v3852, %v3946
      %v4022 = vadd.f32 %v3853, %v3948
      %v4023 = vadd.f32 %v3854, %v4017
      %v4024 = vadd.f32 %v3855, %v4019
      %v4025 = vld [vmem:[%s4] sm:$0xff]
      %4027 = vset.pattern.permute.xlu0 0
      %4028 = vperm.xlu0 %4027, %v4025
      %v4029 = vpop.permute.xlu0 %4028
      %v4031 = vadd.f32 %v4021, %v4029
      %v4032 = vadd.f32 %v4022, %v4029
      %v4033 = vadd.f32 %v4023, %v4029
      %v4034 = vadd.f32 %v4024, %v4029
      %v4035 = vmax.f32 %v4031, 0.0
      %v4036 = vmax.f32 %v4032, 0.0
      %v4037 = vmax.f32 %v4033, 0.0
      %v4038 = vmax.f32 %v4034, 0.0
      %4039 = vst [vmem:[%s224] sm:$0xff] %v4035
      %4040 = vst [vmem:[%s224 + $0x8] sm:$0xff] %v4036
      %4041 = vst [vmem:[%s224 + $0x10] sm:$0xff] %v4037
      %4042 = vst [vmem:[%s224 + $0x18] sm:$0xff] %v4038
      %p4043 = scmp.lt.s32.totalorder %s16, 1
      %s4044 = scalar_select %p4043, %s16, 1
      %s4045 = smul.addr %s4044, 4
      %s4046 = smul.addr %s4045, 8
      %s4047 = scalar_lea.vmem %s5, %s4046
      // Predicated region
      $region41: #{double_conv_forward.1} parent=39 // pred_check
        %p4048 = pneg %p144
      $region42: #{double_conv_forward.1} parent=39 // pred_check_branch
        %4050 = sbr.rel (%p4048) target = $region44
      $region43: #{double_conv_forward.1} parent=39 // pred_region
        _
      $region44: #{double_conv_forward.1} parent=39 // pred_fallthru
        _
    $region40: #{double_conv_forward.1} parent=5 // pred_fallthru
      _
    %p4051 = scmp.le.s32.totalorder 2, %s11
    // Predicated region
    $region45: #{double_conv_forward.1} parent=5 // pred_check
      %p4052 = pneg %p4051
    $region46: #{double_conv_forward.1} parent=5 // pred_check_branch
      %4054 = sbr.rel (%p4052) target = $region48
    $region47: #{double_conv_forward.1} parent=5 // pred_region
      %s4055 = ssub.s32 %s11, 2
      // Predicated region
      $region49: #{double_conv_forward.1} parent=47 // pred_check
        %p4056 = pneg %p150
      $region50: #{double_conv_forward.1} parent=47 // pred_check_branch
        %4058 = sbr.rel (%p4056) target = $region52
      $region51: #{double_conv_forward.1} parent=47 // pred_region
        %p4059 = scmp.lt.s32.totalorder %s17, 1
        %s4060 = scalar_select %p4059, %s17, 1
        %s4061 = smul.addr %s4060, 4
        %s4062 = smul.addr %s4061, 8
        %s4063 = scalar_lea.vmem %s5, %s4062
      $region52: #{double_conv_forward.1} parent=47 // pred_fallthru
        _
    $region48: #{double_conv_forward.1} parent=5 // pred_fallthru
      _
  $region6: #{double_conv_forward.1} parent=0 // loop_footer
    %s15 = sadd.s32 1, %s11
  $region7: #{double_conv_forward.1} parent=0 // loop_footer_branch
    %10 = sbr.rel target = $region3
  $region8: #{double_conv_forward.1} parent=0 // loop_exit
    _

</llo_original>
